<compile_context>
chip_gen: v5e
topology: v5e:2x2
jax: 0.10.0
libtpu: 0.0.40
codegen_flags: <defaults>
</compile_context>

<pallas_src>
import functools

import numpy as np
import jax
import jax.numpy as jnp
from jax.experimental import pallas as pl
from jax.experimental.pallas import tpu as pltpu

# ----------------------------------------------------------------------------
# Config
# ----------------------------------------------------------------------------
OUTPUT_CHANNELS = (8, 16, 32)     # encoder.output_channels (last = bottleneck)
STRIDES = (1, 2, 2)               # encoder.strides
NUM_CLASSES = 4
N_CONV_PER_STAGE = 2
DEEP_SUPERVISION = True
TEMB_DIM = 32
LRELU_SLOPE = 0.01
IN_EPS = 1e-5
SEG_CH_PAD = max(8, ((NUM_CLASSES + 7) // 8) * 8)   # seg rows padded to 8 sublanes

WEIGHT_KEYS = ("wup", "scat", "w0", "w1", "wt", "sm", "wseg", "mask")


# ----------------------------------------------------------------------------
# In-kernel per-stage computation.
#
# Activation layout per sample: (C, P) with P = (H+3)*(W+2): zero-padded image
# rows flattened onto the lane axis.  3x3 conv = 9 shifted-slice matmuls on the
# MXU; conv outputs live on a contiguous H*(W+2) slab whose 2 junk columns per
# row are masked out of the IN statistics and re-zeroed so the slab can be
# written back into the padded buffer and chained into the next conv / stage.
# ----------------------------------------------------------------------------
def _stage(x_src, skip_ref, temb, cat,
           wup_ref, scat_ref, w0_ref, w1_ref, wt_ref, sm_ref,
           wseg_ref, mask_ref, *, cs, h, w):
    wp = w + 2
    hw2 = h * wp
    p = (h + 3) * wp
    q0 = wp + 1                               # flat offset of interior (1,1)
    inv_cnt = 1.0 / float(h * w)

    # ---- ConvTranspose2d(k=2, s=2): 4 tap matmuls + 0/1 scatter matmuls ----
    # x_src: (Cb, Lb) — dense bottleneck (stage 1) or padded-flat previous
    # stage output (stage 2).  Pad source columns hit all-zero scatter rows.
    tt = jnp.dot(wup_ref[...], x_src, preferred_element_type=jnp.float32)
    tt = tt + sm_ref[:, 0:1]                  # transp-conv bias (tiled / tap)
    up = jnp.dot(tt[0:cs, :], scat_ref[0].astype(jnp.float32),
                 preferred_element_type=jnp.float32)
    for k in range(1, 4):
        up = up + jnp.dot(tt[k * cs:(k + 1) * cs, :],
                          scat_ref[k].astype(jnp.float32),
                          preferred_element_type=jnp.float32)

    # ---- channel "concat" [up, skip] in the padded-flat VMEM scratch --------
    cat[0:cs, :] = up                         # pad positions of `up` are exact 0
    cat[cs:2 * cs, :] = jnp.zeros((cs, p), jnp.float32)
    for r in range(h):                        # in-kernel zero-padding of skip
        cat[cs:2 * cs, q0 + r * wp: q0 + r * wp + w] = \
            skip_ref[0, :, r * w:(r + 1) * w]

    # ---- temb Linear for both conv blocks (conv bias folded in on host) ----
    tproj = jnp.dot(wt_ref[...], temb, preferred_element_type=jnp.float32)
    tproj = tproj + sm_ref[0:2 * cs, 1:2]
    mask = mask_ref[...]                      # (1, hw2): 1 on real pixels

    def conv_block(nch_in, w_ref, t_col, g_col, b_col):
        # 3x3 conv as 9 shifted-slice matmuls, accumulator seeded by tap 0.
        acc = jnp.dot(w_ref[0], cat[0:nch_in, 0:hw2],
                      preferred_element_type=jnp.float32)
        for t in range(1, 9):
            st = (t // 3) * wp + (t % 3)
            acc = acc + jnp.dot(w_ref[t], cat[0:nch_in, st:st + hw2],
                                preferred_element_type=jnp.float32)
        hh = acc + t_col                                   # (+bias +temb)
        mean = jnp.sum(hh * mask, axis=1, keepdims=True) * inv_cnt
        d = (hh - mean) * mask
        var = jnp.sum(d * d, axis=1, keepdims=True) * inv_cnt
        y = (hh - mean) * jax.lax.rsqrt(var + IN_EPS)      # InstanceNorm
        y = y * g_col + b_col                              # affine
        y = jnp.where(y >= 0.0, y, LRELU_SLOPE * y)        # LeakyReLU(0.01)
        return y * mask                                    # keep pad cols 0

    y0 = conv_block(2 * cs, w0_ref, tproj[0:cs, :],
                    sm_ref[0:cs, 2:3], sm_ref[0:cs, 3:4])
    # Reuse the `up` half as block-1's padded input: everything outside
    # [q0, q0+hw2) is already exact zero from `up`, and y0's masked junk
    # columns land exactly on the pad columns => no memset needed.
    cat[0:cs, q0:q0 + hw2] = y0
    y1 = conv_block(cs, w1_ref, tproj[cs:2 * cs, :],
                    sm_ref[cs:2 * cs, 2:3], sm_ref[cs:2 * cs, 3:4])

    # ---- fused deep-supervision 1x1 seg head (channels padded to 8) --------
    seg = jnp.dot(wseg_ref[...], y1, preferred_element_type=jnp.float32)
    seg = seg + sm_ref[0:SEG_CH_PAD, 4:5]
    return y1, seg


def _decoder_kernel(*refs, cfgs):
    s_n = len(cfgs)
    xb_ref = refs[0]
    skip_refs = refs[1:1 + s_n]
    temb_ref = refs[1 + s_n]
    w_refs = refs[2 + s_n: 2 + s_n + 8 * s_n]
    seg_refs = refs[2 + s_n + 8 * s_n: 2 + s_n + 9 * s_n]
    cat_refs = refs[2 + s_n + 9 * s_n: 2 + s_n + 10 * s_n]

    temb = temb_ref[0]                         # (TEMB_DIM, 1)
    x = xb_ref[0]                              # dense bottleneck (Cb, Hb*Wb)
    for s, (cs, h, w) in enumerate(cfgs):
        (wup_ref, scat_ref, w0_ref, w1_ref,
         wt_ref, sm_ref, wseg_ref, mask_ref) = w_refs[8 * s: 8 * (s + 1)]
        x, seg = _stage(x, skip_refs[s], temb, cat_refs[s],
                        wup_ref, scat_ref, w0_ref, w1_ref,
                        wt_ref, sm_ref, wseg_ref, mask_ref,
                        cs=cs, h=h, w=w)       # x stays VMEM-resident
        seg_refs[s][0] = seg


# ----------------------------------------------------------------------------
# Host-side constant construction (done once, tiny)
# ----------------------------------------------------------------------------
def _build_scatter(lb, hb_n, wb_n, pitch, h, w):
    """0/1 matrices scattering transp-conv matmul columns into the padded grid.

    Stored as bf16 (exact for 0/1) and cast to f32 in-kernel: halves the
    largest constant DMA of the kernel."""
    wp = w + 2
    p_full = (h + 3) * wp
    s = np.zeros((4, lb, p_full), np.float32)
    for src in range(lb):
        hb, x = divmod(src, pitch)
        if x >= wb_n or hb >= hb_n:
            continue                          # pad column of the source buffer
        for dh in range(2):
            for dw in range(2):
                tgt = wp * (1 + 2 * hb + dh) + (1 + 2 * x + dw)
                s[dh * 2 + dw, src, tgt] = 1.0
    return jnp.asarray(s, dtype=jnp.bfloat16)


def _build_mask(h, w):
    m = np.zeros((h, w + 2), np.float32)
    m[:, :w] = 1.0
    return jnp.asarray(m.reshape(1, h * (w + 2)))


def build_params(key, skip_shapes):
    """Create PyTorch-layout params, then convert to kernel-ready layouts."""
    assert N_CONV_PER_STAGE == 2
    n_enc = len(OUTPUT_CHANNELS)
    stages = []

    def nrm(k, shape, scale=0.1):
        return jax.random.normal(k, shape, dtype=jnp.float32) * scale

    for s in range(1, n_enc):
        cb = OUTPUT_CHANNELS[-s]               # features below
        cs = OUTPUT_CHANNELS[-(s + 1)]         # skip features = stage features
        _, _, h, w = skip_shapes[-(s + 1)]
        hb, wb = h // 2, w // 2

        key, kup_w, kup_b, ks_w, ks_b = jax.random.split(key, 5)
        # ---- PyTorch-layout raw parameters ----
        wup = nrm(kup_w, (cb, cs, 2, 2))       # ConvTranspose2d weight
        bup = nrm(kup_b, (cs,))
        blocks = []
        cin = 2 * cs
        for _ in range(N_CONV_PER_STAGE):
            key, kw, kb, kt1, kt2 = jax.random.split(key, 5)
            blocks.append(dict(
                w=nrm(kw, (cs, cin, 3, 3)), b=nrm(kb, (cs,)),
                wt=nrm(kt1, (TEMB_DIM, cs)), bt=nrm(kt2, (cs,)),
                gamma=jnp.ones((cs,), jnp.float32),
                beta=jnp.zeros((cs,), jnp.float32)))
            cin = cs
        wseg = nrm(ks_w, (NUM_CLASSES, cs, 1, 1))
        bseg = nrm(ks_b, (NUM_CLASSES,))

        # ---- kernel-ready layouts ----
        dec_s = s - 1
        if dec_s == 0:
            lb, pitch = hb * wb, wb            # dense bottleneck source
        else:
            lb, pitch = hb * (wb + 2), wb + 2  # padded-flat prev-stage output

        # Consolidated per-channel constants: one ref instead of seven.
        #   col0: transpconv bias (tiled per tap)
        #   col1: temb-Linear bias + conv bias (block0 ; block1)
        #   col2: IN gamma (block0 ; block1),  col3: IN beta
        #   col4: seg-head bias (padded rows are zero)
        sm = jnp.zeros((4 * cs, 5), jnp.float32)
        sm = sm.at[:, 0].set(jnp.tile(bup, 4))
        sm = sm.at[0:2 * cs, 1].set(jnp.concatenate(
            [blocks[0]["bt"] + blocks[0]["b"], blocks[1]["bt"] + blocks[1]["b"]]))
        sm = sm.at[0:2 * cs, 2].set(jnp.concatenate(
            [blocks[0]["gamma"], blocks[1]["gamma"]]))
        sm = sm.at[0:2 * cs, 3].set(jnp.concatenate(
            [blocks[0]["beta"], blocks[1]["beta"]]))
        sm = sm.at[0:NUM_CLASSES, 4].set(bseg)

        wseg_pad = jnp.zeros((SEG_CH_PAD, cs), jnp.float32)
        wseg_pad = wseg_pad.at[0:NUM_CLASSES].set(wseg.reshape(NUM_CLASSES, cs))

        stages.append(dict(
            wup=wup.transpose(2, 3, 1, 0).reshape(4 * cs, cb),
            scat=_build_scatter(lb, hb, wb, pitch, h, w),
            w0=blocks[0]["w"].transpose(2, 3, 0, 1).reshape(9, cs, 2 * cs),
            w1=blocks[1]["w"].transpose(2, 3, 0, 1).reshape(9, cs, cs),
            wt=jnp.concatenate([blocks[0]["wt"].T, blocks[1]["wt"].T], axis=0),
            sm=sm,
            wseg=wseg_pad,
            mask=_build_mask(h, w),
        ))
    return stages


# ----------------------------------------------------------------------------
# UNetDecoder.forward — ONE pallas_call for the whole decoder.
# ----------------------------------------------------------------------------
@jax.jit
def unet_decoder_forward(skips, temb, stage_params):
    n = temb.shape[0]
    n_stages = len(stage_params)
    assert n_stages == len(skips) - 1

    bott = skips[-1]
    xb = bott.reshape(n, bott.shape[1], -1)          # free reshape, dense flat
    temb3 = temb[:, :, None]                         # (N, TEMB_DIM, 1)

    cfgs, skips_flat = [], []
    for s in range(n_stages):
        sk = skips[-(s + 2)]
        _, cs, h, w = sk.shape
        cfgs.append((cs, h, w))
        skips_flat.append(sk.reshape(n, cs, h * w))  # free reshape, no pad
    cfgs = tuple(cfgs)

    weights = []
    for sp in stage_params:
        weights += [sp[k] for k in WEIGHT_KEYS]

    def whole_spec(a):
        nd = a.ndim
        return pl.BlockSpec(a.shape, lambda i, _n=nd: (0,) * _n)

    in_specs = ([pl.BlockSpec((1,) + xb.shape[1:], lambda i: (i, 0, 0))]
                + [pl.BlockSpec((1,) + sk.shape[1:], lambda i: (i, 0, 0))
                   for sk in skips_flat]
                + [pl.BlockSpec((1, TEMB_DIM, 1), lambda i: (i, 0, 0))]
                + [whole_spec(a) for a in weights])

    out_specs, out_shapes, scratch = [], [], []
    for (cs, h, w) in cfgs:
        hw2 = h * (w + 2)
        out_specs.append(pl.BlockSpec((1, SEG_CH_PAD, hw2), lambda i: (i, 0, 0)))
        out_shapes.append(jax.ShapeDtypeStruct((n, SEG_CH_PAD, hw2), jnp.float32))
        scratch.append(pltpu.VMEM((2 * cs, (h + 3) * (w + 2)), jnp.float32))

    segs = pl.pallas_call(
        functools.partial(_decoder_kernel, cfgs=cfgs),
        grid=(n,),
        in_specs=in_specs,
        out_specs=out_specs,
        out_shape=out_shapes,
        scratch_shapes=scratch,
        compiler_params=pltpu.CompilerParams(
            dimension_semantics=("parallel",)),      # v7x: batch across 2 TCs
    )(xb, *skips_flat, temb3, *weights)

    # (N, 8, H*(W+2)) -> NCHW: drop padded channels + the 2 pad columns / row.
    seg_outputs = []
    for seg, (cs, h, w) in zip(segs, cfgs):
        seg_outputs.append(
            seg[:, :NUM_CLASSES, :].reshape(n, NUM_CLASSES, h, w + 2)[..., :w])
    seg_outputs = seg_outputs[::-1]                  # highest resolution first
    if not DEEP_SUPERVISION:
        return seg_outputs[0]
    return seg_outputs


# ----------------------------------------------------------------------------
# Driver
# ----------------------------------------------------------------------------
if __name__ == "__main__":
    key = jax.random.PRNGKey(0)
    key, k0, k1, k2, kt, kp = jax.random.split(key, 6)

    batch = 2
    # skips in order of computation; bottleneck last (as the encoder produces)
    skips = (
        jax.random.normal(k0, (batch, OUTPUT_CHANNELS[0], 16, 16), jnp.float32),
        jax.random.normal(k1, (batch, OUTPUT_CHANNELS[1], 8, 8), jnp.float32),
        jax.random.normal(k2, (batch, OUTPUT_CHANNELS[2], 4, 4), jnp.float32),
    )
    temb = jax.random.normal(kt, (batch, TEMB_DIM), jnp.float32)

    stage_params = build_params(kp, [s.shape for s in skips])

    outs = unet_decoder_forward(skips, temb, stage_params)
    outs = jax.tree_util.tree_map(jax.block_until_ready, outs)

    # sanity: deep supervision outputs are highest-res first and finite
    assert outs[0].shape == (batch, NUM_CLASSES, 16, 16)
    assert outs[1].shape == (batch, NUM_CLASSES, 8, 8)
    assert all(bool(jnp.all(jnp.isfinite(o))) for o in outs)
    print("KERNEL_OK")
</pallas_src>

<mosaic_0001>
module attributes {stable_mosaic.version = 11 : i64} {
  func.func @_decoder_kernel(%arg0: i32, %arg1: memref<1x32x16xf32, #tpu.memory_space<vmem>>, %arg2: memref<1x16x64xf32, #tpu.memory_space<vmem>>, %arg3: memref<1x8x256xf32, #tpu.memory_space<vmem>>, %arg4: memref<1x32x1xf32, #tpu.memory_space<vmem>>, %arg5: memref<64x32xf32, #tpu.memory_space<vmem>>, %arg6: memref<4x16x110xbf16, #tpu.memory_space<vmem>>, %arg7: memref<9x16x32xf32, #tpu.memory_space<vmem>>, %arg8: memref<9x16x16xf32, #tpu.memory_space<vmem>>, %arg9: memref<32x32xf32, #tpu.memory_space<vmem>>, %arg10: memref<64x5xf32, #tpu.memory_space<vmem>>, %arg11: memref<8x16xf32, #tpu.memory_space<vmem>>, %arg12: memref<1x80xf32, #tpu.memory_space<vmem>>, %arg13: memref<32x16xf32, #tpu.memory_space<vmem>>, %arg14: memref<4x80x342xbf16, #tpu.memory_space<vmem>>, %arg15: memref<9x8x16xf32, #tpu.memory_space<vmem>>, %arg16: memref<9x8x8xf32, #tpu.memory_space<vmem>>, %arg17: memref<16x32xf32, #tpu.memory_space<vmem>>, %arg18: memref<32x5xf32, #tpu.memory_space<vmem>>, %arg19: memref<8x8xf32, #tpu.memory_space<vmem>>, %arg20: memref<1x288xf32, #tpu.memory_space<vmem>>, %arg21: memref<1x8x80xf32, #tpu.memory_space<vmem>>, %arg22: memref<1x8x288xf32, #tpu.memory_space<vmem>>, %arg23: memref<32x110xf32, #tpu.memory_space<vmem>>, %arg24: memref<16x342xf32, #tpu.memory_space<vmem>>) attributes {dimension_semantics = [#tpu.dimension_semantics<parallel>], iteration_bounds = array<i64: 2>, scalar_prefetch = 0 : i64, scratch_operands = 2 : i64, tpu.core_type = #tpu.core_type<tc>, window_params = [{transform_indices = @transform_0, window_bounds = array<i64: 1, 32, 16>}, {transform_indices = @transform_1, window_bounds = array<i64: 1, 16, 64>}, {transform_indices = @transform_2, window_bounds = array<i64: 1, 8, 256>}, {transform_indices = @transform_3, window_bounds = array<i64: 1, 32, 1>}, {pipeline_mode = #tpu.pipeline_mode<synchronous>, transform_indices = @transform_4, window_bounds = array<i64: 64, 32>}, {pipeline_mode = #tpu.pipeline_mode<synchronous>, transform_indices = @transform_5, window_bounds = array<i64: 4, 16, 110>}, {pipeline_mode = #tpu.pipeline_mode<synchronous>, transform_indices = @transform_6, window_bounds = array<i64: 9, 16, 32>}, {pipeline_mode = #tpu.pipeline_mode<synchronous>, transform_indices = @transform_7, window_bounds = array<i64: 9, 16, 16>}, {pipeline_mode = #tpu.pipeline_mode<synchronous>, transform_indices = @transform_8, window_bounds = array<i64: 32, 32>}, {pipeline_mode = #tpu.pipeline_mode<synchronous>, transform_indices = @transform_9, window_bounds = array<i64: 64, 5>}, {pipeline_mode = #tpu.pipeline_mode<synchronous>, transform_indices = @transform_10, window_bounds = array<i64: 8, 16>}, {pipeline_mode = #tpu.pipeline_mode<synchronous>, transform_indices = @transform_11, window_bounds = array<i64: 1, 80>}, {pipeline_mode = #tpu.pipeline_mode<synchronous>, transform_indices = @transform_12, window_bounds = array<i64: 32, 16>}, {pipeline_mode = #tpu.pipeline_mode<synchronous>, transform_indices = @transform_13, window_bounds = array<i64: 4, 80, 342>}, {pipeline_mode = #tpu.pipeline_mode<synchronous>, transform_indices = @transform_14, window_bounds = array<i64: 9, 8, 16>}, {pipeline_mode = #tpu.pipeline_mode<synchronous>, transform_indices = @transform_15, window_bounds = array<i64: 9, 8, 8>}, {pipeline_mode = #tpu.pipeline_mode<synchronous>, transform_indices = @transform_16, window_bounds = array<i64: 16, 32>}, {pipeline_mode = #tpu.pipeline_mode<synchronous>, transform_indices = @transform_17, window_bounds = array<i64: 32, 5>}, {pipeline_mode = #tpu.pipeline_mode<synchronous>, transform_indices = @transform_18, window_bounds = array<i64: 8, 8>}, {pipeline_mode = #tpu.pipeline_mode<synchronous>, transform_indices = @transform_19, window_bounds = array<i64: 1, 288>}, {transform_indices = @transform_20, window_bounds = array<i64: 1, 8, 80>}, {transform_indices = @transform_21, window_bounds = array<i64: 1, 8, 288>}]} {
    %c0 = arith.constant 0 : index
    %c0_0 = arith.constant 0 : index
    %c0_1 = arith.constant 0 : index
    %0 = vector.load %arg4[%c0, %c0_0, %c0_1] : memref<1x32x1xf32, #tpu.memory_space<vmem>>, vector<1x32x1xf32>
    %1 = vector.shape_cast %0 : vector<1x32x1xf32> to vector<32x1xf32>
    %c0_2 = arith.constant 0 : index
    %c0_3 = arith.constant 0 : index
    %c0_4 = arith.constant 0 : index
    %2 = vector.load %arg1[%c0_2, %c0_3, %c0_4] : memref<1x32x16xf32, #tpu.memory_space<vmem>>, vector<1x32x16xf32>
    %3 = vector.shape_cast %2 : vector<1x32x16xf32> to vector<32x16xf32>
    %c0_5 = arith.constant 0 : index
    %c0_6 = arith.constant 0 : index
    %4 = vector.load %arg5[%c0_5, %c0_6] : memref<64x32xf32, #tpu.memory_space<vmem>>, vector<64x32xf32>
    %cst = arith.constant dense<0.000000e+00> : vector<64x16xf32>
    %5 = tpu.matmul %4, %3, %cst {dimension_numbers = #tpu.dot_dimension_numbers<[1], [0], [0], [1], [0, 0, 1, 1], [], []>} : vector<64x32xf32>, vector<32x16xf32>, vector<64x16xf32> -> vector<64x16xf32>
    %c0_7 = arith.constant 0 : index
    %c0_8 = arith.constant 0 : index
    %6 = vector.load %arg10[%c0_7, %c0_8] : memref<64x5xf32, #tpu.memory_space<vmem>>, vector<64x1xf32>
    %7 = vector.broadcast %6 : vector<64x1xf32> to vector<64x16xf32>
    %8 = arith.addf %5, %7 : vector<64x16xf32>
    %9 = vector.extract_strided_slice %8 {offsets = [0, 0], sizes = [16, 16], strides = [1, 1]} : vector<64x16xf32> to vector<16x16xf32>
    %c0_9 = arith.constant 0 : index
    %c0_10 = arith.constant 0 : index
    %c0_11 = arith.constant 0 : index
    %10 = vector.load %arg6[%c0_9, %c0_10, %c0_11] : memref<4x16x110xbf16, #tpu.memory_space<vmem>>, vector<1x16x110xbf16>
    %11 = vector.shape_cast %10 : vector<1x16x110xbf16> to vector<16x110xbf16>
    %12 = arith.extf %11 : vector<16x110xbf16> to vector<16x110xf32>
    %cst_12 = arith.constant dense<0.000000e+00> : vector<16x110xf32>
    %13 = tpu.matmul %9, %12, %cst_12 {dimension_numbers = #tpu.dot_dimension_numbers<[1], [0], [0], [1], [0, 0, 1, 1], [], []>} : vector<16x16xf32>, vector<16x110xf32>, vector<16x110xf32> -> vector<16x110xf32>
    %14 = vector.extract_strided_slice %8 {offsets = [16, 0], sizes = [16, 16], strides = [1, 1]} : vector<64x16xf32> to vector<16x16xf32>
    %c1 = arith.constant 1 : index
    %c0_13 = arith.constant 0 : index
    %c0_14 = arith.constant 0 : index
    %15 = vector.load %arg6[%c1, %c0_13, %c0_14] : memref<4x16x110xbf16, #tpu.memory_space<vmem>>, vector<1x16x110xbf16>
    %16 = vector.shape_cast %15 : vector<1x16x110xbf16> to vector<16x110xbf16>
    %17 = arith.extf %16 : vector<16x110xbf16> to vector<16x110xf32>
    %cst_15 = arith.constant dense<0.000000e+00> : vector<16x110xf32>
    %18 = tpu.matmul %14, %17, %cst_15 {dimension_numbers = #tpu.dot_dimension_numbers<[1], [0], [0], [1], [0, 0, 1, 1], [], []>} : vector<16x16xf32>, vector<16x110xf32>, vector<16x110xf32> -> vector<16x110xf32>
    %19 = arith.addf %13, %18 : vector<16x110xf32>
    %20 = vector.extract_strided_slice %8 {offsets = [32, 0], sizes = [16, 16], strides = [1, 1]} : vector<64x16xf32> to vector<16x16xf32>
    %c2 = arith.constant 2 : index
    %c0_16 = arith.constant 0 : index
    %c0_17 = arith.constant 0 : index
    %21 = vector.load %arg6[%c2, %c0_16, %c0_17] : memref<4x16x110xbf16, #tpu.memory_space<vmem>>, vector<1x16x110xbf16>
    %22 = vector.shape_cast %21 : vector<1x16x110xbf16> to vector<16x110xbf16>
    %23 = arith.extf %22 : vector<16x110xbf16> to vector<16x110xf32>
    %cst_18 = arith.constant dense<0.000000e+00> : vector<16x110xf32>
    %24 = tpu.matmul %20, %23, %cst_18 {dimension_numbers = #tpu.dot_dimension_numbers<[1], [0], [0], [1], [0, 0, 1, 1], [], []>} : vector<16x16xf32>, vector<16x110xf32>, vector<16x110xf32> -> vector<16x110xf32>
    %25 = arith.addf %19, %24 : vector<16x110xf32>
    %26 = vector.extract_strided_slice %8 {offsets = [48, 0], sizes = [16, 16], strides = [1, 1]} : vector<64x16xf32> to vector<16x16xf32>
    %c3 = arith.constant 3 : index
    %c0_19 = arith.constant 0 : index
    %c0_20 = arith.constant 0 : index
    %27 = vector.load %arg6[%c3, %c0_19, %c0_20] : memref<4x16x110xbf16, #tpu.memory_space<vmem>>, vector<1x16x110xbf16>
    %28 = vector.shape_cast %27 : vector<1x16x110xbf16> to vector<16x110xbf16>
    %29 = arith.extf %28 : vector<16x110xbf16> to vector<16x110xf32>
    %cst_21 = arith.constant dense<0.000000e+00> : vector<16x110xf32>
    %30 = tpu.matmul %26, %29, %cst_21 {dimension_numbers = #tpu.dot_dimension_numbers<[1], [0], [0], [1], [0, 0, 1, 1], [], []>} : vector<16x16xf32>, vector<16x110xf32>, vector<16x110xf32> -> vector<16x110xf32>
    %31 = arith.addf %25, %30 : vector<16x110xf32>
    %c0_22 = arith.constant 0 : index
    %c0_23 = arith.constant 0 : index
    %32 = vector.load %arg23[%c0_22, %c0_23] : memref<32x110xf32, #tpu.memory_space<vmem>>, vector<16x110xf32>
    tpu.vector_store %arg23[%c0_22, %c0_23], %31 {strides = array<i32>} : memref<32x110xf32, #tpu.memory_space<vmem>>, vector<16x110xf32>,
    %cst_24 = arith.constant 0.000000e+00 : f32
    %33 = vector.broadcast %cst_24 : f32 to vector<16x110xf32>
    %c16 = arith.constant 16 : index
    %c0_25 = arith.constant 0 : index
    %34 = vector.load %arg23[%c16, %c0_25] : memref<32x110xf32, #tpu.memory_space<vmem>>, vector<16x110xf32>
    tpu.vector_store %arg23[%c16, %c0_25], %33 {strides = array<i32>} : memref<32x110xf32, #tpu.memory_space<vmem>>, vector<16x110xf32>,
    %c0_26 = arith.constant 0 : index
    %c0_27 = arith.constant 0 : index
    %c0_28 = arith.constant 0 : index
    %35 = vector.load %arg2[%c0_26, %c0_27, %c0_28] : memref<1x16x64xf32, #tpu.memory_space<vmem>>, vector<1x16x8xf32>
    %36 = vector.shape_cast %35 : vector<1x16x8xf32> to vector<16x8xf32>
    %c16_29 = arith.constant 16 : index
    %c11 = arith.constant 11 : index
    %37 = vector.load %arg23[%c16_29, %c11] : memref<32x110xf32, #tpu.memory_space<vmem>>, vector<16x8xf32>
    tpu.vector_store %arg23[%c16_29, %c11], %36 {strides = array<i32>} : memref<32x110xf32, #tpu.memory_space<vmem>>, vector<16x8xf32>,
    %c0_30 = arith.constant 0 : index
    %c0_31 = arith.constant 0 : index
    %c8 = arith.constant 8 : index
    %38 = vector.load %arg2[%c0_30, %c0_31, %c8] : memref<1x16x64xf32, #tpu.memory_space<vmem>>, vector<1x16x8xf32>
    %39 = vector.shape_cast %38 : vector<1x16x8xf32> to vector<16x8xf32>
    %c16_32 = arith.constant 16 : index
    %c21 = arith.constant 21 : index
    %40 = vector.load %arg23[%c16_32, %c21] : memref<32x110xf32, #tpu.memory_space<vmem>>, vector<16x8xf32>
    tpu.vector_store %arg23[%c16_32, %c21], %39 {strides = array<i32>} : memref<32x110xf32, #tpu.memory_space<vmem>>, vector<16x8xf32>,
    %c0_33 = arith.constant 0 : index
    %c0_34 = arith.constant 0 : index
    %c16_35 = arith.constant 16 : index
    %41 = vector.load %arg2[%c0_33, %c0_34, %c16_35] : memref<1x16x64xf32, #tpu.memory_space<vmem>>, vector<1x16x8xf32>
    %42 = vector.shape_cast %41 : vector<1x16x8xf32> to vector<16x8xf32>
    %c16_36 = arith.constant 16 : index
    %c31 = arith.constant 31 : index
    %43 = vector.load %arg23[%c16_36, %c31] : memref<32x110xf32, #tpu.memory_space<vmem>>, vector<16x8xf32>
    tpu.vector_store %arg23[%c16_36, %c31], %42 {strides = array<i32>} : memref<32x110xf32, #tpu.memory_space<vmem>>, vector<16x8xf32>,
    %c0_37 = arith.constant 0 : index
    %c0_38 = arith.constant 0 : index
    %c24 = arith.constant 24 : index
    %44 = vector.load %arg2[%c0_37, %c0_38, %c24] : memref<1x16x64xf32, #tpu.memory_space<vmem>>, vector<1x16x8xf32>
    %45 = vector.shape_cast %44 : vector<1x16x8xf32> to vector<16x8xf32>
    %c16_39 = arith.constant 16 : index
    %c41 = arith.constant 41 : index
    %46 = vector.load %arg23[%c16_39, %c41] : memref<32x110xf32, #tpu.memory_space<vmem>>, vector<16x8xf32>
    tpu.vector_store %arg23[%c16_39, %c41], %45 {strides = array<i32>} : memref<32x110xf32, #tpu.memory_space<vmem>>, vector<16x8xf32>,
    %c0_40 = arith.constant 0 : index
    %c0_41 = arith.constant 0 : index
    %c32 = arith.constant 32 : index
    %47 = vector.load %arg2[%c0_40, %c0_41, %c32] : memref<1x16x64xf32, #tpu.memory_space<vmem>>, vector<1x16x8xf32>
    %48 = vector.shape_cast %47 : vector<1x16x8xf32> to vector<16x8xf32>
    %c16_42 = arith.constant 16 : index
    %c51 = arith.constant 51 : index
    %49 = vector.load %arg23[%c16_42, %c51] : memref<32x110xf32, #tpu.memory_space<vmem>>, vector<16x8xf32>
    tpu.vector_store %arg23[%c16_42, %c51], %48 {strides = array<i32>} : memref<32x110xf32, #tpu.memory_space<vmem>>, vector<16x8xf32>,
    %c0_43 = arith.constant 0 : index
    %c0_44 = arith.constant 0 : index
    %c40 = arith.constant 40 : index
    %50 = vector.load %arg2[%c0_43, %c0_44, %c40] : memref<1x16x64xf32, #tpu.memory_space<vmem>>, vector<1x16x8xf32>
    %51 = vector.shape_cast %50 : vector<1x16x8xf32> to vector<16x8xf32>
    %c16_45 = arith.constant 16 : index
    %c61 = arith.constant 61 : index
    %52 = vector.load %arg23[%c16_45, %c61] : memref<32x110xf32, #tpu.memory_space<vmem>>, vector<16x8xf32>
    tpu.vector_store %arg23[%c16_45, %c61], %51 {strides = array<i32>} : memref<32x110xf32, #tpu.memory_space<vmem>>, vector<16x8xf32>,
    %c0_46 = arith.constant 0 : index
    %c0_47 = arith.constant 0 : index
    %c48 = arith.constant 48 : index
    %53 = vector.load %arg2[%c0_46, %c0_47, %c48] : memref<1x16x64xf32, #tpu.memory_space<vmem>>, vector<1x16x8xf32>
    %54 = vector.shape_cast %53 : vector<1x16x8xf32> to vector<16x8xf32>
    %c16_48 = arith.constant 16 : index
    %c71 = arith.constant 71 : index
    %55 = vector.load %arg23[%c16_48, %c71] : memref<32x110xf32, #tpu.memory_space<vmem>>, vector<16x8xf32>
    tpu.vector_store %arg23[%c16_48, %c71], %54 {strides = array<i32>} : memref<32x110xf32, #tpu.memory_space<vmem>>, vector<16x8xf32>,
    %c0_49 = arith.constant 0 : index
    %c0_50 = arith.constant 0 : index
    %c56 = arith.constant 56 : index
    %56 = vector.load %arg2[%c0_49, %c0_50, %c56] : memref<1x16x64xf32, #tpu.memory_space<vmem>>, vector<1x16x8xf32>
    %57 = vector.shape_cast %56 : vector<1x16x8xf32> to vector<16x8xf32>
    %c16_51 = arith.constant 16 : index
    %c81 = arith.constant 81 : index
    %58 = vector.load %arg23[%c16_51, %c81] : memref<32x110xf32, #tpu.memory_space<vmem>>, vector<16x8xf32>
    tpu.vector_store %arg23[%c16_51, %c81], %57 {strides = array<i32>} : memref<32x110xf32, #tpu.memory_space<vmem>>, vector<16x8xf32>,
    %c0_52 = arith.constant 0 : index
    %c0_53 = arith.constant 0 : index
    %59 = vector.load %arg9[%c0_52, %c0_53] : memref<32x32xf32, #tpu.memory_space<vmem>>, vector<32x32xf32>
    %cst_54 = arith.constant dense<0.000000e+00> : vector<32x1xf32>
    %60 = tpu.matmul %59, %1, %cst_54 {dimension_numbers = #tpu.dot_dimension_numbers<[1], [0], [0], [1], [0, 0, 1, 1], [], []>} : vector<32x32xf32>, vector<32x1xf32>, vector<32x1xf32> -> vector<32x1xf32>
    %c0_55 = arith.constant 0 : index
    %c1_56 = arith.constant 1 : index
    %61 = vector.load %arg10[%c0_55, %c1_56] : memref<64x5xf32, #tpu.memory_space<vmem>>, vector<32x1xf32>
    %62 = arith.addf %60, %61 : vector<32x1xf32>
    %c0_57 = arith.constant 0 : index
    %c0_58 = arith.constant 0 : index
    %63 = vector.load %arg12[%c0_57, %c0_58] : memref<1x80xf32, #tpu.memory_space<vmem>>, vector<1x80xf32>
    %64 = vector.extract_strided_slice %62 {offsets = [0, 0], sizes = [16, 1], strides = [1, 1]} : vector<32x1xf32> to vector<16x1xf32>
    %c0_59 = arith.constant 0 : index
    %c2_60 = arith.constant 2 : index
    %65 = vector.load %arg10[%c0_59, %c2_60] : memref<64x5xf32, #tpu.memory_space<vmem>>, vector<16x1xf32>
    %c0_61 = arith.constant 0 : index
    %c3_62 = arith.constant 3 : index
    %66 = vector.load %arg10[%c0_61, %c3_62] : memref<64x5xf32, #tpu.memory_space<vmem>>, vector<16x1xf32>
    %c0_63 = arith.constant 0 : index
    %c0_64 = arith.constant 0 : index
    %c0_65 = arith.constant 0 : index
    %67 = vector.load %arg7[%c0_63, %c0_64, %c0_65] : memref<9x16x32xf32, #tpu.memory_space<vmem>>, vector<1x16x32xf32>
    %68 = vector.shape_cast %67 : vector<1x16x32xf32> to vector<16x32xf32>
    %c0_66 = arith.constant 0 : index
    %c0_67 = arith.constant 0 : index
    %69 = vector.load %arg23[%c0_66, %c0_67] : memref<32x110xf32, #tpu.memory_space<vmem>>, vector<32x80xf32>
    %cst_68 = arith.constant dense<0.000000e+00> : vector<16x80xf32>
    %70 = tpu.matmul %68, %69, %cst_68 {dimension_numbers = #tpu.dot_dimension_numbers<[1], [0], [0], [1], [0, 0, 1, 1], [], []>} : vector<16x32xf32>, vector<32x80xf32>, vector<16x80xf32> -> vector<16x80xf32>
    %c1_69 = arith.constant 1 : index
    %c0_70 = arith.constant 0 : index
    %c0_71 = arith.constant 0 : index
    %71 = vector.load %arg7[%c1_69, %c0_70, %c0_71] : memref<9x16x32xf32, #tpu.memory_space<vmem>>, vector<1x16x32xf32>
    %72 = vector.shape_cast %71 : vector<1x16x32xf32> to vector<16x32xf32>
    %c0_72 = arith.constant 0 : index
    %c1_73 = arith.constant 1 : index
    %73 = vector.load %arg23[%c0_72, %c1_73] : memref<32x110xf32, #tpu.memory_space<vmem>>, vector<32x80xf32>
    %cst_74 = arith.constant dense<0.000000e+00> : vector<16x80xf32>
    %74 = tpu.matmul %72, %73, %cst_74 {dimension_numbers = #tpu.dot_dimension_numbers<[1], [0], [0], [1], [0, 0, 1, 1], [], []>} : vector<16x32xf32>, vector<32x80xf32>, vector<16x80xf32> -> vector<16x80xf32>
    %75 = arith.addf %70, %74 : vector<16x80xf32>
    %c2_75 = arith.constant 2 : index
    %c0_76 = arith.constant 0 : index
    %c0_77 = arith.constant 0 : index
    %76 = vector.load %arg7[%c2_75, %c0_76, %c0_77] : memref<9x16x32xf32, #tpu.memory_space<vmem>>, vector<1x16x32xf32>
    %77 = vector.shape_cast %76 : vector<1x16x32xf32> to vector<16x32xf32>
    %c0_78 = arith.constant 0 : index
    %c2_79 = arith.constant 2 : index
    %78 = vector.load %arg23[%c0_78, %c2_79] : memref<32x110xf32, #tpu.memory_space<vmem>>, vector<32x80xf32>
    %cst_80 = arith.constant dense<0.000000e+00> : vector<16x80xf32>
    %79 = tpu.matmul %77, %78, %cst_80 {dimension_numbers = #tpu.dot_dimension_numbers<[1], [0], [0], [1], [0, 0, 1, 1], [], []>} : vector<16x32xf32>, vector<32x80xf32>, vector<16x80xf32> -> vector<16x80xf32>
    %80 = arith.addf %75, %79 : vector<16x80xf32>
    %c3_81 = arith.constant 3 : index
    %c0_82 = arith.constant 0 : index
    %c0_83 = arith.constant 0 : index
    %81 = vector.load %arg7[%c3_81, %c0_82, %c0_83] : memref<9x16x32xf32, #tpu.memory_space<vmem>>, vector<1x16x32xf32>
    %82 = vector.shape_cast %81 : vector<1x16x32xf32> to vector<16x32xf32>
    %c0_84 = arith.constant 0 : index
    %c10 = arith.constant 10 : index
    %83 = vector.load %arg23[%c0_84, %c10] : memref<32x110xf32, #tpu.memory_space<vmem>>, vector<32x80xf32>
    %cst_85 = arith.constant dense<0.000000e+00> : vector<16x80xf32>
    %84 = tpu.matmul %82, %83, %cst_85 {dimension_numbers = #tpu.dot_dimension_numbers<[1], [0], [0], [1], [0, 0, 1, 1], [], []>} : vector<16x32xf32>, vector<32x80xf32>, vector<16x80xf32> -> vector<16x80xf32>
    %85 = arith.addf %80, %84 : vector<16x80xf32>
    %c4 = arith.constant 4 : index
    %c0_86 = arith.constant 0 : index
    %c0_87 = arith.constant 0 : index
    %86 = vector.load %arg7[%c4, %c0_86, %c0_87] : memref<9x16x32xf32, #tpu.memory_space<vmem>>, vector<1x16x32xf32>
    %87 = vector.shape_cast %86 : vector<1x16x32xf32> to vector<16x32xf32>
    %c0_88 = arith.constant 0 : index
    %c11_89 = arith.constant 11 : index
    %88 = vector.load %arg23[%c0_88, %c11_89] : memref<32x110xf32, #tpu.memory_space<vmem>>, vector<32x80xf32>
    %cst_90 = arith.constant dense<0.000000e+00> : vector<16x80xf32>
    %89 = tpu.matmul %87, %88, %cst_90 {dimension_numbers = #tpu.dot_dimension_numbers<[1], [0], [0], [1], [0, 0, 1, 1], [], []>} : vector<16x32xf32>, vector<32x80xf32>, vector<16x80xf32> -> vector<16x80xf32>
    %90 = arith.addf %85, %89 : vector<16x80xf32>
    %c5 = arith.constant 5 : index
    %c0_91 = arith.constant 0 : index
    %c0_92 = arith.constant 0 : index
    %91 = vector.load %arg7[%c5, %c0_91, %c0_92] : memref<9x16x32xf32, #tpu.memory_space<vmem>>, vector<1x16x32xf32>
    %92 = vector.shape_cast %91 : vector<1x16x32xf32> to vector<16x32xf32>
    %c0_93 = arith.constant 0 : index
    %c12 = arith.constant 12 : index
    %93 = vector.load %arg23[%c0_93, %c12] : memref<32x110xf32, #tpu.memory_space<vmem>>, vector<32x80xf32>
    %cst_94 = arith.constant dense<0.000000e+00> : vector<16x80xf32>
    %94 = tpu.matmul %92, %93, %cst_94 {dimension_numbers = #tpu.dot_dimension_numbers<[1], [0], [0], [1], [0, 0, 1, 1], [], []>} : vector<16x32xf32>, vector<32x80xf32>, vector<16x80xf32> -> vector<16x80xf32>
    %95 = arith.addf %90, %94 : vector<16x80xf32>
    %c6 = arith.constant 6 : index
    %c0_95 = arith.constant 0 : index
    %c0_96 = arith.constant 0 : index
    %96 = vector.load %arg7[%c6, %c0_95, %c0_96] : memref<9x16x32xf32, #tpu.memory_space<vmem>>, vector<1x16x32xf32>
    %97 = vector.shape_cast %96 : vector<1x16x32xf32> to vector<16x32xf32>
    %c0_97 = arith.constant 0 : index
    %c20 = arith.constant 20 : index
    %98 = vector.load %arg23[%c0_97, %c20] : memref<32x110xf32, #tpu.memory_space<vmem>>, vector<32x80xf32>
    %cst_98 = arith.constant dense<0.000000e+00> : vector<16x80xf32>
    %99 = tpu.matmul %97, %98, %cst_98 {dimension_numbers = #tpu.dot_dimension_numbers<[1], [0], [0], [1], [0, 0, 1, 1], [], []>} : vector<16x32xf32>, vector<32x80xf32>, vector<16x80xf32> -> vector<16x80xf32>
    %100 = arith.addf %95, %99 : vector<16x80xf32>
    %c7 = arith.constant 7 : index
    %c0_99 = arith.constant 0 : index
    %c0_100 = arith.constant 0 : index
    %101 = vector.load %arg7[%c7, %c0_99, %c0_100] : memref<9x16x32xf32, #tpu.memory_space<vmem>>, vector<1x16x32xf32>
    %102 = vector.shape_cast %101 : vector<1x16x32xf32> to vector<16x32xf32>
    %c0_101 = arith.constant 0 : index
    %c21_102 = arith.constant 21 : index
    %103 = vector.load %arg23[%c0_101, %c21_102] : memref<32x110xf32, #tpu.memory_space<vmem>>, vector<32x80xf32>
    %cst_103 = arith.constant dense<0.000000e+00> : vector<16x80xf32>
    %104 = tpu.matmul %102, %103, %cst_103 {dimension_numbers = #tpu.dot_dimension_numbers<[1], [0], [0], [1], [0, 0, 1, 1], [], []>} : vector<16x32xf32>, vector<32x80xf32>, vector<16x80xf32> -> vector<16x80xf32>
    %105 = arith.addf %100, %104 : vector<16x80xf32>
    %c8_104 = arith.constant 8 : index
    %c0_105 = arith.constant 0 : index
    %c0_106 = arith.constant 0 : index
    %106 = vector.load %arg7[%c8_104, %c0_105, %c0_106] : memref<9x16x32xf32, #tpu.memory_space<vmem>>, vector<1x16x32xf32>
    %107 = vector.shape_cast %106 : vector<1x16x32xf32> to vector<16x32xf32>
    %c0_107 = arith.constant 0 : index
    %c22 = arith.constant 22 : index
    %108 = vector.load %arg23[%c0_107, %c22] : memref<32x110xf32, #tpu.memory_space<vmem>>, vector<32x80xf32>
    %cst_108 = arith.constant dense<0.000000e+00> : vector<16x80xf32>
    %109 = tpu.matmul %107, %108, %cst_108 {dimension_numbers = #tpu.dot_dimension_numbers<[1], [0], [0], [1], [0, 0, 1, 1], [], []>} : vector<16x32xf32>, vector<32x80xf32>, vector<16x80xf32> -> vector<16x80xf32>
    %110 = arith.addf %105, %109 : vector<16x80xf32>
    %111 = vector.broadcast %64 : vector<16x1xf32> to vector<16x80xf32>
    %112 = arith.addf %110, %111 : vector<16x80xf32>
    %113 = vector.broadcast %63 : vector<1x80xf32> to vector<16x80xf32>
    %114 = arith.mulf %112, %113 : vector<16x80xf32>
    %cst_109 = arith.constant dense<0.000000e+00> : vector<16xf32>
    %115 = vector.multi_reduction <add>, %114, %cst_109 [1] : vector<16x80xf32> to vector<16xf32>
    %116 = vector.shape_cast %115 : vector<16xf32> to vector<16x1xf32>
    %cst_110 = arith.constant 1.562500e-02 : f32
    %117 = vector.broadcast %cst_110 : f32 to vector<16x1xf32>
    %118 = arith.mulf %116, %117 : vector<16x1xf32>
    %119 = vector.broadcast %118 : vector<16x1xf32> to vector<16x80xf32>
    %120 = arith.subf %112, %119 : vector<16x80xf32>
    %121 = vector.broadcast %63 : vector<1x80xf32> to vector<16x80xf32>
    %122 = arith.mulf %120, %121 : vector<16x80xf32>
    %123 = arith.mulf %122, %122 : vector<16x80xf32>
    %cst_111 = arith.constant dense<0.000000e+00> : vector<16xf32>
    %124 = vector.multi_reduction <add>, %123, %cst_111 [1] : vector<16x80xf32> to vector<16xf32>
    %125 = vector.shape_cast %124 : vector<16xf32> to vector<16x1xf32>
    %cst_112 = arith.constant 1.562500e-02 : f32
    %126 = vector.broadcast %cst_112 : f32 to vector<16x1xf32>
    %127 = arith.mulf %125, %126 : vector<16x1xf32>
    %128 = vector.broadcast %118 : vector<16x1xf32> to vector<16x80xf32>
    %129 = arith.subf %112, %128 : vector<16x80xf32>
    %cst_113 = arith.constant 9.99999974E-6 : f32
    %130 = vector.broadcast %cst_113 : f32 to vector<16x1xf32>
    %131 = arith.addf %127, %130 : vector<16x1xf32>
    %132 = math.rsqrt %131 : vector<16x1xf32>
    %133 = vector.broadcast %132 : vector<16x1xf32> to vector<16x80xf32>
    %134 = arith.mulf %129, %133 : vector<16x80xf32>
    %135 = vector.broadcast %65 : vector<16x1xf32> to vector<16x80xf32>
    %136 = arith.mulf %134, %135 : vector<16x80xf32>
    %137 = vector.broadcast %66 : vector<16x1xf32> to vector<16x80xf32>
    %138 = arith.addf %136, %137 : vector<16x80xf32>
    %cst_114 = arith.constant 0.000000e+00 : f32
    %139 = vector.broadcast %cst_114 : f32 to vector<16x80xf32>
    %140 = arith.cmpf oge, %138, %139 : vector<16x80xf32>
    %cst_115 = arith.constant 0.00999999977 : f32
    %141 = vector.broadcast %cst_115 : f32 to vector<16x80xf32>
    %142 = arith.mulf %141, %138 : vector<16x80xf32>
    %143 = arith.select %140, %138, %142 : vector<16x80xi1>, vector<16x80xf32>
    %144 = vector.broadcast %63 : vector<1x80xf32> to vector<16x80xf32>
    %145 = arith.mulf %143, %144 : vector<16x80xf32>
    %c0_116 = arith.constant 0 : index
    %c11_117 = arith.constant 11 : index
    %146 = vector.load %arg23[%c0_116, %c11_117] : memref<32x110xf32, #tpu.memory_space<vmem>>, vector<16x80xf32>
    tpu.vector_store %arg23[%c0_116, %c11_117], %145 {strides = array<i32>} : memref<32x110xf32, #tpu.memory_space<vmem>>, vector<16x80xf32>,
    %147 = vector.extract_strided_slice %62 {offsets = [16, 0], sizes = [16, 1], strides = [1, 1]} : vector<32x1xf32> to vector<16x1xf32>
    %c16_118 = arith.constant 16 : index
    %c2_119 = arith.constant 2 : index
    %148 = vector.load %arg10[%c16_118, %c2_119] : memref<64x5xf32, #tpu.memory_space<vmem>>, vector<16x1xf32>
    %c16_120 = arith.constant 16 : index
    %c3_121 = arith.constant 3 : index
    %149 = vector.load %arg10[%c16_120, %c3_121] : memref<64x5xf32, #tpu.memory_space<vmem>>, vector<16x1xf32>
    %c0_122 = arith.constant 0 : index
    %c0_123 = arith.constant 0 : index
    %c0_124 = arith.constant 0 : index
    %150 = vector.load %arg8[%c0_122, %c0_123, %c0_124] : memref<9x16x16xf32, #tpu.memory_space<vmem>>, vector<1x16x16xf32>
    %151 = vector.shape_cast %150 : vector<1x16x16xf32> to vector<16x16xf32>
    %c0_125 = arith.constant 0 : index
    %c0_126 = arith.constant 0 : index
    %152 = vector.load %arg23[%c0_125, %c0_126] : memref<32x110xf32, #tpu.memory_space<vmem>>, vector<16x80xf32>
    %cst_127 = arith.constant dense<0.000000e+00> : vector<16x80xf32>
    %153 = tpu.matmul %151, %152, %cst_127 {dimension_numbers = #tpu.dot_dimension_numbers<[1], [0], [0], [1], [0, 0, 1, 1], [], []>} : vector<16x16xf32>, vector<16x80xf32>, vector<16x80xf32> -> vector<16x80xf32>
    %c1_128 = arith.constant 1 : index
    %c0_129 = arith.constant 0 : index
    %c0_130 = arith.constant 0 : index
    %154 = vector.load %arg8[%c1_128, %c0_129, %c0_130] : memref<9x16x16xf32, #tpu.memory_space<vmem>>, vector<1x16x16xf32>
    %155 = vector.shape_cast %154 : vector<1x16x16xf32> to vector<16x16xf32>
    %c0_131 = arith.constant 0 : index
    %c1_132 = arith.constant 1 : index
    %156 = vector.load %arg23[%c0_131, %c1_132] : memref<32x110xf32, #tpu.memory_space<vmem>>, vector<16x80xf32>
    %cst_133 = arith.constant dense<0.000000e+00> : vector<16x80xf32>
    %157 = tpu.matmul %155, %156, %cst_133 {dimension_numbers = #tpu.dot_dimension_numbers<[1], [0], [0], [1], [0, 0, 1, 1], [], []>} : vector<16x16xf32>, vector<16x80xf32>, vector<16x80xf32> -> vector<16x80xf32>
    %158 = arith.addf %153, %157 : vector<16x80xf32>
    %c2_134 = arith.constant 2 : index
    %c0_135 = arith.constant 0 : index
    %c0_136 = arith.constant 0 : index
    %159 = vector.load %arg8[%c2_134, %c0_135, %c0_136] : memref<9x16x16xf32, #tpu.memory_space<vmem>>, vector<1x16x16xf32>
    %160 = vector.shape_cast %159 : vector<1x16x16xf32> to vector<16x16xf32>
    %c0_137 = arith.constant 0 : index
    %c2_138 = arith.constant 2 : index
    %161 = vector.load %arg23[%c0_137, %c2_138] : memref<32x110xf32, #tpu.memory_space<vmem>>, vector<16x80xf32>
    %cst_139 = arith.constant dense<0.000000e+00> : vector<16x80xf32>
    %162 = tpu.matmul %160, %161, %cst_139 {dimension_numbers = #tpu.dot_dimension_numbers<[1], [0], [0], [1], [0, 0, 1, 1], [], []>} : vector<16x16xf32>, vector<16x80xf32>, vector<16x80xf32> -> vector<16x80xf32>
    %163 = arith.addf %158, %162 : vector<16x80xf32>
    %c3_140 = arith.constant 3 : index
    %c0_141 = arith.constant 0 : index
    %c0_142 = arith.constant 0 : index
    %164 = vector.load %arg8[%c3_140, %c0_141, %c0_142] : memref<9x16x16xf32, #tpu.memory_space<vmem>>, vector<1x16x16xf32>
    %165 = vector.shape_cast %164 : vector<1x16x16xf32> to vector<16x16xf32>
    %c0_143 = arith.constant 0 : index
    %c10_144 = arith.constant 10 : index
    %166 = vector.load %arg23[%c0_143, %c10_144] : memref<32x110xf32, #tpu.memory_space<vmem>>, vector<16x80xf32>
    %cst_145 = arith.constant dense<0.000000e+00> : vector<16x80xf32>
    %167 = tpu.matmul %165, %166, %cst_145 {dimension_numbers = #tpu.dot_dimension_numbers<[1], [0], [0], [1], [0, 0, 1, 1], [], []>} : vector<16x16xf32>, vector<16x80xf32>, vector<16x80xf32> -> vector<16x80xf32>
    %168 = arith.addf %163, %167 : vector<16x80xf32>
    %c4_146 = arith.constant 4 : index
    %c0_147 = arith.constant 0 : index
    %c0_148 = arith.constant 0 : index
    %169 = vector.load %arg8[%c4_146, %c0_147, %c0_148] : memref<9x16x16xf32, #tpu.memory_space<vmem>>, vector<1x16x16xf32>
    %170 = vector.shape_cast %169 : vector<1x16x16xf32> to vector<16x16xf32>
    %c0_149 = arith.constant 0 : index
    %c11_150 = arith.constant 11 : index
    %171 = vector.load %arg23[%c0_149, %c11_150] : memref<32x110xf32, #tpu.memory_space<vmem>>, vector<16x80xf32>
    %cst_151 = arith.constant dense<0.000000e+00> : vector<16x80xf32>
    %172 = tpu.matmul %170, %171, %cst_151 {dimension_numbers = #tpu.dot_dimension_numbers<[1], [0], [0], [1], [0, 0, 1, 1], [], []>} : vector<16x16xf32>, vector<16x80xf32>, vector<16x80xf32> -> vector<16x80xf32>
    %173 = arith.addf %168, %172 : vector<16x80xf32>
    %c5_152 = arith.constant 5 : index
    %c0_153 = arith.constant 0 : index
    %c0_154 = arith.constant 0 : index
    %174 = vector.load %arg8[%c5_152, %c0_153, %c0_154] : memref<9x16x16xf32, #tpu.memory_space<vmem>>, vector<1x16x16xf32>
    %175 = vector.shape_cast %174 : vector<1x16x16xf32> to vector<16x16xf32>
    %c0_155 = arith.constant 0 : index
    %c12_156 = arith.constant 12 : index
    %176 = vector.load %arg23[%c0_155, %c12_156] : memref<32x110xf32, #tpu.memory_space<vmem>>, vector<16x80xf32>
    %cst_157 = arith.constant dense<0.000000e+00> : vector<16x80xf32>
    %177 = tpu.matmul %175, %176, %cst_157 {dimension_numbers = #tpu.dot_dimension_numbers<[1], [0], [0], [1], [0, 0, 1, 1], [], []>} : vector<16x16xf32>, vector<16x80xf32>, vector<16x80xf32> -> vector<16x80xf32>
    %178 = arith.addf %173, %177 : vector<16x80xf32>
    %c6_158 = arith.constant 6 : index
    %c0_159 = arith.constant 0 : index
    %c0_160 = arith.constant 0 : index
    %179 = vector.load %arg8[%c6_158, %c0_159, %c0_160] : memref<9x16x16xf32, #tpu.memory_space<vmem>>, vector<1x16x16xf32>
    %180 = vector.shape_cast %179 : vector<1x16x16xf32> to vector<16x16xf32>
    %c0_161 = arith.constant 0 : index
    %c20_162 = arith.constant 20 : index
    %181 = vector.load %arg23[%c0_161, %c20_162] : memref<32x110xf32, #tpu.memory_space<vmem>>, vector<16x80xf32>
    %cst_163 = arith.constant dense<0.000000e+00> : vector<16x80xf32>
    %182 = tpu.matmul %180, %181, %cst_163 {dimension_numbers = #tpu.dot_dimension_numbers<[1], [0], [0], [1], [0, 0, 1, 1], [], []>} : vector<16x16xf32>, vector<16x80xf32>, vector<16x80xf32> -> vector<16x80xf32>
    %183 = arith.addf %178, %182 : vector<16x80xf32>
    %c7_164 = arith.constant 7 : index
    %c0_165 = arith.constant 0 : index
    %c0_166 = arith.constant 0 : index
    %184 = vector.load %arg8[%c7_164, %c0_165, %c0_166] : memref<9x16x16xf32, #tpu.memory_space<vmem>>, vector<1x16x16xf32>
    %185 = vector.shape_cast %184 : vector<1x16x16xf32> to vector<16x16xf32>
    %c0_167 = arith.constant 0 : index
    %c21_168 = arith.constant 21 : index
    %186 = vector.load %arg23[%c0_167, %c21_168] : memref<32x110xf32, #tpu.memory_space<vmem>>, vector<16x80xf32>
    %cst_169 = arith.constant dense<0.000000e+00> : vector<16x80xf32>
    %187 = tpu.matmul %185, %186, %cst_169 {dimension_numbers = #tpu.dot_dimension_numbers<[1], [0], [0], [1], [0, 0, 1, 1], [], []>} : vector<16x16xf32>, vector<16x80xf32>, vector<16x80xf32> -> vector<16x80xf32>
    %188 = arith.addf %183, %187 : vector<16x80xf32>
    %c8_170 = arith.constant 8 : index
    %c0_171 = arith.constant 0 : index
    %c0_172 = arith.constant 0 : index
    %189 = vector.load %arg8[%c8_170, %c0_171, %c0_172] : memref<9x16x16xf32, #tpu.memory_space<vmem>>, vector<1x16x16xf32>
    %190 = vector.shape_cast %189 : vector<1x16x16xf32> to vector<16x16xf32>
    %c0_173 = arith.constant 0 : index
    %c22_174 = arith.constant 22 : index
    %191 = vector.load %arg23[%c0_173, %c22_174] : memref<32x110xf32, #tpu.memory_space<vmem>>, vector<16x80xf32>
    %cst_175 = arith.constant dense<0.000000e+00> : vector<16x80xf32>
    %192 = tpu.matmul %190, %191, %cst_175 {dimension_numbers = #tpu.dot_dimension_numbers<[1], [0], [0], [1], [0, 0, 1, 1], [], []>} : vector<16x16xf32>, vector<16x80xf32>, vector<16x80xf32> -> vector<16x80xf32>
    %193 = arith.addf %188, %192 : vector<16x80xf32>
    %194 = vector.broadcast %147 : vector<16x1xf32> to vector<16x80xf32>
    %195 = arith.addf %193, %194 : vector<16x80xf32>
    %196 = vector.broadcast %63 : vector<1x80xf32> to vector<16x80xf32>
    %197 = arith.mulf %195, %196 : vector<16x80xf32>
    %cst_176 = arith.constant dense<0.000000e+00> : vector<16xf32>
    %198 = vector.multi_reduction <add>, %197, %cst_176 [1] : vector<16x80xf32> to vector<16xf32>
    %199 = vector.shape_cast %198 : vector<16xf32> to vector<16x1xf32>
    %cst_177 = arith.constant 1.562500e-02 : f32
    %200 = vector.broadcast %cst_177 : f32 to vector<16x1xf32>
    %201 = arith.mulf %199, %200 : vector<16x1xf32>
    %202 = vector.broadcast %201 : vector<16x1xf32> to vector<16x80xf32>
    %203 = arith.subf %195, %202 : vector<16x80xf32>
    %204 = vector.broadcast %63 : vector<1x80xf32> to vector<16x80xf32>
    %205 = arith.mulf %203, %204 : vector<16x80xf32>
    %206 = arith.mulf %205, %205 : vector<16x80xf32>
    %cst_178 = arith.constant dense<0.000000e+00> : vector<16xf32>
    %207 = vector.multi_reduction <add>, %206, %cst_178 [1] : vector<16x80xf32> to vector<16xf32>
    %208 = vector.shape_cast %207 : vector<16xf32> to vector<16x1xf32>
    %cst_179 = arith.constant 1.562500e-02 : f32
    %209 = vector.broadcast %cst_179 : f32 to vector<16x1xf32>
    %210 = arith.mulf %208, %209 : vector<16x1xf32>
    %211 = vector.broadcast %201 : vector<16x1xf32> to vector<16x80xf32>
    %212 = arith.subf %195, %211 : vector<16x80xf32>
    %cst_180 = arith.constant 9.99999974E-6 : f32
    %213 = vector.broadcast %cst_180 : f32 to vector<16x1xf32>
    %214 = arith.addf %210, %213 : vector<16x1xf32>
    %215 = math.rsqrt %214 : vector<16x1xf32>
    %216 = vector.broadcast %215 : vector<16x1xf32> to vector<16x80xf32>
    %217 = arith.mulf %212, %216 : vector<16x80xf32>
    %218 = vector.broadcast %148 : vector<16x1xf32> to vector<16x80xf32>
    %219 = arith.mulf %217, %218 : vector<16x80xf32>
    %220 = vector.broadcast %149 : vector<16x1xf32> to vector<16x80xf32>
    %221 = arith.addf %219, %220 : vector<16x80xf32>
    %cst_181 = arith.constant 0.000000e+00 : f32
    %222 = vector.broadcast %cst_181 : f32 to vector<16x80xf32>
    %223 = arith.cmpf oge, %221, %222 : vector<16x80xf32>
    %cst_182 = arith.constant 0.00999999977 : f32
    %224 = vector.broadcast %cst_182 : f32 to vector<16x80xf32>
    %225 = arith.mulf %224, %221 : vector<16x80xf32>
    %226 = arith.select %223, %221, %225 : vector<16x80xi1>, vector<16x80xf32>
    %227 = vector.broadcast %63 : vector<1x80xf32> to vector<16x80xf32>
    %228 = arith.mulf %226, %227 : vector<16x80xf32>
    %c0_183 = arith.constant 0 : index
    %c0_184 = arith.constant 0 : index
    %229 = vector.load %arg11[%c0_183, %c0_184] : memref<8x16xf32, #tpu.memory_space<vmem>>, vector<8x16xf32>
    %cst_185 = arith.constant dense<0.000000e+00> : vector<8x80xf32>
    %230 = tpu.matmul %229, %228, %cst_185 {dimension_numbers = #tpu.dot_dimension_numbers<[1], [0], [0], [1], [0, 0, 1, 1], [], []>} : vector<8x16xf32>, vector<16x80xf32>, vector<8x80xf32> -> vector<8x80xf32>
    %c0_186 = arith.constant 0 : index
    %c4_187 = arith.constant 4 : index
    %231 = vector.load %arg10[%c0_186, %c4_187] : memref<64x5xf32, #tpu.memory_space<vmem>>, vector<8x1xf32>
    %232 = vector.broadcast %231 : vector<8x1xf32> to vector<8x80xf32>
    %233 = arith.addf %230, %232 : vector<8x80xf32>
    %c0_188 = arith.constant 0 : index
    %c0_189 = arith.constant 0 : index
    %c0_190 = arith.constant 0 : index
    %234 = vector.load %arg21[%c0_188, %c0_189, %c0_190] : memref<1x8x80xf32, #tpu.memory_space<vmem>>, vector<1x8x80xf32>
    %235 = vector.shape_cast %234 : vector<1x8x80xf32> to vector<8x80xf32>
    %236 = vector.shape_cast %233 : vector<8x80xf32> to vector<1x8x80xf32>
    tpu.vector_store %arg21[%c0_188, %c0_189, %c0_190], %236 {strides = array<i32>} : memref<1x8x80xf32, #tpu.memory_space<vmem>>, vector<1x8x80xf32>,
    %c0_191 = arith.constant 0 : index
    %c0_192 = arith.constant 0 : index
    %237 = vector.load %arg13[%c0_191, %c0_192] : memref<32x16xf32, #tpu.memory_space<vmem>>, vector<32x16xf32>
    %cst_193 = arith.constant dense<0.000000e+00> : vector<32x80xf32>
    %238 = tpu.matmul %237, %228, %cst_193 {dimension_numbers = #tpu.dot_dimension_numbers<[1], [0], [0], [1], [0, 0, 1, 1], [], []>} : vector<32x16xf32>, vector<16x80xf32>, vector<32x80xf32> -> vector<32x80xf32>
    %c0_194 = arith.constant 0 : index
    %c0_195 = arith.constant 0 : index
    %239 = vector.load %arg18[%c0_194, %c0_195] : memref<32x5xf32, #tpu.memory_space<vmem>>, vector<32x1xf32>
    %240 = vector.broadcast %239 : vector<32x1xf32> to vector<32x80xf32>
    %241 = arith.addf %238, %240 : vector<32x80xf32>
    %242 = vector.extract_strided_slice %241 {offsets = [0, 0], sizes = [8, 80], strides = [1, 1]} : vector<32x80xf32> to vector<8x80xf32>
    %c0_196 = arith.constant 0 : index
    %c0_197 = arith.constant 0 : index
    %c0_198 = arith.constant 0 : index
    %243 = vector.load %arg14[%c0_196, %c0_197, %c0_198] : memref<4x80x342xbf16, #tpu.memory_space<vmem>>, vector<1x80x342xbf16>
    %244 = vector.shape_cast %243 : vector<1x80x342xbf16> to vector<80x342xbf16>
    %245 = arith.extf %244 : vector<80x342xbf16> to vector<80x342xf32>
    %cst_199 = arith.constant dense<0.000000e+00> : vector<8x342xf32>
    %246 = tpu.matmul %242, %245, %cst_199 {dimension_numbers = #tpu.dot_dimension_numbers<[1], [0], [0], [1], [0, 0, 1, 1], [], []>} : vector<8x80xf32>, vector<80x342xf32>, vector<8x342xf32> -> vector<8x342xf32>
    %247 = vector.extract_strided_slice %241 {offsets = [8, 0], sizes = [8, 80], strides = [1, 1]} : vector<32x80xf32> to vector<8x80xf32>
    %c1_200 = arith.constant 1 : index
    %c0_201 = arith.constant 0 : index
    %c0_202 = arith.constant 0 : index
    %248 = vector.load %arg14[%c1_200, %c0_201, %c0_202] : memref<4x80x342xbf16, #tpu.memory_space<vmem>>, vector<1x80x342xbf16>
    %249 = vector.shape_cast %248 : vector<1x80x342xbf16> to vector<80x342xbf16>
    %250 = arith.extf %249 : vector<80x342xbf16> to vector<80x342xf32>
    %cst_203 = arith.constant dense<0.000000e+00> : vector<8x342xf32>
    %251 = tpu.matmul %247, %250, %cst_203 {dimension_numbers = #tpu.dot_dimension_numbers<[1], [0], [0], [1], [0, 0, 1, 1], [], []>} : vector<8x80xf32>, vector<80x342xf32>, vector<8x342xf32> -> vector<8x342xf32>
    %252 = arith.addf %246, %251 : vector<8x342xf32>
    %253 = vector.extract_strided_slice %241 {offsets = [16, 0], sizes = [8, 80], strides = [1, 1]} : vector<32x80xf32> to vector<8x80xf32>
    %c2_204 = arith.constant 2 : index
    %c0_205 = arith.constant 0 : index
    %c0_206 = arith.constant 0 : index
    %254 = vector.load %arg14[%c2_204, %c0_205, %c0_206] : memref<4x80x342xbf16, #tpu.memory_space<vmem>>, vector<1x80x342xbf16>
    %255 = vector.shape_cast %254 : vector<1x80x342xbf16> to vector<80x342xbf16>
    %256 = arith.extf %255 : vector<80x342xbf16> to vector<80x342xf32>
    %cst_207 = arith.constant dense<0.000000e+00> : vector<8x342xf32>
    %257 = tpu.matmul %253, %256, %cst_207 {dimension_numbers = #tpu.dot_dimension_numbers<[1], [0], [0], [1], [0, 0, 1, 1], [], []>} : vector<8x80xf32>, vector<80x342xf32>, vector<8x342xf32> -> vector<8x342xf32>
    %258 = arith.addf %252, %257 : vector<8x342xf32>
    %259 = vector.extract_strided_slice %241 {offsets = [24, 0], sizes = [8, 80], strides = [1, 1]} : vector<32x80xf32> to vector<8x80xf32>
    %c3_208 = arith.constant 3 : index
    %c0_209 = arith.constant 0 : index
    %c0_210 = arith.constant 0 : index
    %260 = vector.load %arg14[%c3_208, %c0_209, %c0_210] : memref<4x80x342xbf16, #tpu.memory_space<vmem>>, vector<1x80x342xbf16>
    %261 = vector.shape_cast %260 : vector<1x80x342xbf16> to vector<80x342xbf16>
    %262 = arith.extf %261 : vector<80x342xbf16> to vector<80x342xf32>
    %cst_211 = arith.constant dense<0.000000e+00> : vector<8x342xf32>
    %263 = tpu.matmul %259, %262, %cst_211 {dimension_numbers = #tpu.dot_dimension_numbers<[1], [0], [0], [1], [0, 0, 1, 1], [], []>} : vector<8x80xf32>, vector<80x342xf32>, vector<8x342xf32> -> vector<8x342xf32>
    %264 = arith.addf %258, %263 : vector<8x342xf32>
    %c0_212 = arith.constant 0 : index
    %c0_213 = arith.constant 0 : index
    %265 = vector.load %arg24[%c0_212, %c0_213] : memref<16x342xf32, #tpu.memory_space<vmem>>, vector<8x342xf32>
    tpu.vector_store %arg24[%c0_212, %c0_213], %264 {strides = array<i32>} : memref<16x342xf32, #tpu.memory_space<vmem>>, vector<8x342xf32>,
    %cst_214 = arith.constant 0.000000e+00 : f32
    %266 = vector.broadcast %cst_214 : f32 to vector<8x342xf32>
    %c8_215 = arith.constant 8 : index
    %c0_216 = arith.constant 0 : index
    %267 = vector.load %arg24[%c8_215, %c0_216] : memref<16x342xf32, #tpu.memory_space<vmem>>, vector<8x342xf32>
    tpu.vector_store %arg24[%c8_215, %c0_216], %266 {strides = array<i32>} : memref<16x342xf32, #tpu.memory_space<vmem>>, vector<8x342xf32>,
    %c0_217 = arith.constant 0 : index
    %c0_218 = arith.constant 0 : index
    %c0_219 = arith.constant 0 : index
    %268 = vector.load %arg3[%c0_217, %c0_218, %c0_219] : memref<1x8x256xf32, #tpu.memory_space<vmem>>, vector<1x8x16xf32>
    %269 = vector.shape_cast %268 : vector<1x8x16xf32> to vector<8x16xf32>
    %c8_220 = arith.constant 8 : index
    %c19 = arith.constant 19 : index
    %270 = vector.load %arg24[%c8_220, %c19] : memref<16x342xf32, #tpu.memory_space<vmem>>, vector<8x16xf32>
    tpu.vector_store %arg24[%c8_220, %c19], %269 {strides = array<i32>} : memref<16x342xf32, #tpu.memory_space<vmem>>, vector<8x16xf32>,
    %c0_221 = arith.constant 0 : index
    %c0_222 = arith.constant 0 : index
    %c16_223 = arith.constant 16 : index
    %271 = vector.load %arg3[%c0_221, %c0_222, %c16_223] : memref<1x8x256xf32, #tpu.memory_space<vmem>>, vector<1x8x16xf32>
    %272 = vector.shape_cast %271 : vector<1x8x16xf32> to vector<8x16xf32>
    %c8_224 = arith.constant 8 : index
    %c37 = arith.constant 37 : index
    %273 = vector.load %arg24[%c8_224, %c37] : memref<16x342xf32, #tpu.memory_space<vmem>>, vector<8x16xf32>
    tpu.vector_store %arg24[%c8_224, %c37], %272 {strides = array<i32>} : memref<16x342xf32, #tpu.memory_space<vmem>>, vector<8x16xf32>,
    %c0_225 = arith.constant 0 : index
    %c0_226 = arith.constant 0 : index
    %c32_227 = arith.constant 32 : index
    %274 = vector.load %arg3[%c0_225, %c0_226, %c32_227] : memref<1x8x256xf32, #tpu.memory_space<vmem>>, vector<1x8x16xf32>
    %275 = vector.shape_cast %274 : vector<1x8x16xf32> to vector<8x16xf32>
    %c8_228 = arith.constant 8 : index
    %c55 = arith.constant 55 : index
    %276 = vector.load %arg24[%c8_228, %c55] : memref<16x342xf32, #tpu.memory_space<vmem>>, vector<8x16xf32>
    tpu.vector_store %arg24[%c8_228, %c55], %275 {strides = array<i32>} : memref<16x342xf32, #tpu.memory_space<vmem>>, vector<8x16xf32>,
    %c0_229 = arith.constant 0 : index
    %c0_230 = arith.constant 0 : index
    %c48_231 = arith.constant 48 : index
    %277 = vector.load %arg3[%c0_229, %c0_230, %c48_231] : memref<1x8x256xf32, #tpu.memory_space<vmem>>, vector<1x8x16xf32>
    %278 = vector.shape_cast %277 : vector<1x8x16xf32> to vector<8x16xf32>
    %c8_232 = arith.constant 8 : index
    %c73 = arith.constant 73 : index
    %279 = vector.load %arg24[%c8_232, %c73] : memref<16x342xf32, #tpu.memory_space<vmem>>, vector<8x16xf32>
    tpu.vector_store %arg24[%c8_232, %c73], %278 {strides = array<i32>} : memref<16x342xf32, #tpu.memory_space<vmem>>, vector<8x16xf32>,
    %c0_233 = arith.constant 0 : index
    %c0_234 = arith.constant 0 : index
    %c64 = arith.constant 64 : index
    %280 = vector.load %arg3[%c0_233, %c0_234, %c64] : memref<1x8x256xf32, #tpu.memory_space<vmem>>, vector<1x8x16xf32>
    %281 = vector.shape_cast %280 : vector<1x8x16xf32> to vector<8x16xf32>
    %c8_235 = arith.constant 8 : index
    %c91 = arith.constant 91 : index
    %282 = vector.load %arg24[%c8_235, %c91] : memref<16x342xf32, #tpu.memory_space<vmem>>, vector<8x16xf32>
    tpu.vector_store %arg24[%c8_235, %c91], %281 {strides = array<i32>} : memref<16x342xf32, #tpu.memory_space<vmem>>, vector<8x16xf32>,
    %c0_236 = arith.constant 0 : index
    %c0_237 = arith.constant 0 : index
    %c80 = arith.constant 80 : index
    %283 = vector.load %arg3[%c0_236, %c0_237, %c80] : memref<1x8x256xf32, #tpu.memory_space<vmem>>, vector<1x8x16xf32>
    %284 = vector.shape_cast %283 : vector<1x8x16xf32> to vector<8x16xf32>
    %c8_238 = arith.constant 8 : index
    %c109 = arith.constant 109 : index
    %285 = vector.load %arg24[%c8_238, %c109] : memref<16x342xf32, #tpu.memory_space<vmem>>, vector<8x16xf32>
    tpu.vector_store %arg24[%c8_238, %c109], %284 {strides = array<i32>} : memref<16x342xf32, #tpu.memory_space<vmem>>, vector<8x16xf32>,
    %c0_239 = arith.constant 0 : index
    %c0_240 = arith.constant 0 : index
    %c96 = arith.constant 96 : index
    %286 = vector.load %arg3[%c0_239, %c0_240, %c96] : memref<1x8x256xf32, #tpu.memory_space<vmem>>, vector<1x8x16xf32>
    %287 = vector.shape_cast %286 : vector<1x8x16xf32> to vector<8x16xf32>
    %c8_241 = arith.constant 8 : index
    %c127 = arith.constant 127 : index
    %288 = vector.load %arg24[%c8_241, %c127] : memref<16x342xf32, #tpu.memory_space<vmem>>, vector<8x16xf32>
    tpu.vector_store %arg24[%c8_241, %c127], %287 {strides = array<i32>} : memref<16x342xf32, #tpu.memory_space<vmem>>, vector<8x16xf32>,
    %c0_242 = arith.constant 0 : index
    %c0_243 = arith.constant 0 : index
    %c112 = arith.constant 112 : index
    %289 = vector.load %arg3[%c0_242, %c0_243, %c112] : memref<1x8x256xf32, #tpu.memory_space<vmem>>, vector<1x8x16xf32>
    %290 = vector.shape_cast %289 : vector<1x8x16xf32> to vector<8x16xf32>
    %c8_244 = arith.constant 8 : index
    %c145 = arith.constant 145 : index
    %291 = vector.load %arg24[%c8_244, %c145] : memref<16x342xf32, #tpu.memory_space<vmem>>, vector<8x16xf32>
    tpu.vector_store %arg24[%c8_244, %c145], %290 {strides = array<i32>} : memref<16x342xf32, #tpu.memory_space<vmem>>, vector<8x16xf32>,
    %c0_245 = arith.constant 0 : index
    %c0_246 = arith.constant 0 : index
    %c128 = arith.constant 128 : index
    %292 = vector.load %arg3[%c0_245, %c0_246, %c128] : memref<1x8x256xf32, #tpu.memory_space<vmem>>, vector<1x8x16xf32>
    %293 = vector.shape_cast %292 : vector<1x8x16xf32> to vector<8x16xf32>
    %c8_247 = arith.constant 8 : index
    %c163 = arith.constant 163 : index
    %294 = vector.load %arg24[%c8_247, %c163] : memref<16x342xf32, #tpu.memory_space<vmem>>, vector<8x16xf32>
    tpu.vector_store %arg24[%c8_247, %c163], %293 {strides = array<i32>} : memref<16x342xf32, #tpu.memory_space<vmem>>, vector<8x16xf32>,
    %c0_248 = arith.constant 0 : index
    %c0_249 = arith.constant 0 : index
    %c144 = arith.constant 144 : index
    %295 = vector.load %arg3[%c0_248, %c0_249, %c144] : memref<1x8x256xf32, #tpu.memory_space<vmem>>, vector<1x8x16xf32>
    %296 = vector.shape_cast %295 : vector<1x8x16xf32> to vector<8x16xf32>
    %c8_250 = arith.constant 8 : index
    %c181 = arith.constant 181 : index
    %297 = vector.load %arg24[%c8_250, %c181] : memref<16x342xf32, #tpu.memory_space<vmem>>, vector<8x16xf32>
    tpu.vector_store %arg24[%c8_250, %c181], %296 {strides = array<i32>} : memref<16x342xf32, #tpu.memory_space<vmem>>, vector<8x16xf32>,
    %c0_251 = arith.constant 0 : index
    %c0_252 = arith.constant 0 : index
    %c160 = arith.constant 160 : index
    %298 = vector.load %arg3[%c0_251, %c0_252, %c160] : memref<1x8x256xf32, #tpu.memory_space<vmem>>, vector<1x8x16xf32>
    %299 = vector.shape_cast %298 : vector<1x8x16xf32> to vector<8x16xf32>
    %c8_253 = arith.constant 8 : index
    %c199 = arith.constant 199 : index
    %300 = vector.load %arg24[%c8_253, %c199] : memref<16x342xf32, #tpu.memory_space<vmem>>, vector<8x16xf32>
    tpu.vector_store %arg24[%c8_253, %c199], %299 {strides = array<i32>} : memref<16x342xf32, #tpu.memory_space<vmem>>, vector<8x16xf32>,
    %c0_254 = arith.constant 0 : index
    %c0_255 = arith.constant 0 : index
    %c176 = arith.constant 176 : index
    %301 = vector.load %arg3[%c0_254, %c0_255, %c176] : memref<1x8x256xf32, #tpu.memory_space<vmem>>, vector<1x8x16xf32>
    %302 = vector.shape_cast %301 : vector<1x8x16xf32> to vector<8x16xf32>
    %c8_256 = arith.constant 8 : index
    %c217 = arith.constant 217 : index
    %303 = vector.load %arg24[%c8_256, %c217] : memref<16x342xf32, #tpu.memory_space<vmem>>, vector<8x16xf32>
    tpu.vector_store %arg24[%c8_256, %c217], %302 {strides = array<i32>} : memref<16x342xf32, #tpu.memory_space<vmem>>, vector<8x16xf32>,
    %c0_257 = arith.constant 0 : index
    %c0_258 = arith.constant 0 : index
    %c192 = arith.constant 192 : index
    %304 = vector.load %arg3[%c0_257, %c0_258, %c192] : memref<1x8x256xf32, #tpu.memory_space<vmem>>, vector<1x8x16xf32>
    %305 = vector.shape_cast %304 : vector<1x8x16xf32> to vector<8x16xf32>
    %c8_259 = arith.constant 8 : index
    %c235 = arith.constant 235 : index
    %306 = vector.load %arg24[%c8_259, %c235] : memref<16x342xf32, #tpu.memory_space<vmem>>, vector<8x16xf32>
    tpu.vector_store %arg24[%c8_259, %c235], %305 {strides = array<i32>} : memref<16x342xf32, #tpu.memory_space<vmem>>, vector<8x16xf32>,
    %c0_260 = arith.constant 0 : index
    %c0_261 = arith.constant 0 : index
    %c208 = arith.constant 208 : index
    %307 = vector.load %arg3[%c0_260, %c0_261, %c208] : memref<1x8x256xf32, #tpu.memory_space<vmem>>, vector<1x8x16xf32>
    %308 = vector.shape_cast %307 : vector<1x8x16xf32> to vector<8x16xf32>
    %c8_262 = arith.constant 8 : index
    %c253 = arith.constant 253 : index
    %309 = vector.load %arg24[%c8_262, %c253] : memref<16x342xf32, #tpu.memory_space<vmem>>, vector<8x16xf32>
    tpu.vector_store %arg24[%c8_262, %c253], %308 {strides = array<i32>} : memref<16x342xf32, #tpu.memory_space<vmem>>, vector<8x16xf32>,
    %c0_263 = arith.constant 0 : index
    %c0_264 = arith.constant 0 : index
    %c224 = arith.constant 224 : index
    %310 = vector.load %arg3[%c0_263, %c0_264, %c224] : memref<1x8x256xf32, #tpu.memory_space<vmem>>, vector<1x8x16xf32>
    %311 = vector.shape_cast %310 : vector<1x8x16xf32> to vector<8x16xf32>
    %c8_265 = arith.constant 8 : index
    %c271 = arith.constant 271 : index
    %312 = vector.load %arg24[%c8_265, %c271] : memref<16x342xf32, #tpu.memory_space<vmem>>, vector<8x16xf32>
    tpu.vector_store %arg24[%c8_265, %c271], %311 {strides = array<i32>} : memref<16x342xf32, #tpu.memory_space<vmem>>, vector<8x16xf32>,
    %c0_266 = arith.constant 0 : index
    %c0_267 = arith.constant 0 : index
    %c240 = arith.constant 240 : index
    %313 = vector.load %arg3[%c0_266, %c0_267, %c240] : memref<1x8x256xf32, #tpu.memory_space<vmem>>, vector<1x8x16xf32>
    %314 = vector.shape_cast %313 : vector<1x8x16xf32> to vector<8x16xf32>
    %c8_268 = arith.constant 8 : index
    %c289 = arith.constant 289 : index
    %315 = vector.load %arg24[%c8_268, %c289] : memref<16x342xf32, #tpu.memory_space<vmem>>, vector<8x16xf32>
    tpu.vector_store %arg24[%c8_268, %c289], %314 {strides = array<i32>} : memref<16x342xf32, #tpu.memory_space<vmem>>, vector<8x16xf32>,
    %c0_269 = arith.constant 0 : index
    %c0_270 = arith.constant 0 : index
    %316 = vector.load %arg17[%c0_269, %c0_270] : memref<16x32xf32, #tpu.memory_space<vmem>>, vector<16x32xf32>
    %cst_271 = arith.constant dense<0.000000e+00> : vector<16x1xf32>
    %317 = tpu.matmul %316, %1, %cst_271 {dimension_numbers = #tpu.dot_dimension_numbers<[1], [0], [0], [1], [0, 0, 1, 1], [], []>} : vector<16x32xf32>, vector<32x1xf32>, vector<16x1xf32> -> vector<16x1xf32>
    %c0_272 = arith.constant 0 : index
    %c1_273 = arith.constant 1 : index
    %318 = vector.load %arg18[%c0_272, %c1_273] : memref<32x5xf32, #tpu.memory_space<vmem>>, vector<16x1xf32>
    %319 = arith.addf %317, %318 : vector<16x1xf32>
    %c0_274 = arith.constant 0 : index
    %c0_275 = arith.constant 0 : index
    %320 = vector.load %arg20[%c0_274, %c0_275] : memref<1x288xf32, #tpu.memory_space<vmem>>, vector<1x288xf32>
    %321 = vector.extract_strided_slice %319 {offsets = [0, 0], sizes = [8, 1], strides = [1, 1]} : vector<16x1xf32> to vector<8x1xf32>
    %c0_276 = arith.constant 0 : index
    %c2_277 = arith.constant 2 : index
    %322 = vector.load %arg18[%c0_276, %c2_277] : memref<32x5xf32, #tpu.memory_space<vmem>>, vector<8x1xf32>
    %c0_278 = arith.constant 0 : index
    %c3_279 = arith.constant 3 : index
    %323 = vector.load %arg18[%c0_278, %c3_279] : memref<32x5xf32, #tpu.memory_space<vmem>>, vector<8x1xf32>
    %c0_280 = arith.constant 0 : index
    %c0_281 = arith.constant 0 : index
    %c0_282 = arith.constant 0 : index
    %324 = vector.load %arg15[%c0_280, %c0_281, %c0_282] : memref<9x8x16xf32, #tpu.memory_space<vmem>>, vector<1x8x16xf32>
    %325 = vector.shape_cast %324 : vector<1x8x16xf32> to vector<8x16xf32>
    %c0_283 = arith.constant 0 : index
    %c0_284 = arith.constant 0 : index
    %326 = vector.load %arg24[%c0_283, %c0_284] : memref<16x342xf32, #tpu.memory_space<vmem>>, vector<16x288xf32>
    %cst_285 = arith.constant dense<0.000000e+00> : vector<8x288xf32>
    %327 = tpu.matmul %325, %326, %cst_285 {dimension_numbers = #tpu.dot_dimension_numbers<[1], [0], [0], [1], [0, 0, 1, 1], [], []>} : vector<8x16xf32>, vector<16x288xf32>, vector<8x288xf32> -> vector<8x288xf32>
    %c1_286 = arith.constant 1 : index
    %c0_287 = arith.constant 0 : index
    %c0_288 = arith.constant 0 : index
    %328 = vector.load %arg15[%c1_286, %c0_287, %c0_288] : memref<9x8x16xf32, #tpu.memory_space<vmem>>, vector<1x8x16xf32>
    %329 = vector.shape_cast %328 : vector<1x8x16xf32> to vector<8x16xf32>
    %c0_289 = arith.constant 0 : index
    %c1_290 = arith.constant 1 : index
    %330 = vector.load %arg24[%c0_289, %c1_290] : memref<16x342xf32, #tpu.memory_space<vmem>>, vector<16x288xf32>
    %cst_291 = arith.constant dense<0.000000e+00> : vector<8x288xf32>
    %331 = tpu.matmul %329, %330, %cst_291 {dimension_numbers = #tpu.dot_dimension_numbers<[1], [0], [0], [1], [0, 0, 1, 1], [], []>} : vector<8x16xf32>, vector<16x288xf32>, vector<8x288xf32> -> vector<8x288xf32>
    %332 = arith.addf %327, %331 : vector<8x288xf32>
    %c2_292 = arith.constant 2 : index
    %c0_293 = arith.constant 0 : index
    %c0_294 = arith.constant 0 : index
    %333 = vector.load %arg15[%c2_292, %c0_293, %c0_294] : memref<9x8x16xf32, #tpu.memory_space<vmem>>, vector<1x8x16xf32>
    %334 = vector.shape_cast %333 : vector<1x8x16xf32> to vector<8x16xf32>
    %c0_295 = arith.constant 0 : index
    %c2_296 = arith.constant 2 : index
    %335 = vector.load %arg24[%c0_295, %c2_296] : memref<16x342xf32, #tpu.memory_space<vmem>>, vector<16x288xf32>
    %cst_297 = arith.constant dense<0.000000e+00> : vector<8x288xf32>
    %336 = tpu.matmul %334, %335, %cst_297 {dimension_numbers = #tpu.dot_dimension_numbers<[1], [0], [0], [1], [0, 0, 1, 1], [], []>} : vector<8x16xf32>, vector<16x288xf32>, vector<8x288xf32> -> vector<8x288xf32>
    %337 = arith.addf %332, %336 : vector<8x288xf32>
    %c3_298 = arith.constant 3 : index
    %c0_299 = arith.constant 0 : index
    %c0_300 = arith.constant 0 : index
    %338 = vector.load %arg15[%c3_298, %c0_299, %c0_300] : memref<9x8x16xf32, #tpu.memory_space<vmem>>, vector<1x8x16xf32>
    %339 = vector.shape_cast %338 : vector<1x8x16xf32> to vector<8x16xf32>
    %c0_301 = arith.constant 0 : index
    %c18 = arith.constant 18 : index
    %340 = vector.load %arg24[%c0_301, %c18] : memref<16x342xf32, #tpu.memory_space<vmem>>, vector<16x288xf32>
    %cst_302 = arith.constant dense<0.000000e+00> : vector<8x288xf32>
    %341 = tpu.matmul %339, %340, %cst_302 {dimension_numbers = #tpu.dot_dimension_numbers<[1], [0], [0], [1], [0, 0, 1, 1], [], []>} : vector<8x16xf32>, vector<16x288xf32>, vector<8x288xf32> -> vector<8x288xf32>
    %342 = arith.addf %337, %341 : vector<8x288xf32>
    %c4_303 = arith.constant 4 : index
    %c0_304 = arith.constant 0 : index
    %c0_305 = arith.constant 0 : index
    %343 = vector.load %arg15[%c4_303, %c0_304, %c0_305] : memref<9x8x16xf32, #tpu.memory_space<vmem>>, vector<1x8x16xf32>
    %344 = vector.shape_cast %343 : vector<1x8x16xf32> to vector<8x16xf32>
    %c0_306 = arith.constant 0 : index
    %c19_307 = arith.constant 19 : index
    %345 = vector.load %arg24[%c0_306, %c19_307] : memref<16x342xf32, #tpu.memory_space<vmem>>, vector<16x288xf32>
    %cst_308 = arith.constant dense<0.000000e+00> : vector<8x288xf32>
    %346 = tpu.matmul %344, %345, %cst_308 {dimension_numbers = #tpu.dot_dimension_numbers<[1], [0], [0], [1], [0, 0, 1, 1], [], []>} : vector<8x16xf32>, vector<16x288xf32>, vector<8x288xf32> -> vector<8x288xf32>
    %347 = arith.addf %342, %346 : vector<8x288xf32>
    %c5_309 = arith.constant 5 : index
    %c0_310 = arith.constant 0 : index
    %c0_311 = arith.constant 0 : index
    %348 = vector.load %arg15[%c5_309, %c0_310, %c0_311] : memref<9x8x16xf32, #tpu.memory_space<vmem>>, vector<1x8x16xf32>
    %349 = vector.shape_cast %348 : vector<1x8x16xf32> to vector<8x16xf32>
    %c0_312 = arith.constant 0 : index
    %c20_313 = arith.constant 20 : index
    %350 = vector.load %arg24[%c0_312, %c20_313] : memref<16x342xf32, #tpu.memory_space<vmem>>, vector<16x288xf32>
    %cst_314 = arith.constant dense<0.000000e+00> : vector<8x288xf32>
    %351 = tpu.matmul %349, %350, %cst_314 {dimension_numbers = #tpu.dot_dimension_numbers<[1], [0], [0], [1], [0, 0, 1, 1], [], []>} : vector<8x16xf32>, vector<16x288xf32>, vector<8x288xf32> -> vector<8x288xf32>
    %352 = arith.addf %347, %351 : vector<8x288xf32>
    %c6_315 = arith.constant 6 : index
    %c0_316 = arith.constant 0 : index
    %c0_317 = arith.constant 0 : index
    %353 = vector.load %arg15[%c6_315, %c0_316, %c0_317] : memref<9x8x16xf32, #tpu.memory_space<vmem>>, vector<1x8x16xf32>
    %354 = vector.shape_cast %353 : vector<1x8x16xf32> to vector<8x16xf32>
    %c0_318 = arith.constant 0 : index
    %c36 = arith.constant 36 : index
    %355 = vector.load %arg24[%c0_318, %c36] : memref<16x342xf32, #tpu.memory_space<vmem>>, vector<16x288xf32>
    %cst_319 = arith.constant dense<0.000000e+00> : vector<8x288xf32>
    %356 = tpu.matmul %354, %355, %cst_319 {dimension_numbers = #tpu.dot_dimension_numbers<[1], [0], [0], [1], [0, 0, 1, 1], [], []>} : vector<8x16xf32>, vector<16x288xf32>, vector<8x288xf32> -> vector<8x288xf32>
    %357 = arith.addf %352, %356 : vector<8x288xf32>
    %c7_320 = arith.constant 7 : index
    %c0_321 = arith.constant 0 : index
    %c0_322 = arith.constant 0 : index
    %358 = vector.load %arg15[%c7_320, %c0_321, %c0_322] : memref<9x8x16xf32, #tpu.memory_space<vmem>>, vector<1x8x16xf32>
    %359 = vector.shape_cast %358 : vector<1x8x16xf32> to vector<8x16xf32>
    %c0_323 = arith.constant 0 : index
    %c37_324 = arith.constant 37 : index
    %360 = vector.load %arg24[%c0_323, %c37_324] : memref<16x342xf32, #tpu.memory_space<vmem>>, vector<16x288xf32>
    %cst_325 = arith.constant dense<0.000000e+00> : vector<8x288xf32>
    %361 = tpu.matmul %359, %360, %cst_325 {dimension_numbers = #tpu.dot_dimension_numbers<[1], [0], [0], [1], [0, 0, 1, 1], [], []>} : vector<8x16xf32>, vector<16x288xf32>, vector<8x288xf32> -> vector<8x288xf32>
    %362 = arith.addf %357, %361 : vector<8x288xf32>
    %c8_326 = arith.constant 8 : index
    %c0_327 = arith.constant 0 : index
    %c0_328 = arith.constant 0 : index
    %363 = vector.load %arg15[%c8_326, %c0_327, %c0_328] : memref<9x8x16xf32, #tpu.memory_space<vmem>>, vector<1x8x16xf32>
    %364 = vector.shape_cast %363 : vector<1x8x16xf32> to vector<8x16xf32>
    %c0_329 = arith.constant 0 : index
    %c38 = arith.constant 38 : index
    %365 = vector.load %arg24[%c0_329, %c38] : memref<16x342xf32, #tpu.memory_space<vmem>>, vector<16x288xf32>
    %cst_330 = arith.constant dense<0.000000e+00> : vector<8x288xf32>
    %366 = tpu.matmul %364, %365, %cst_330 {dimension_numbers = #tpu.dot_dimension_numbers<[1], [0], [0], [1], [0, 0, 1, 1], [], []>} : vector<8x16xf32>, vector<16x288xf32>, vector<8x288xf32> -> vector<8x288xf32>
    %367 = arith.addf %362, %366 : vector<8x288xf32>
    %368 = vector.broadcast %321 : vector<8x1xf32> to vector<8x288xf32>
    %369 = arith.addf %367, %368 : vector<8x288xf32>
    %370 = vector.broadcast %320 : vector<1x288xf32> to vector<8x288xf32>
    %371 = arith.mulf %369, %370 : vector<8x288xf32>
    %cst_331 = arith.constant dense<0.000000e+00> : vector<8xf32>
    %372 = vector.multi_reduction <add>, %371, %cst_331 [1] : vector<8x288xf32> to vector<8xf32>
    %373 = vector.shape_cast %372 : vector<8xf32> to vector<8x1xf32>
    %cst_332 = arith.constant 3.906250e-03 : f32
    %374 = vector.broadcast %cst_332 : f32 to vector<8x1xf32>
    %375 = arith.mulf %373, %374 : vector<8x1xf32>
    %376 = vector.broadcast %375 : vector<8x1xf32> to vector<8x288xf32>
    %377 = arith.subf %369, %376 : vector<8x288xf32>
    %378 = vector.broadcast %320 : vector<1x288xf32> to vector<8x288xf32>
    %379 = arith.mulf %377, %378 : vector<8x288xf32>
    %380 = arith.mulf %379, %379 : vector<8x288xf32>
    %cst_333 = arith.constant dense<0.000000e+00> : vector<8xf32>
    %381 = vector.multi_reduction <add>, %380, %cst_333 [1] : vector<8x288xf32> to vector<8xf32>
    %382 = vector.shape_cast %381 : vector<8xf32> to vector<8x1xf32>
    %cst_334 = arith.constant 3.906250e-03 : f32
    %383 = vector.broadcast %cst_334 : f32 to vector<8x1xf32>
    %384 = arith.mulf %382, %383 : vector<8x1xf32>
    %385 = vector.broadcast %375 : vector<8x1xf32> to vector<8x288xf32>
    %386 = arith.subf %369, %385 : vector<8x288xf32>
    %cst_335 = arith.constant 9.99999974E-6 : f32
    %387 = vector.broadcast %cst_335 : f32 to vector<8x1xf32>
    %388 = arith.addf %384, %387 : vector<8x1xf32>
    %389 = math.rsqrt %388 : vector<8x1xf32>
    %390 = vector.broadcast %389 : vector<8x1xf32> to vector<8x288xf32>
    %391 = arith.mulf %386, %390 : vector<8x288xf32>
    %392 = vector.broadcast %322 : vector<8x1xf32> to vector<8x288xf32>
    %393 = arith.mulf %391, %392 : vector<8x288xf32>
    %394 = vector.broadcast %323 : vector<8x1xf32> to vector<8x288xf32>
    %395 = arith.addf %393, %394 : vector<8x288xf32>
    %cst_336 = arith.constant 0.000000e+00 : f32
    %396 = vector.broadcast %cst_336 : f32 to vector<8x288xf32>
    %397 = arith.cmpf oge, %395, %396 : vector<8x288xf32>
    %cst_337 = arith.constant 0.00999999977 : f32
    %398 = vector.broadcast %cst_337 : f32 to vector<8x288xf32>
    %399 = arith.mulf %398, %395 : vector<8x288xf32>
    %400 = arith.select %397, %395, %399 : vector<8x288xi1>, vector<8x288xf32>
    %401 = vector.broadcast %320 : vector<1x288xf32> to vector<8x288xf32>
    %402 = arith.mulf %400, %401 : vector<8x288xf32>
    %c0_338 = arith.constant 0 : index
    %c19_339 = arith.constant 19 : index
    %403 = vector.load %arg24[%c0_338, %c19_339] : memref<16x342xf32, #tpu.memory_space<vmem>>, vector<8x288xf32>
    tpu.vector_store %arg24[%c0_338, %c19_339], %402 {strides = array<i32>} : memref<16x342xf32, #tpu.memory_space<vmem>>, vector<8x288xf32>,
    %404 = vector.extract_strided_slice %319 {offsets = [8, 0], sizes = [8, 1], strides = [1, 1]} : vector<16x1xf32> to vector<8x1xf32>
    %c8_340 = arith.constant 8 : index
    %c2_341 = arith.constant 2 : index
    %405 = vector.load %arg18[%c8_340, %c2_341] : memref<32x5xf32, #tpu.memory_space<vmem>>, vector<8x1xf32>
    %c8_342 = arith.constant 8 : index
    %c3_343 = arith.constant 3 : index
    %406 = vector.load %arg18[%c8_342, %c3_343] : memref<32x5xf32, #tpu.memory_space<vmem>>, vector<8x1xf32>
    %c0_344 = arith.constant 0 : index
    %c0_345 = arith.constant 0 : index
    %c0_346 = arith.constant 0 : index
    %407 = vector.load %arg16[%c0_344, %c0_345, %c0_346] : memref<9x8x8xf32, #tpu.memory_space<vmem>>, vector<1x8x8xf32>
    %408 = vector.shape_cast %407 : vector<1x8x8xf32> to vector<8x8xf32>
    %c0_347 = arith.constant 0 : index
    %c0_348 = arith.constant 0 : index
    %409 = vector.load %arg24[%c0_347, %c0_348] : memref<16x342xf32, #tpu.memory_space<vmem>>, vector<8x288xf32>
    %cst_349 = arith.constant dense<0.000000e+00> : vector<8x288xf32>
    %410 = tpu.matmul %408, %409, %cst_349 {dimension_numbers = #tpu.dot_dimension_numbers<[1], [0], [0], [1], [0, 0, 1, 1], [], []>} : vector<8x8xf32>, vector<8x288xf32>, vector<8x288xf32> -> vector<8x288xf32>
    %c1_350 = arith.constant 1 : index
    %c0_351 = arith.constant 0 : index
    %c0_352 = arith.constant 0 : index
    %411 = vector.load %arg16[%c1_350, %c0_351, %c0_352] : memref<9x8x8xf32, #tpu.memory_space<vmem>>, vector<1x8x8xf32>
    %412 = vector.shape_cast %411 : vector<1x8x8xf32> to vector<8x8xf32>
    %c0_353 = arith.constant 0 : index
    %c1_354 = arith.constant 1 : index
    %413 = vector.load %arg24[%c0_353, %c1_354] : memref<16x342xf32, #tpu.memory_space<vmem>>, vector<8x288xf32>
    %cst_355 = arith.constant dense<0.000000e+00> : vector<8x288xf32>
    %414 = tpu.matmul %412, %413, %cst_355 {dimension_numbers = #tpu.dot_dimension_numbers<[1], [0], [0], [1], [0, 0, 1, 1], [], []>} : vector<8x8xf32>, vector<8x288xf32>, vector<8x288xf32> -> vector<8x288xf32>
    %415 = arith.addf %410, %414 : vector<8x288xf32>
    %c2_356 = arith.constant 2 : index
    %c0_357 = arith.constant 0 : index
    %c0_358 = arith.constant 0 : index
    %416 = vector.load %arg16[%c2_356, %c0_357, %c0_358] : memref<9x8x8xf32, #tpu.memory_space<vmem>>, vector<1x8x8xf32>
    %417 = vector.shape_cast %416 : vector<1x8x8xf32> to vector<8x8xf32>
    %c0_359 = arith.constant 0 : index
    %c2_360 = arith.constant 2 : index
    %418 = vector.load %arg24[%c0_359, %c2_360] : memref<16x342xf32, #tpu.memory_space<vmem>>, vector<8x288xf32>
    %cst_361 = arith.constant dense<0.000000e+00> : vector<8x288xf32>
    %419 = tpu.matmul %417, %418, %cst_361 {dimension_numbers = #tpu.dot_dimension_numbers<[1], [0], [0], [1], [0, 0, 1, 1], [], []>} : vector<8x8xf32>, vector<8x288xf32>, vector<8x288xf32> -> vector<8x288xf32>
    %420 = arith.addf %415, %419 : vector<8x288xf32>
    %c3_362 = arith.constant 3 : index
    %c0_363 = arith.constant 0 : index
    %c0_364 = arith.constant 0 : index
    %421 = vector.load %arg16[%c3_362, %c0_363, %c0_364] : memref<9x8x8xf32, #tpu.memory_space<vmem>>, vector<1x8x8xf32>
    %422 = vector.shape_cast %421 : vector<1x8x8xf32> to vector<8x8xf32>
    %c0_365 = arith.constant 0 : index
    %c18_366 = arith.constant 18 : index
    %423 = vector.load %arg24[%c0_365, %c18_366] : memref<16x342xf32, #tpu.memory_space<vmem>>, vector<8x288xf32>
    %cst_367 = arith.constant dense<0.000000e+00> : vector<8x288xf32>
    %424 = tpu.matmul %422, %423, %cst_367 {dimension_numbers = #tpu.dot_dimension_numbers<[1], [0], [0], [1], [0, 0, 1, 1], [], []>} : vector<8x8xf32>, vector<8x288xf32>, vector<8x288xf32> -> vector<8x288xf32>
    %425 = arith.addf %420, %424 : vector<8x288xf32>
    %c4_368 = arith.constant 4 : index
    %c0_369 = arith.constant 0 : index
    %c0_370 = arith.constant 0 : index
    %426 = vector.load %arg16[%c4_368, %c0_369, %c0_370] : memref<9x8x8xf32, #tpu.memory_space<vmem>>, vector<1x8x8xf32>
    %427 = vector.shape_cast %426 : vector<1x8x8xf32> to vector<8x8xf32>
    %c0_371 = arith.constant 0 : index
    %c19_372 = arith.constant 19 : index
    %428 = vector.load %arg24[%c0_371, %c19_372] : memref<16x342xf32, #tpu.memory_space<vmem>>, vector<8x288xf32>
    %cst_373 = arith.constant dense<0.000000e+00> : vector<8x288xf32>
    %429 = tpu.matmul %427, %428, %cst_373 {dimension_numbers = #tpu.dot_dimension_numbers<[1], [0], [0], [1], [0, 0, 1, 1], [], []>} : vector<8x8xf32>, vector<8x288xf32>, vector<8x288xf32> -> vector<8x288xf32>
    %430 = arith.addf %425, %429 : vector<8x288xf32>
    %c5_374 = arith.constant 5 : index
    %c0_375 = arith.constant 0 : index
    %c0_376 = arith.constant 0 : index
    %431 = vector.load %arg16[%c5_374, %c0_375, %c0_376] : memref<9x8x8xf32, #tpu.memory_space<vmem>>, vector<1x8x8xf32>
    %432 = vector.shape_cast %431 : vector<1x8x8xf32> to vector<8x8xf32>
    %c0_377 = arith.constant 0 : index
    %c20_378 = arith.constant 20 : index
    %433 = vector.load %arg24[%c0_377, %c20_378] : memref<16x342xf32, #tpu.memory_space<vmem>>, vector<8x288xf32>
    %cst_379 = arith.constant dense<0.000000e+00> : vector<8x288xf32>
    %434 = tpu.matmul %432, %433, %cst_379 {dimension_numbers = #tpu.dot_dimension_numbers<[1], [0], [0], [1], [0, 0, 1, 1], [], []>} : vector<8x8xf32>, vector<8x288xf32>, vector<8x288xf32> -> vector<8x288xf32>
    %435 = arith.addf %430, %434 : vector<8x288xf32>
    %c6_380 = arith.constant 6 : index
    %c0_381 = arith.constant 0 : index
    %c0_382 = arith.constant 0 : index
    %436 = vector.load %arg16[%c6_380, %c0_381, %c0_382] : memref<9x8x8xf32, #tpu.memory_space<vmem>>, vector<1x8x8xf32>
    %437 = vector.shape_cast %436 : vector<1x8x8xf32> to vector<8x8xf32>
    %c0_383 = arith.constant 0 : index
    %c36_384 = arith.constant 36 : index
    %438 = vector.load %arg24[%c0_383, %c36_384] : memref<16x342xf32, #tpu.memory_space<vmem>>, vector<8x288xf32>
    %cst_385 = arith.constant dense<0.000000e+00> : vector<8x288xf32>
    %439 = tpu.matmul %437, %438, %cst_385 {dimension_numbers = #tpu.dot_dimension_numbers<[1], [0], [0], [1], [0, 0, 1, 1], [], []>} : vector<8x8xf32>, vector<8x288xf32>, vector<8x288xf32> -> vector<8x288xf32>
    %440 = arith.addf %435, %439 : vector<8x288xf32>
    %c7_386 = arith.constant 7 : index
    %c0_387 = arith.constant 0 : index
    %c0_388 = arith.constant 0 : index
    %441 = vector.load %arg16[%c7_386, %c0_387, %c0_388] : memref<9x8x8xf32, #tpu.memory_space<vmem>>, vector<1x8x8xf32>
    %442 = vector.shape_cast %441 : vector<1x8x8xf32> to vector<8x8xf32>
    %c0_389 = arith.constant 0 : index
    %c37_390 = arith.constant 37 : index
    %443 = vector.load %arg24[%c0_389, %c37_390] : memref<16x342xf32, #tpu.memory_space<vmem>>, vector<8x288xf32>
    %cst_391 = arith.constant dense<0.000000e+00> : vector<8x288xf32>
    %444 = tpu.matmul %442, %443, %cst_391 {dimension_numbers = #tpu.dot_dimension_numbers<[1], [0], [0], [1], [0, 0, 1, 1], [], []>} : vector<8x8xf32>, vector<8x288xf32>, vector<8x288xf32> -> vector<8x288xf32>
    %445 = arith.addf %440, %444 : vector<8x288xf32>
    %c8_392 = arith.constant 8 : index
    %c0_393 = arith.constant 0 : index
    %c0_394 = arith.constant 0 : index
    %446 = vector.load %arg16[%c8_392, %c0_393, %c0_394] : memref<9x8x8xf32, #tpu.memory_space<vmem>>, vector<1x8x8xf32>
    %447 = vector.shape_cast %446 : vector<1x8x8xf32> to vector<8x8xf32>
    %c0_395 = arith.constant 0 : index
    %c38_396 = arith.constant 38 : index
    %448 = vector.load %arg24[%c0_395, %c38_396] : memref<16x342xf32, #tpu.memory_space<vmem>>, vector<8x288xf32>
    %cst_397 = arith.constant dense<0.000000e+00> : vector<8x288xf32>
    %449 = tpu.matmul %447, %448, %cst_397 {dimension_numbers = #tpu.dot_dimension_numbers<[1], [0], [0], [1], [0, 0, 1, 1], [], []>} : vector<8x8xf32>, vector<8x288xf32>, vector<8x288xf32> -> vector<8x288xf32>
    %450 = arith.addf %445, %449 : vector<8x288xf32>
    %451 = vector.broadcast %404 : vector<8x1xf32> to vector<8x288xf32>
    %452 = arith.addf %450, %451 : vector<8x288xf32>
    %453 = vector.broadcast %320 : vector<1x288xf32> to vector<8x288xf32>
    %454 = arith.mulf %452, %453 : vector<8x288xf32>
    %cst_398 = arith.constant dense<0.000000e+00> : vector<8xf32>
    %455 = vector.multi_reduction <add>, %454, %cst_398 [1] : vector<8x288xf32> to vector<8xf32>
    %456 = vector.shape_cast %455 : vector<8xf32> to vector<8x1xf32>
    %cst_399 = arith.constant 3.906250e-03 : f32
    %457 = vector.broadcast %cst_399 : f32 to vector<8x1xf32>
    %458 = arith.mulf %456, %457 : vector<8x1xf32>
    %459 = vector.broadcast %458 : vector<8x1xf32> to vector<8x288xf32>
    %460 = arith.subf %452, %459 : vector<8x288xf32>
    %461 = vector.broadcast %320 : vector<1x288xf32> to vector<8x288xf32>
    %462 = arith.mulf %460, %461 : vector<8x288xf32>
    %463 = arith.mulf %462, %462 : vector<8x288xf32>
    %cst_400 = arith.constant dense<0.000000e+00> : vector<8xf32>
    %464 = vector.multi_reduction <add>, %463, %cst_400 [1] : vector<8x288xf32> to vector<8xf32>
    %465 = vector.shape_cast %464 : vector<8xf32> to vector<8x1xf32>
    %cst_401 = arith.constant 3.906250e-03 : f32
    %466 = vector.broadcast %cst_401 : f32 to vector<8x1xf32>
    %467 = arith.mulf %465, %466 : vector<8x1xf32>
    %468 = vector.broadcast %458 : vector<8x1xf32> to vector<8x288xf32>
    %469 = arith.subf %452, %468 : vector<8x288xf32>
    %cst_402 = arith.constant 9.99999974E-6 : f32
    %470 = vector.broadcast %cst_402 : f32 to vector<8x1xf32>
    %471 = arith.addf %467, %470 : vector<8x1xf32>
    %472 = math.rsqrt %471 : vector<8x1xf32>
    %473 = vector.broadcast %472 : vector<8x1xf32> to vector<8x288xf32>
    %474 = arith.mulf %469, %473 : vector<8x288xf32>
    %475 = vector.broadcast %405 : vector<8x1xf32> to vector<8x288xf32>
    %476 = arith.mulf %474, %475 : vector<8x288xf32>
    %477 = vector.broadcast %406 : vector<8x1xf32> to vector<8x288xf32>
    %478 = arith.addf %476, %477 : vector<8x288xf32>
    %cst_403 = arith.constant 0.000000e+00 : f32
    %479 = vector.broadcast %cst_403 : f32 to vector<8x288xf32>
    %480 = arith.cmpf oge, %478, %479 : vector<8x288xf32>
    %cst_404 = arith.constant 0.00999999977 : f32
    %481 = vector.broadcast %cst_404 : f32 to vector<8x288xf32>
    %482 = arith.mulf %481, %478 : vector<8x288xf32>
    %483 = arith.select %480, %478, %482 : vector<8x288xi1>, vector<8x288xf32>
    %484 = vector.broadcast %320 : vector<1x288xf32> to vector<8x288xf32>
    %485 = arith.mulf %483, %484 : vector<8x288xf32>
    %c0_405 = arith.constant 0 : index
    %c0_406 = arith.constant 0 : index
    %486 = vector.load %arg19[%c0_405, %c0_406] : memref<8x8xf32, #tpu.memory_space<vmem>>, vector<8x8xf32>
    %cst_407 = arith.constant dense<0.000000e+00> : vector<8x288xf32>
    %487 = tpu.matmul %486, %485, %cst_407 {dimension_numbers = #tpu.dot_dimension_numbers<[1], [0], [0], [1], [0, 0, 1, 1], [], []>} : vector<8x8xf32>, vector<8x288xf32>, vector<8x288xf32> -> vector<8x288xf32>
    %c0_408 = arith.constant 0 : index
    %c4_409 = arith.constant 4 : index
    %488 = vector.load %arg18[%c0_408, %c4_409] : memref<32x5xf32, #tpu.memory_space<vmem>>, vector<8x1xf32>
    %489 = vector.broadcast %488 : vector<8x1xf32> to vector<8x288xf32>
    %490 = arith.addf %487, %489 : vector<8x288xf32>
    %c0_410 = arith.constant 0 : index
    %c0_411 = arith.constant 0 : index
    %c0_412 = arith.constant 0 : index
    %491 = vector.load %arg22[%c0_410, %c0_411, %c0_412] : memref<1x8x288xf32, #tpu.memory_space<vmem>>, vector<1x8x288xf32>
    %492 = vector.shape_cast %491 : vector<1x8x288xf32> to vector<8x288xf32>
    %493 = vector.shape_cast %490 : vector<8x288xf32> to vector<1x8x288xf32>
    tpu.vector_store %arg22[%c0_410, %c0_411, %c0_412], %493 {strides = array<i32>} : memref<1x8x288xf32, #tpu.memory_space<vmem>>, vector<1x8x288xf32>,
    return
  }
  func.func @transform_0(%arg0: i32) -> (i32, i32, i32) {
    %c0_i32 = arith.constant 0 : i32
    %c0_i32_0 = arith.constant 0 : i32
    %c0_i32_1 = arith.constant 0 : i32
    return %arg0, %c0_i32, %c0_i32_0 : i32, i32, i32
  }
  func.func @transform_1(%arg0: i32) -> (i32, i32, i32) {
    %c0_i32 = arith.constant 0 : i32
    %c0_i32_0 = arith.constant 0 : i32
    %c0_i32_1 = arith.constant 0 : i32
    return %arg0, %c0_i32, %c0_i32_0 : i32, i32, i32
  }
  func.func @transform_2(%arg0: i32) -> (i32, i32, i32) {
    %c0_i32 = arith.constant 0 : i32
    %c0_i32_0 = arith.constant 0 : i32
    %c0_i32_1 = arith.constant 0 : i32
    return %arg0, %c0_i32, %c0_i32_0 : i32, i32, i32
  }
  func.func @transform_3(%arg0: i32) -> (i32, i32, i32) {
    %c0_i32 = arith.constant 0 : i32
    %c0_i32_0 = arith.constant 0 : i32
    %c0_i32_1 = arith.constant 0 : i32
    return %arg0, %c0_i32, %c0_i32_0 : i32, i32, i32
  }
  func.func @transform_4(%arg0: i32) -> (i32, i32) {
    %c0_i32 = arith.constant 0 : i32
    %c0_i32_0 = arith.constant 0 : i32
    %c0_i32_1 = arith.constant 0 : i32
    return %c0_i32, %c0_i32_0 : i32, i32
  }
  func.func @transform_5(%arg0: i32) -> (i32, i32, i32) {
    %c0_i32 = arith.constant 0 : i32
    %c0_i32_0 = arith.constant 0 : i32
    %c0_i32_1 = arith.constant 0 : i32
    %c0_i32_2 = arith.constant 0 : i32
    return %c0_i32, %c0_i32_0, %c0_i32_1 : i32, i32, i32
  }
  func.func @transform_6(%arg0: i32) -> (i32, i32, i32) {
    %c0_i32 = arith.constant 0 : i32
    %c0_i32_0 = arith.constant 0 : i32
    %c0_i32_1 = arith.constant 0 : i32
    %c0_i32_2 = arith.constant 0 : i32
    return %c0_i32, %c0_i32_0, %c0_i32_1 : i32, i32, i32
  }
  func.func @transform_7(%arg0: i32) -> (i32, i32, i32) {
    %c0_i32 = arith.constant 0 : i32
    %c0_i32_0 = arith.constant 0 : i32
    %c0_i32_1 = arith.constant 0 : i32
    %c0_i32_2 = arith.constant 0 : i32
    return %c0_i32, %c0_i32_0, %c0_i32_1 : i32, i32, i32
  }
  func.func @transform_8(%arg0: i32) -> (i32, i32) {
    %c0_i32 = arith.constant 0 : i32
    %c0_i32_0 = arith.constant 0 : i32
    %c0_i32_1 = arith.constant 0 : i32
    return %c0_i32, %c0_i32_0 : i32, i32
  }
  func.func @transform_9(%arg0: i32) -> (i32, i32) {
    %c0_i32 = arith.constant 0 : i32
    %c0_i32_0 = arith.constant 0 : i32
    %c0_i32_1 = arith.constant 0 : i32
    return %c0_i32, %c0_i32_0 : i32, i32
  }
  func.func @transform_10(%arg0: i32) -> (i32, i32) {
    %c0_i32 = arith.constant 0 : i32
    %c0_i32_0 = arith.constant 0 : i32
    %c0_i32_1 = arith.constant 0 : i32
    return %c0_i32, %c0_i32_0 : i32, i32
  }
  func.func @transform_11(%arg0: i32) -> (i32, i32) {
    %c0_i32 = arith.constant 0 : i32
    %c0_i32_0 = arith.constant 0 : i32
    %c0_i32_1 = arith.constant 0 : i32
    return %c0_i32, %c0_i32_0 : i32, i32
  }
  func.func @transform_12(%arg0: i32) -> (i32, i32) {
    %c0_i32 = arith.constant 0 : i32
    %c0_i32_0 = arith.constant 0 : i32
    %c0_i32_1 = arith.constant 0 : i32
    return %c0_i32, %c0_i32_0 : i32, i32
  }
  func.func @transform_13(%arg0: i32) -> (i32, i32, i32) {
    %c0_i32 = arith.constant 0 : i32
    %c0_i32_0 = arith.constant 0 : i32
    %c0_i32_1 = arith.constant 0 : i32
    %c0_i32_2 = arith.constant 0 : i32
    return %c0_i32, %c0_i32_0, %c0_i32_1 : i32, i32, i32
  }
  func.func @transform_14(%arg0: i32) -> (i32, i32, i32) {
    %c0_i32 = arith.constant 0 : i32
    %c0_i32_0 = arith.constant 0 : i32
    %c0_i32_1 = arith.constant 0 : i32
    %c0_i32_2 = arith.constant 0 : i32
    return %c0_i32, %c0_i32_0, %c0_i32_1 : i32, i32, i32
  }
  func.func @transform_15(%arg0: i32) -> (i32, i32, i32) {
    %c0_i32 = arith.constant 0 : i32
    %c0_i32_0 = arith.constant 0 : i32
    %c0_i32_1 = arith.constant 0 : i32
    %c0_i32_2 = arith.constant 0 : i32
    return %c0_i32, %c0_i32_0, %c0_i32_1 : i32, i32, i32
  }
  func.func @transform_16(%arg0: i32) -> (i32, i32) {
    %c0_i32 = arith.constant 0 : i32
    %c0_i32_0 = arith.constant 0 : i32
    %c0_i32_1 = arith.constant 0 : i32
    return %c0_i32, %c0_i32_0 : i32, i32
  }
  func.func @transform_17(%arg0: i32) -> (i32, i32) {
    %c0_i32 = arith.constant 0 : i32
    %c0_i32_0 = arith.constant 0 : i32
    %c0_i32_1 = arith.constant 0 : i32
    return %c0_i32, %c0_i32_0 : i32, i32
  }
  func.func @transform_18(%arg0: i32) -> (i32, i32) {
    %c0_i32 = arith.constant 0 : i32
    %c0_i32_0 = arith.constant 0 : i32
    %c0_i32_1 = arith.constant 0 : i32
    return %c0_i32, %c0_i32_0 : i32, i32
  }
  func.func @transform_19(%arg0: i32) -> (i32, i32) {
    %c0_i32 = arith.constant 0 : i32
    %c0_i32_0 = arith.constant 0 : i32
    %c0_i32_1 = arith.constant 0 : i32
    return %c0_i32, %c0_i32_0 : i32, i32
  }
  func.func @transform_20(%arg0: i32) -> (i32, i32, i32) {
    %c0_i32 = arith.constant 0 : i32
    %c0_i32_0 = arith.constant 0 : i32
    %c0_i32_1 = arith.constant 0 : i32
    return %arg0, %c0_i32, %c0_i32_0 : i32, i32, i32
  }
  func.func @transform_21(%arg0: i32) -> (i32, i32, i32) {
    %c0_i32 = arith.constant 0 : i32
    %c0_i32_0 = arith.constant 0 : i32
    %c0_i32_1 = arith.constant 0 : i32
    return %arg0, %c0_i32, %c0_i32_0 : i32, i32, i32
  }
}

</mosaic_0001>

<llo_original>
// kernel: unet_decoder_forward.1
$region0: #{unet_decoder_forward.1}
  #allocation0 [shape = 'u32[]', space=smem, size = 0x4, offset = 0x4, fixed_abs, tag = 'smem constant byte address 0x4 - core index']
  #allocation1 [shape = 'u32[72,128]{1,0:T(1,128)}', space=vmem, size = 0x9000, scoped, tag = 'internal scratch']
  #allocation2 [shape = 'f32[32,110]{1,0:T(8,128)}', space=vmem, size = 0x4000, scoped, tag = 'scratch operand']
  #allocation3 [shape = 'f32[16,342]{1,0:T(8,128)}', space=vmem, size = 0x6000, scoped, tag = 'scratch operand']
  %s0 = inlined_call_operand.vmem [shape: f32[2,32,16], index: 0, kind: input, shape index: {}]
  %s1 = inlined_call_operand.vmem [shape: f32[2,16,64], index: 1, kind: input, shape index: {}]
  %s2 = inlined_call_operand.vmem [shape: f32[2,8,256], index: 2, kind: input, shape index: {}]
  %s3 = inlined_call_operand.vmem [shape: f32[2,32,1], index: 3, kind: input, shape index: {}]
  %s4 = inlined_call_operand.vmem [shape: f32[64,32], index: 4, kind: input, shape index: {}]
  %s5 = inlined_call_operand.vmem [shape: bf16[4,16,110], index: 5, kind: input, shape index: {}]
  %s6 = inlined_call_operand.vmem [shape: f32[9,16,32], index: 6, kind: input, shape index: {}]
  %s7 = inlined_call_operand.vmem [shape: f32[9,16,16], index: 7, kind: input, shape index: {}]
  %s8 = inlined_call_operand.vmem [shape: f32[32,32], index: 8, kind: input, shape index: {}]
  %s9 = inlined_call_operand.vmem [shape: f32[64,5], index: 9, kind: input, shape index: {}]
  %s10 = inlined_call_operand.vmem [shape: f32[8,16], index: 10, kind: input, shape index: {}]
  %s11 = inlined_call_operand.vmem [shape: f32[1,80], index: 11, kind: input, shape index: {}]
  %s12 = inlined_call_operand.vmem [shape: f32[32,16], index: 12, kind: input, shape index: {}]
  %s13 = inlined_call_operand.hbm [shape: bf16[4,80,342], index: 13, kind: input, shape index: {}]
  %s14 = inlined_call_operand.vmem [shape: f32[9,8,16], index: 14, kind: input, shape index: {}]
  %s15 = inlined_call_operand.vmem [shape: f32[9,8,8], index: 15, kind: input, shape index: {}]
  %s16 = inlined_call_operand.vmem [shape: f32[16,32], index: 16, kind: input, shape index: {}]
  %s17 = inlined_call_operand.vmem [shape: f32[32,5], index: 17, kind: input, shape index: {}]
  %s18 = inlined_call_operand.vmem [shape: f32[8,8], index: 18, kind: input, shape index: {}]
  %s19 = inlined_call_operand.vmem [shape: f32[1,288], index: 19, kind: input, shape index: {}]
  %s20 = inlined_call_operand.vmem [shape: f32[2,8,80], index: 20, kind: output, shape index: {0}]
  %s21 = inlined_call_operand.vmem [shape: f32[2,8,288], index: 21, kind: output, shape index: {1}]
  %22 = xla_tuple %s20, %s21
  %s23 = sld [smem:[#allocation0]]
  $region125: #{unet_decoder_forward.1} parent=0
    _
  %s25 = ssub.s32 1, %s23
  %s26 = scalar_select 0, %s25, %s23
  $region1: #{unet_decoder_forward.1} parent=0
    #allocation4 [shape = 'u8[245760]{0}', space=vmem, size = 0x3c000, scoped, tag = 'input window, operand 13, single buffered']
    #allocation5 [shape = 's32[2]{0}', space=sflag, size = 0x8, scoped, tag = 'scoped memory for unet_decoder_forward.1']
    %27 = vsyncpa [#allocation5], 0
    loop: start=0, step=1, limit=4
    $region2: #{unet_decoder_forward.1} parent=1 // loop_pre_header
      _
    $region3: #{unet_decoder_forward.1} parent=1 // loop_header
      %s29 = sphi 0, %s33
      %p30 = scmp.ge.s32.totalorder %s29, 4
      %s39 = sphi 0, %s41
      %s42 = sphi 0, %s39
      %s43 = sphi 0, %s42
      %s59 = sphi 0, %s43
      %s65 = sphi 0, %s67
      %s68 = sphi 0, %s65
      %s69 = sphi 0, %s68
      %s85 = sphi 0, %s69
      %s91 = sphi 0, %s93
      %s94 = sphi 0, %s91
      %s95 = sphi 0, %s94
      %s111 = sphi 0, %s95
      %s117 = sphi 0, %s119
      %s120 = sphi 0, %s117
      %s121 = sphi 0, %s120
      %s137 = sphi 0, %s121
      %s141 = sphi 0, %s141
      %s143 = sphi 0, %s141
      %s144 = sphi 0, %s143
      %s158 = sphi 0, %s144
      %s162 = sphi 0, %s162
      %s164 = sphi 0, %s162
      %s165 = sphi 0, %s164
      %s179 = sphi 0, %s165
      %s183 = sphi 0, %s183
      %s185 = sphi 0, %s183
      %s186 = sphi 0, %s185
      %s200 = sphi 0, %s186
      %s204 = sphi 0, %s204
      %s206 = sphi 0, %s204
      %s207 = sphi 0, %s206
      %s221 = sphi 0, %s207
      %s225 = sphi 0, %s225
      %s227 = sphi 0, %s225
      %s228 = sphi 0, %s227
      %s242 = sphi 0, %s228
      %s246 = sphi 0, %s246
      %s248 = sphi 0, %s246
      %s249 = sphi 0, %s248
      %s263 = sphi 0, %s249
      %s267 = sphi 0, %s267
      %s269 = sphi 0, %s267
      %s270 = sphi 0, %s269
      %s284 = sphi 0, %s270
      %s288 = sphi 0, %s288
      %s290 = sphi 0, %s288
      %s291 = sphi 0, %s290
      %s305 = sphi 0, %s291
      %s309 = sphi 0, %s309
      %s311 = sphi 0, %s309
      %s312 = sphi 0, %s311
      %s326 = sphi 0, %s312
      %s330 = sphi 0, %s330
      %s332 = sphi 0, %s330
      %s333 = sphi 0, %s332
      %s347 = sphi 0, %s333
      %s351 = sphi 0, %s351
      %s353 = sphi 0, %s351
      %s354 = sphi 0, %s353
      %s368 = sphi 0, %s354
      %s372 = sphi 0, %s372
      %s374 = sphi 0, %s372
      %s375 = sphi 0, %s374
      %s389 = sphi 0, %s375
      %s393 = sphi 0, %s393
      %s395 = sphi 0, %s393
      %s396 = sphi 0, %s395
      %s410 = sphi 0, %s396
      %s414 = sphi 0, %s414
      %s416 = sphi 0, %s414
      %s417 = sphi 0, %s416
      %s431 = sphi 0, %s417
      %s435 = sphi 0, %s435
      %s437 = sphi 0, %s435
      %s438 = sphi 0, %s437
      %s452 = sphi 0, %s438
      %s456 = sphi 0, %s456
      %s458 = sphi 0, %s456
      %s459 = sphi 0, %s458
      %s473 = sphi 0, %s459
      %s479 = sphi 0, %s481
      %s482 = sphi 0, %s479
      %s483 = sphi 0, %s482
      %s499 = sphi 0, %s483
      %s505 = sphi 0, %s507
      %s508 = sphi 0, %s505
      %s509 = sphi 0, %s508
      %s525 = sphi 0, %s509
    $region4: #{unet_decoder_forward.1} parent=1 // loop_header_branch
      %32 = sbr.rel (%p30) target = $region8
    $region5: #{unet_decoder_forward.1} parent=1 // loop_body
      %s34 = ssub.s32 %s29, 1
      %s35 = ssub.s32 %s29, 2
      %s36 = sadd.s32 %s29, 1
      %s37 = ssub.s32 %s29, %s36
      %p38 = scmp.eq.s32.totalorder %s37, 0
      %s40 = sadd.s32 %s39, 1
      %s41 = scalar_select %p38, %s39, %s40
      %p44 = pneg %p38
      %p45 = scmp.eq.s32.totalorder %s29, 1
      %p46 = por %p44, %p45
      %p47 = scmp.ne.s32.totalorder %s39, %s42
      %p48 = scmp.eq.s32.totalorder %s29, 0
      %p49 = por %p47, %p48
      %p50 = scmp.ne.s32.totalorder %s39, %s42
      %p51 = scmp.eq.s32.totalorder %s34, 1
      %p52 = por %p50, %p51
      %p53 = scmp.ne.s32.totalorder %s42, %s43
      %p54 = scmp.eq.s32.totalorder %s34, 0
      %p55 = por %p53, %p54
      %p56 = scmp.ne.s32.totalorder %s42, %s43
      %p57 = scmp.eq.s32.totalorder %s35, 1
      %p58 = por %p56, %p57
      %p60 = scmp.ne.s32.totalorder %s43, %s59
      %p61 = scmp.eq.s32.totalorder %s35, 0
      %p62 = por %p60, %p61
      %s63 = ssub.s32 %s29, %s36
      %p64 = scmp.eq.s32.totalorder %s63, 0
      %s66 = sadd.s32 %s65, 1
      %s67 = scalar_select %p64, %s65, %s66
      %p70 = pneg %p64
      %p71 = scmp.eq.s32.totalorder %s29, 1
      %p72 = por %p70, %p71
      %p73 = scmp.ne.s32.totalorder %s65, %s68
      %p74 = scmp.eq.s32.totalorder %s29, 0
      %p75 = por %p73, %p74
      %p76 = scmp.ne.s32.totalorder %s65, %s68
      %p77 = scmp.eq.s32.totalorder %s34, 1
      %p78 = por %p76, %p77
      %p79 = scmp.ne.s32.totalorder %s68, %s69
      %p80 = scmp.eq.s32.totalorder %s34, 0
      %p81 = por %p79, %p80
      %p82 = scmp.ne.s32.totalorder %s68, %s69
      %p83 = scmp.eq.s32.totalorder %s35, 1
      %p84 = por %p82, %p83
      %p86 = scmp.ne.s32.totalorder %s69, %s85
      %p87 = scmp.eq.s32.totalorder %s35, 0
      %p88 = por %p86, %p87
      %s89 = ssub.s32 %s29, %s36
      %p90 = scmp.eq.s32.totalorder %s89, 0
      %s92 = sadd.s32 %s91, 1
      %s93 = scalar_select %p90, %s91, %s92
      %p96 = pneg %p90
      %p97 = scmp.eq.s32.totalorder %s29, 1
      %p98 = por %p96, %p97
      %p99 = scmp.ne.s32.totalorder %s91, %s94
      %p100 = scmp.eq.s32.totalorder %s29, 0
      %p101 = por %p99, %p100
      %p102 = scmp.ne.s32.totalorder %s91, %s94
      %p103 = scmp.eq.s32.totalorder %s34, 1
      %p104 = por %p102, %p103
      %p105 = scmp.ne.s32.totalorder %s94, %s95
      %p106 = scmp.eq.s32.totalorder %s34, 0
      %p107 = por %p105, %p106
      %p108 = scmp.ne.s32.totalorder %s94, %s95
      %p109 = scmp.eq.s32.totalorder %s35, 1
      %p110 = por %p108, %p109
      %p112 = scmp.ne.s32.totalorder %s95, %s111
      %p113 = scmp.eq.s32.totalorder %s35, 0
      %p114 = por %p112, %p113
      %s115 = ssub.s32 %s29, %s36
      %p116 = scmp.eq.s32.totalorder %s115, 0
      %s118 = sadd.s32 %s117, 1
      %s119 = scalar_select %p116, %s117, %s118
      %p122 = pneg %p116
      %p123 = scmp.eq.s32.totalorder %s29, 1
      %p124 = por %p122, %p123
      %p125 = scmp.ne.s32.totalorder %s117, %s120
      %p126 = scmp.eq.s32.totalorder %s29, 0
      %p127 = por %p125, %p126
      %p128 = scmp.ne.s32.totalorder %s117, %s120
      %p129 = scmp.eq.s32.totalorder %s34, 1
      %p130 = por %p128, %p129
      %p131 = scmp.ne.s32.totalorder %s120, %s121
      %p132 = scmp.eq.s32.totalorder %s34, 0
      %p133 = por %p131, %p132
      %p134 = scmp.ne.s32.totalorder %s120, %s121
      %p135 = scmp.eq.s32.totalorder %s35, 1
      %p136 = por %p134, %p135
      %p138 = scmp.ne.s32.totalorder %s121, %s137
      %p139 = scmp.eq.s32.totalorder %s35, 0
      %p140 = por %p138, %p139
      %s142 = sadd.s32 %s141, 1
      %p145 = scmp.eq.s32.totalorder %s29, 1
      %p146 = scmp.ne.s32.totalorder %s141, %s143
      %p147 = scmp.eq.s32.totalorder %s29, 0
      %p148 = por %p146, %p147
      %p149 = scmp.ne.s32.totalorder %s141, %s143
      %p150 = scmp.eq.s32.totalorder %s34, 1
      %p151 = por %p149, %p150
      %p152 = scmp.ne.s32.totalorder %s143, %s144
      %p153 = scmp.eq.s32.totalorder %s34, 0
      %p154 = por %p152, %p153
      %p155 = scmp.ne.s32.totalorder %s143, %s144
      %p156 = scmp.eq.s32.totalorder %s35, 1
      %p157 = por %p155, %p156
      %p159 = scmp.ne.s32.totalorder %s144, %s158
      %p160 = scmp.eq.s32.totalorder %s35, 0
      %p161 = por %p159, %p160
      %s163 = sadd.s32 %s162, 1
      %p166 = scmp.eq.s32.totalorder %s29, 1
      %p167 = scmp.ne.s32.totalorder %s162, %s164
      %p168 = scmp.eq.s32.totalorder %s29, 0
      %p169 = por %p167, %p168
      %p170 = scmp.ne.s32.totalorder %s162, %s164
      %p171 = scmp.eq.s32.totalorder %s34, 1
      %p172 = por %p170, %p171
      %p173 = scmp.ne.s32.totalorder %s164, %s165
      %p174 = scmp.eq.s32.totalorder %s34, 0
      %p175 = por %p173, %p174
      %p176 = scmp.ne.s32.totalorder %s164, %s165
      %p177 = scmp.eq.s32.totalorder %s35, 1
      %p178 = por %p176, %p177
      %p180 = scmp.ne.s32.totalorder %s165, %s179
      %p181 = scmp.eq.s32.totalorder %s35, 0
      %p182 = por %p180, %p181
      %s184 = sadd.s32 %s183, 1
      %p187 = scmp.eq.s32.totalorder %s29, 1
      %p188 = scmp.ne.s32.totalorder %s183, %s185
      %p189 = scmp.eq.s32.totalorder %s29, 0
      %p190 = por %p188, %p189
      %p191 = scmp.ne.s32.totalorder %s183, %s185
      %p192 = scmp.eq.s32.totalorder %s34, 1
      %p193 = por %p191, %p192
      %p194 = scmp.ne.s32.totalorder %s185, %s186
      %p195 = scmp.eq.s32.totalorder %s34, 0
      %p196 = por %p194, %p195
      %p197 = scmp.ne.s32.totalorder %s185, %s186
      %p198 = scmp.eq.s32.totalorder %s35, 1
      %p199 = por %p197, %p198
      %p201 = scmp.ne.s32.totalorder %s186, %s200
      %p202 = scmp.eq.s32.totalorder %s35, 0
      %p203 = por %p201, %p202
      %s205 = sadd.s32 %s204, 1
      %p208 = scmp.eq.s32.totalorder %s29, 1
      %p209 = scmp.ne.s32.totalorder %s204, %s206
      %p210 = scmp.eq.s32.totalorder %s29, 0
      %p211 = por %p209, %p210
      %p212 = scmp.ne.s32.totalorder %s204, %s206
      %p213 = scmp.eq.s32.totalorder %s34, 1
      %p214 = por %p212, %p213
      %p215 = scmp.ne.s32.totalorder %s206, %s207
      %p216 = scmp.eq.s32.totalorder %s34, 0
      %p217 = por %p215, %p216
      %p218 = scmp.ne.s32.totalorder %s206, %s207
      %p219 = scmp.eq.s32.totalorder %s35, 1
      %p220 = por %p218, %p219
      %p222 = scmp.ne.s32.totalorder %s207, %s221
      %p223 = scmp.eq.s32.totalorder %s35, 0
      %p224 = por %p222, %p223
      %s226 = sadd.s32 %s225, 1
      %p229 = scmp.eq.s32.totalorder %s29, 1
      %p230 = scmp.ne.s32.totalorder %s225, %s227
      %p231 = scmp.eq.s32.totalorder %s29, 0
      %p232 = por %p230, %p231
      %p233 = scmp.ne.s32.totalorder %s225, %s227
      %p234 = scmp.eq.s32.totalorder %s34, 1
      %p235 = por %p233, %p234
      %p236 = scmp.ne.s32.totalorder %s227, %s228
      %p237 = scmp.eq.s32.totalorder %s34, 0
      %p238 = por %p236, %p237
      %p239 = scmp.ne.s32.totalorder %s227, %s228
      %p240 = scmp.eq.s32.totalorder %s35, 1
      %p241 = por %p239, %p240
      %p243 = scmp.ne.s32.totalorder %s228, %s242
      %p244 = scmp.eq.s32.totalorder %s35, 0
      %p245 = por %p243, %p244
      %s247 = sadd.s32 %s246, 1
      %p250 = scmp.eq.s32.totalorder %s29, 1
      %p251 = scmp.ne.s32.totalorder %s246, %s248
      %p252 = scmp.eq.s32.totalorder %s29, 0
      %p253 = por %p251, %p252
      %p254 = scmp.ne.s32.totalorder %s246, %s248
      %p255 = scmp.eq.s32.totalorder %s34, 1
      %p256 = por %p254, %p255
      %p257 = scmp.ne.s32.totalorder %s248, %s249
      %p258 = scmp.eq.s32.totalorder %s34, 0
      %p259 = por %p257, %p258
      %p260 = scmp.ne.s32.totalorder %s248, %s249
      %p261 = scmp.eq.s32.totalorder %s35, 1
      %p262 = por %p260, %p261
      %p264 = scmp.ne.s32.totalorder %s249, %s263
      %p265 = scmp.eq.s32.totalorder %s35, 0
      %p266 = por %p264, %p265
      %s268 = sadd.s32 %s267, 1
      %p271 = scmp.eq.s32.totalorder %s29, 1
      %p272 = scmp.ne.s32.totalorder %s267, %s269
      %p273 = scmp.eq.s32.totalorder %s29, 0
      %p274 = por %p272, %p273
      %p275 = scmp.ne.s32.totalorder %s267, %s269
      %p276 = scmp.eq.s32.totalorder %s34, 1
      %p277 = por %p275, %p276
      %p278 = scmp.ne.s32.totalorder %s269, %s270
      %p279 = scmp.eq.s32.totalorder %s34, 0
      %p280 = por %p278, %p279
      %p281 = scmp.ne.s32.totalorder %s269, %s270
      %p282 = scmp.eq.s32.totalorder %s35, 1
      %p283 = por %p281, %p282
      %p285 = scmp.ne.s32.totalorder %s270, %s284
      %p286 = scmp.eq.s32.totalorder %s35, 0
      %p287 = por %p285, %p286
      %s289 = sadd.s32 %s288, 1
      %p292 = scmp.eq.s32.totalorder %s29, 1
      %p293 = scmp.ne.s32.totalorder %s288, %s290
      %p294 = scmp.eq.s32.totalorder %s29, 0
      %p295 = por %p293, %p294
      %p296 = scmp.ne.s32.totalorder %s288, %s290
      %p297 = scmp.eq.s32.totalorder %s34, 1
      %p298 = por %p296, %p297
      %p299 = scmp.ne.s32.totalorder %s290, %s291
      %p300 = scmp.eq.s32.totalorder %s34, 0
      %p301 = por %p299, %p300
      %p302 = scmp.ne.s32.totalorder %s290, %s291
      %p303 = scmp.eq.s32.totalorder %s35, 1
      %p304 = por %p302, %p303
      %p306 = scmp.ne.s32.totalorder %s291, %s305
      %p307 = scmp.eq.s32.totalorder %s35, 0
      %p308 = por %p306, %p307
      %s310 = sadd.s32 %s309, 1
      %p313 = scmp.eq.s32.totalorder %s29, 1
      %p314 = scmp.ne.s32.totalorder %s309, %s311
      %p315 = scmp.eq.s32.totalorder %s29, 0
      %p316 = por %p314, %p315
      %p317 = scmp.ne.s32.totalorder %s309, %s311
      %p318 = scmp.eq.s32.totalorder %s34, 1
      %p319 = por %p317, %p318
      %p320 = scmp.ne.s32.totalorder %s311, %s312
      %p321 = scmp.eq.s32.totalorder %s34, 0
      %p322 = por %p320, %p321
      %p323 = scmp.ne.s32.totalorder %s311, %s312
      %p324 = scmp.eq.s32.totalorder %s35, 1
      %p325 = por %p323, %p324
      %p327 = scmp.ne.s32.totalorder %s312, %s326
      %p328 = scmp.eq.s32.totalorder %s35, 0
      %p329 = por %p327, %p328
      %s331 = sadd.s32 %s330, 1
      %p334 = scmp.eq.s32.totalorder %s29, 1
      %p335 = scmp.ne.s32.totalorder %s330, %s332
      %p336 = scmp.eq.s32.totalorder %s29, 0
      %p337 = por %p335, %p336
      %p338 = scmp.ne.s32.totalorder %s330, %s332
      %p339 = scmp.eq.s32.totalorder %s34, 1
      %p340 = por %p338, %p339
      %p341 = scmp.ne.s32.totalorder %s332, %s333
      %p342 = scmp.eq.s32.totalorder %s34, 0
      %p343 = por %p341, %p342
      %p344 = scmp.ne.s32.totalorder %s332, %s333
      %p345 = scmp.eq.s32.totalorder %s35, 1
      %p346 = por %p344, %p345
      %p348 = scmp.ne.s32.totalorder %s333, %s347
      %p349 = scmp.eq.s32.totalorder %s35, 0
      %p350 = por %p348, %p349
      %s352 = sadd.s32 %s351, 1
      %p355 = scmp.eq.s32.totalorder %s29, 1
      %p356 = scmp.ne.s32.totalorder %s351, %s353
      %p357 = scmp.eq.s32.totalorder %s29, 0
      %p358 = por %p356, %p357
      %p359 = scmp.ne.s32.totalorder %s351, %s353
      %p360 = scmp.eq.s32.totalorder %s34, 1
      %p361 = por %p359, %p360
      %p362 = scmp.ne.s32.totalorder %s353, %s354
      %p363 = scmp.eq.s32.totalorder %s34, 0
      %p364 = por %p362, %p363
      %p365 = scmp.ne.s32.totalorder %s353, %s354
      %p366 = scmp.eq.s32.totalorder %s35, 1
      %p367 = por %p365, %p366
      %p369 = scmp.ne.s32.totalorder %s354, %s368
      %p370 = scmp.eq.s32.totalorder %s35, 0
      %p371 = por %p369, %p370
      %s373 = sadd.s32 %s372, 1
      %p376 = scmp.eq.s32.totalorder %s29, 1
      %p377 = scmp.ne.s32.totalorder %s372, %s374
      %p378 = scmp.eq.s32.totalorder %s29, 0
      %p379 = por %p377, %p378
      %p380 = scmp.ne.s32.totalorder %s372, %s374
      %p381 = scmp.eq.s32.totalorder %s34, 1
      %p382 = por %p380, %p381
      %p383 = scmp.ne.s32.totalorder %s374, %s375
      %p384 = scmp.eq.s32.totalorder %s34, 0
      %p385 = por %p383, %p384
      %p386 = scmp.ne.s32.totalorder %s374, %s375
      %p387 = scmp.eq.s32.totalorder %s35, 1
      %p388 = por %p386, %p387
      %p390 = scmp.ne.s32.totalorder %s375, %s389
      %p391 = scmp.eq.s32.totalorder %s35, 0
      %p392 = por %p390, %p391
      %s394 = sadd.s32 %s393, 1
      %p397 = scmp.eq.s32.totalorder %s29, 1
      %p398 = scmp.ne.s32.totalorder %s393, %s395
      %p399 = scmp.eq.s32.totalorder %s29, 0
      %p400 = por %p398, %p399
      %p401 = scmp.ne.s32.totalorder %s393, %s395
      %p402 = scmp.eq.s32.totalorder %s34, 1
      %p403 = por %p401, %p402
      %p404 = scmp.ne.s32.totalorder %s395, %s396
      %p405 = scmp.eq.s32.totalorder %s34, 0
      %p406 = por %p404, %p405
      %p407 = scmp.ne.s32.totalorder %s395, %s396
      %p408 = scmp.eq.s32.totalorder %s35, 1
      %p409 = por %p407, %p408
      %p411 = scmp.ne.s32.totalorder %s396, %s410
      %p412 = scmp.eq.s32.totalorder %s35, 0
      %p413 = por %p411, %p412
      %s415 = sadd.s32 %s414, 1
      %p418 = scmp.eq.s32.totalorder %s29, 1
      %p419 = scmp.ne.s32.totalorder %s414, %s416
      %p420 = scmp.eq.s32.totalorder %s29, 0
      %p421 = por %p419, %p420
      %p422 = scmp.ne.s32.totalorder %s414, %s416
      %p423 = scmp.eq.s32.totalorder %s34, 1
      %p424 = por %p422, %p423
      %p425 = scmp.ne.s32.totalorder %s416, %s417
      %p426 = scmp.eq.s32.totalorder %s34, 0
      %p427 = por %p425, %p426
      %p428 = scmp.ne.s32.totalorder %s416, %s417
      %p429 = scmp.eq.s32.totalorder %s35, 1
      %p430 = por %p428, %p429
      %p432 = scmp.ne.s32.totalorder %s417, %s431
      %p433 = scmp.eq.s32.totalorder %s35, 0
      %p434 = por %p432, %p433
      %s436 = sadd.s32 %s435, 1
      %p439 = scmp.eq.s32.totalorder %s29, 1
      %p440 = scmp.ne.s32.totalorder %s435, %s437
      %p441 = scmp.eq.s32.totalorder %s29, 0
      %p442 = por %p440, %p441
      %p443 = scmp.ne.s32.totalorder %s435, %s437
      %p444 = scmp.eq.s32.totalorder %s34, 1
      %p445 = por %p443, %p444
      %p446 = scmp.ne.s32.totalorder %s437, %s438
      %p447 = scmp.eq.s32.totalorder %s34, 0
      %p448 = por %p446, %p447
      %p449 = scmp.ne.s32.totalorder %s437, %s438
      %p450 = scmp.eq.s32.totalorder %s35, 1
      %p451 = por %p449, %p450
      %p453 = scmp.ne.s32.totalorder %s438, %s452
      %p454 = scmp.eq.s32.totalorder %s35, 0
      %p455 = por %p453, %p454
      %s457 = sadd.s32 %s456, 1
      %p460 = scmp.eq.s32.totalorder %s29, 1
      %p461 = scmp.ne.s32.totalorder %s456, %s458
      %p462 = scmp.eq.s32.totalorder %s29, 0
      %p463 = por %p461, %p462
      %p464 = scmp.ne.s32.totalorder %s456, %s458
      %p465 = scmp.eq.s32.totalorder %s34, 1
      %p466 = por %p464, %p465
      %p467 = scmp.ne.s32.totalorder %s458, %s459
      %p468 = scmp.eq.s32.totalorder %s34, 0
      %p469 = por %p467, %p468
      %p470 = scmp.ne.s32.totalorder %s458, %s459
      %p471 = scmp.eq.s32.totalorder %s35, 1
      %p472 = por %p470, %p471
      %p474 = scmp.ne.s32.totalorder %s459, %s473
      %p475 = scmp.eq.s32.totalorder %s35, 0
      %p476 = por %p474, %p475
      %s477 = ssub.s32 %s29, %s36
      %p478 = scmp.eq.s32.totalorder %s477, 0
      %s480 = sadd.s32 %s479, 1
      %s481 = scalar_select %p478, %s479, %s480
      %p484 = pneg %p478
      %p485 = scmp.eq.s32.totalorder %s29, 1
      %p486 = por %p484, %p485
      %p487 = scmp.ne.s32.totalorder %s479, %s482
      %p488 = scmp.eq.s32.totalorder %s29, 0
      %p489 = por %p487, %p488
      %p490 = scmp.ne.s32.totalorder %s479, %s482
      %p491 = scmp.eq.s32.totalorder %s34, 1
      %p492 = por %p490, %p491
      %p493 = scmp.ne.s32.totalorder %s482, %s483
      %p494 = scmp.eq.s32.totalorder %s34, 0
      %p495 = por %p493, %p494
      %p496 = scmp.ne.s32.totalorder %s482, %s483
      %p497 = scmp.eq.s32.totalorder %s35, 1
      %p498 = por %p496, %p497
      %p500 = scmp.ne.s32.totalorder %s483, %s499
      %p501 = scmp.eq.s32.totalorder %s35, 0
      %p502 = por %p500, %p501
      %s503 = ssub.s32 %s29, %s36
      %p504 = scmp.eq.s32.totalorder %s503, 0
      %s506 = sadd.s32 %s505, 1
      %s507 = scalar_select %p504, %s505, %s506
      %p510 = pneg %p504
      %p511 = scmp.eq.s32.totalorder %s29, 1
      %p512 = por %p510, %p511
      %p513 = scmp.ne.s32.totalorder %s505, %s508
      %p514 = scmp.eq.s32.totalorder %s29, 0
      %p515 = por %p513, %p514
      %p516 = scmp.ne.s32.totalorder %s505, %s508
      %p517 = scmp.eq.s32.totalorder %s34, 1
      %p518 = por %p516, %p517
      %p519 = scmp.ne.s32.totalorder %s508, %s509
      %p520 = scmp.eq.s32.totalorder %s34, 0
      %p521 = por %p519, %p520
      %p522 = scmp.ne.s32.totalorder %s508, %s509
      %p523 = scmp.eq.s32.totalorder %s35, 1
      %p524 = por %p522, %p523
      %p526 = scmp.ne.s32.totalorder %s509, %s525
      %p527 = scmp.eq.s32.totalorder %s35, 0
      %p528 = por %p526, %p527
      %p529 = scmp.le.s32.totalorder 1, %s29
      %p530 = scmp.lt.s32.totalorder %s29, 3
      %p531 = pnand %p529, %p530
      %p532 = pneg %p531
      // Predicated region
      $region9: #{unet_decoder_forward.1} parent=5 // pred_check
        _
      $region10: #{unet_decoder_forward.1} parent=5 // pred_check_branch
        %534 = sbr.rel (%p531) target = $region12
      $region11: #{unet_decoder_forward.1} parent=5 // pred_region
        %s535 = ssub.s32 %s29, 1
        // Predicated region
        $region13: #{unet_decoder_forward.1} parent=11 // pred_check
          %p536 = pneg %p154
        $region14: #{unet_decoder_forward.1} parent=11 // pred_check_branch
          %538 = sbr.rel (%p536) target = $region16
        $region15: #{unet_decoder_forward.1} parent=11 // pred_region
          _
        $region16: #{unet_decoder_forward.1} parent=11 // pred_fallthru
          _
        // Predicated region
        $region17: #{unet_decoder_forward.1} parent=11 // pred_check
          %p539 = pneg %p175
        $region18: #{unet_decoder_forward.1} parent=11 // pred_check_branch
          %541 = sbr.rel (%p539) target = $region20
        $region19: #{unet_decoder_forward.1} parent=11 // pred_region
          _
        $region20: #{unet_decoder_forward.1} parent=11 // pred_fallthru
          _
        // Predicated region
        $region21: #{unet_decoder_forward.1} parent=11 // pred_check
          %p542 = pneg %p196
        $region22: #{unet_decoder_forward.1} parent=11 // pred_check_branch
          %544 = sbr.rel (%p542) target = $region24
        $region23: #{unet_decoder_forward.1} parent=11 // pred_region
          _
        $region24: #{unet_decoder_forward.1} parent=11 // pred_fallthru
          _
        // Predicated region
        $region25: #{unet_decoder_forward.1} parent=11 // pred_check
          %p545 = pneg %p217
        $region26: #{unet_decoder_forward.1} parent=11 // pred_check_branch
          %547 = sbr.rel (%p545) target = $region28
        $region27: #{unet_decoder_forward.1} parent=11 // pred_region
          _
        $region28: #{unet_decoder_forward.1} parent=11 // pred_fallthru
          _
        // Predicated region
        $region29: #{unet_decoder_forward.1} parent=11 // pred_check
          %p548 = pneg %p238
        $region30: #{unet_decoder_forward.1} parent=11 // pred_check_branch
          %550 = sbr.rel (%p548) target = $region32
        $region31: #{unet_decoder_forward.1} parent=11 // pred_region
          _
        $region32: #{unet_decoder_forward.1} parent=11 // pred_fallthru
          _
        // Predicated region
        $region33: #{unet_decoder_forward.1} parent=11 // pred_check
          %p551 = pneg %p259
        $region34: #{unet_decoder_forward.1} parent=11 // pred_check_branch
          %553 = sbr.rel (%p551) target = $region36
        $region35: #{unet_decoder_forward.1} parent=11 // pred_region
          _
        $region36: #{unet_decoder_forward.1} parent=11 // pred_fallthru
          _
        // Predicated region
        $region37: #{unet_decoder_forward.1} parent=11 // pred_check
          %p554 = pneg %p280
        $region38: #{unet_decoder_forward.1} parent=11 // pred_check_branch
          %556 = sbr.rel (%p554) target = $region40
        $region39: #{unet_decoder_forward.1} parent=11 // pred_region
          _
        $region40: #{unet_decoder_forward.1} parent=11 // pred_fallthru
          _
        // Predicated region
        $region41: #{unet_decoder_forward.1} parent=11 // pred_check
          %p557 = pneg %p301
        $region42: #{unet_decoder_forward.1} parent=11 // pred_check_branch
          %559 = sbr.rel (%p557) target = $region44
        $region43: #{unet_decoder_forward.1} parent=11 // pred_region
          _
        $region44: #{unet_decoder_forward.1} parent=11 // pred_fallthru
          _
        // Predicated region
        $region45: #{unet_decoder_forward.1} parent=11 // pred_check
          %p560 = pneg %p322
        $region46: #{unet_decoder_forward.1} parent=11 // pred_check_branch
          %562 = sbr.rel (%p560) target = $region48
        $region47: #{unet_decoder_forward.1} parent=11 // pred_region
          _
        $region48: #{unet_decoder_forward.1} parent=11 // pred_fallthru
          _
        // Predicated region
        $region49: #{unet_decoder_forward.1} parent=11 // pred_check
          %p563 = pneg %p343
        $region50: #{unet_decoder_forward.1} parent=11 // pred_check_branch
          %565 = sbr.rel (%p563) target = $region52
        $region51: #{unet_decoder_forward.1} parent=11 // pred_region
          %567 = vsyncadd [#allocation5], 0
          %s568 = sshll.u32 %s13, 4
          %s569 = int_to_ptr.hbm [resolvable:$true] %s568
          %s570 = sshll.u32 [#allocation4], 4
          %s571 = int_to_ptr.vmem [resolvable:$true] %s570
          %576 = dma.hbm_to_vmem [thread:$0]  %s569, 7680, %s571, [#allocation5], 192, 192, 12
        $region52: #{unet_decoder_forward.1} parent=11 // pred_fallthru
          _
        // Predicated region
        $region53: #{unet_decoder_forward.1} parent=11 // pred_check
          %p577 = pneg %p364
        $region54: #{unet_decoder_forward.1} parent=11 // pred_check_branch
          %579 = sbr.rel (%p577) target = $region56
        $region55: #{unet_decoder_forward.1} parent=11 // pred_region
          _
        $region56: #{unet_decoder_forward.1} parent=11 // pred_fallthru
          _
        // Predicated region
        $region57: #{unet_decoder_forward.1} parent=11 // pred_check
          %p580 = pneg %p385
        $region58: #{unet_decoder_forward.1} parent=11 // pred_check_branch
          %582 = sbr.rel (%p580) target = $region60
        $region59: #{unet_decoder_forward.1} parent=11 // pred_region
          _
        $region60: #{unet_decoder_forward.1} parent=11 // pred_fallthru
          _
        // Predicated region
        $region61: #{unet_decoder_forward.1} parent=11 // pred_check
          %p583 = pneg %p406
        $region62: #{unet_decoder_forward.1} parent=11 // pred_check_branch
          %585 = sbr.rel (%p583) target = $region64
        $region63: #{unet_decoder_forward.1} parent=11 // pred_region
          _
        $region64: #{unet_decoder_forward.1} parent=11 // pred_fallthru
          _
        // Predicated region
        $region65: #{unet_decoder_forward.1} parent=11 // pred_check
          %p586 = pneg %p427
        $region66: #{unet_decoder_forward.1} parent=11 // pred_check_branch
          %588 = sbr.rel (%p586) target = $region68
        $region67: #{unet_decoder_forward.1} parent=11 // pred_region
          _
        $region68: #{unet_decoder_forward.1} parent=11 // pred_fallthru
          _
        // Predicated region
        $region69: #{unet_decoder_forward.1} parent=11 // pred_check
          %p589 = pneg %p448
        $region70: #{unet_decoder_forward.1} parent=11 // pred_check_branch
          %591 = sbr.rel (%p589) target = $region72
        $region71: #{unet_decoder_forward.1} parent=11 // pred_region
          _
        $region72: #{unet_decoder_forward.1} parent=11 // pred_fallthru
          _
        // Predicated region
        $region73: #{unet_decoder_forward.1} parent=11 // pred_check
          %p592 = pneg %p469
        $region74: #{unet_decoder_forward.1} parent=11 // pred_check_branch
          %594 = sbr.rel (%p592) target = $region76
        $region75: #{unet_decoder_forward.1} parent=11 // pred_region
          _
        $region76: #{unet_decoder_forward.1} parent=11 // pred_fallthru
          _
      $region12: #{unet_decoder_forward.1} parent=5 // pred_fallthru
        _
      %p595 = scmp.lt.s32.totalorder %s29, 2
      // Predicated region
      $region77: #{unet_decoder_forward.1} parent=5 // pred_check
        %p596 = pneg %p595
      $region78: #{unet_decoder_forward.1} parent=5 // pred_check_branch
        %598 = sbr.rel (%p596) target = $region80
      $region79: #{unet_decoder_forward.1} parent=5 // pred_region
        // Predicated region
        $region81: #{unet_decoder_forward.1} parent=79 // pred_check
          %p599 = pneg %p49
        $region82: #{unet_decoder_forward.1} parent=79 // pred_check_branch
          %601 = sbr.rel (%p599) target = $region84
        $region83: #{unet_decoder_forward.1} parent=79 // pred_region
          %p602 = scmp.lt.s32.totalorder %s29, 1
          %s603 = scalar_select %p602, %s29, 1
          %s604 = smul.addr %s603, 4
          %s605 = smul.addr %s604, 8
          %s606 = scalar_lea.vmem %s0, %s605
        $region84: #{unet_decoder_forward.1} parent=79 // pred_fallthru
          _
        // Predicated region
        $region85: #{unet_decoder_forward.1} parent=79 // pred_check
          %p607 = pneg %p75
        $region86: #{unet_decoder_forward.1} parent=79 // pred_check_branch
          %609 = sbr.rel (%p607) target = $region88
        $region87: #{unet_decoder_forward.1} parent=79 // pred_region
          %p610 = scmp.lt.s32.totalorder %s29, 1
          %s611 = scalar_select %p610, %s29, 1
          %s612 = smul.addr %s611, 2
          %s613 = smul.addr %s612, 8
          %s614 = scalar_lea.vmem %s1, %s613
        $region88: #{unet_decoder_forward.1} parent=79 // pred_fallthru
          _
        // Predicated region
        $region89: #{unet_decoder_forward.1} parent=79 // pred_check
          %p615 = pneg %p101
        $region90: #{unet_decoder_forward.1} parent=79 // pred_check_branch
          %617 = sbr.rel (%p615) target = $region92
        $region91: #{unet_decoder_forward.1} parent=79 // pred_region
          %p618 = scmp.lt.s32.totalorder %s29, 1
          %s619 = scalar_select %p618, %s29, 1
          %s620 = smul.addr %s619, 2
          %s621 = smul.addr %s620, 8
          %s622 = scalar_lea.vmem %s2, %s621
        $region92: #{unet_decoder_forward.1} parent=79 // pred_fallthru
          _
        // Predicated region
        $region93: #{unet_decoder_forward.1} parent=79 // pred_check
          %p623 = pneg %p127
        $region94: #{unet_decoder_forward.1} parent=79 // pred_check_branch
          %625 = sbr.rel (%p623) target = $region96
        $region95: #{unet_decoder_forward.1} parent=79 // pred_region
          %p626 = scmp.lt.s32.totalorder %s29, 1
          %s627 = scalar_select %p626, %s29, 1
          %s628 = smul.addr %s627, 4
          %s629 = smul.addr %s628, 8
          %s630 = scalar_lea.vmem %s3, %s629
        $region96: #{unet_decoder_forward.1} parent=79 // pred_fallthru
          _
      $region80: #{unet_decoder_forward.1} parent=5 // pred_fallthru
        _
      %p631 = scmp.le.s32.totalorder 1, %s29
      %p632 = scmp.lt.s32.totalorder %s29, 3
      %p633 = pnand %p631, %p632
      %p634 = pneg %p633
      // Predicated region
      $region97: #{unet_decoder_forward.1} parent=5 // pred_check
        _
      $region98: #{unet_decoder_forward.1} parent=5 // pred_check_branch
        %636 = sbr.rel (%p633) target = $region100
      $region99: #{unet_decoder_forward.1} parent=5 // pred_region
        %s637 = ssub.s32 %s29, 1
        // Predicated region
        $region101: #{unet_decoder_forward.1} parent=99 // pred_check
          %p638 = pneg %p343
        $region102: #{unet_decoder_forward.1} parent=99 // pred_check_branch
          %640 = sbr.rel (%p638) target = $region104
        $region103: #{unet_decoder_forward.1} parent=99 // pred_region
          %642 = dma.done [#allocation5], 7680
        $region104: #{unet_decoder_forward.1} parent=99 // pred_fallthru
          _
        %p643 = scmp.lt.s32.totalorder %s34, 1
        %s644 = scalar_select %p643, %s34, 1
        %s645 = smul.addr %s644, 4
        %s646 = smul.addr %s645, 8
        %s647 = scalar_lea.vmem %s0, %s646
        %p648 = pneg %p55
        %p649 = pneg %p52
        %p650 = scmp.lt.s32.totalorder %s34, 1
        %s651 = scalar_select %p650, %s34, 1
        %s652 = smul.addr %s651, 2
        %s653 = smul.addr %s652, 8
        %s654 = scalar_lea.vmem %s1, %s653
        %p655 = pneg %p81
        %p656 = pneg %p78
        %p657 = scmp.lt.s32.totalorder %s34, 1
        %s658 = scalar_select %p657, %s34, 1
        %s659 = smul.addr %s658, 2
        %s660 = smul.addr %s659, 8
        %s661 = scalar_lea.vmem %s2, %s660
        %p662 = pneg %p107
        %p663 = pneg %p104
        %p664 = scmp.lt.s32.totalorder %s34, 1
        %s665 = scalar_select %p664, %s34, 1
        %s666 = smul.addr %s665, 4
        %s667 = smul.addr %s666, 8
        %s668 = scalar_lea.vmem %s3, %s667
        %p669 = pneg %p133
        %p670 = pneg %p130
        %p671 = pneg %p154
        %p672 = pneg %p151
        %p673 = pneg %p175
        %p674 = pneg %p172
        %p675 = pneg %p196
        %p676 = pneg %p193
        %p677 = pneg %p217
        %p678 = pneg %p214
        %p679 = pneg %p238
        %p680 = pneg %p235
        %p681 = pneg %p259
        %p682 = pneg %p256
        %p683 = pneg %p280
        %p684 = pneg %p277
        %p685 = pneg %p301
        %p686 = pneg %p298
        %p687 = pneg %p322
        %p688 = pneg %p319
        %p689 = pneg %p343
        %p690 = pneg %p340
        %p691 = pneg %p364
        %p692 = pneg %p361
        %p693 = pneg %p385
        %p694 = pneg %p382
        %p695 = pneg %p406
        %p696 = pneg %p403
        %p697 = pneg %p427
        %p698 = pneg %p424
        %p699 = pneg %p448
        %p700 = pneg %p445
        %p701 = pneg %p469
        %p702 = pneg %p466
        %p703 = pneg %p495
        %p704 = pneg %p492
        %p705 = scmp.lt.s32.totalorder %s34, 1
        %s706 = scalar_select %p705, %s34, 1
        %s707 = smul.addr %s706, 8
        %s708 = scalar_lea.vmem %s20, %s707
        %p709 = pneg %p521
        %p710 = pneg %p518
        %p711 = scmp.lt.s32.totalorder %s34, 1
        %s712 = scalar_select %p711, %s34, 1
        %s713 = smul.addr %s712, 3
        %s714 = smul.addr %s713, 8
        %s715 = scalar_lea.vmem %s21, %s714
        %p716 = scmp.lt.s32.totalorder %s34, 1
        %s717 = scalar_select %p716, %s34, 1
        %s718 = smul.addr %s717, 4
        %s719 = smul.addr %s718, 8
        %s720 = scalar_lea.vmem %s0, %s719
        %p721 = scmp.lt.s32.totalorder %s34, 1
        %s722 = scalar_select %p721, %s34, 1
        %s723 = smul.addr %s722, 2
        %s724 = smul.addr %s723, 8
        %s725 = scalar_lea.vmem %s1, %s724
        %p726 = scmp.lt.s32.totalorder %s34, 1
        %s727 = scalar_select %p726, %s34, 1
        %s728 = smul.addr %s727, 2
        %s729 = smul.addr %s728, 8
        %s730 = scalar_lea.vmem %s2, %s729
        %p731 = scmp.lt.s32.totalorder %s34, 1
        %s732 = scalar_select %p731, %s34, 1
        %s733 = smul.addr %s732, 4
        %s734 = smul.addr %s733, 8
        %s735 = scalar_lea.vmem %s3, %s734
        %p736 = scmp.lt.s32.totalorder %s34, 1
        %s737 = scalar_select %p736, %s34, 1
        %s738 = smul.addr %s737, 8
        %s739 = scalar_lea.vmem %s20, %s738
        %p740 = scmp.lt.s32.totalorder %s34, 1
        %s741 = scalar_select %p740, %s34, 1
        %s742 = smul.addr %s741, 3
        %s743 = smul.addr %s742, 8
        %s744 = scalar_lea.vmem %s21, %s743
        %v745 = vld [vmem:[%s735] sm:$0xff]
        %v746 = vld [vmem:[%s735 + $0x8] sm:$0xff]
        %v747 = vld [vmem:[%s735 + $0x10] sm:$0xff]
        %v748 = vld [vmem:[%s735 + $0x18] sm:$0xff]
        %v749 = vld [vmem:[%s720] sm:$0xff]
        %v750 = vld [vmem:[%s720 + $0x8] sm:$0xff]
        %v751 = vld [vmem:[%s720 + $0x10] sm:$0xff]
        %v752 = vld [vmem:[%s720 + $0x18] sm:$0xff]
        %v753 = vld [vmem:[%s4] sm:$0xff]
        %v754 = vld [vmem:[%s4 + $0x8] sm:$0xff]
        %v755 = vld [vmem:[%s4 + $0x10] sm:$0xff]
        %v756 = vld [vmem:[%s4 + $0x18] sm:$0xff]
        %v757 = vld [vmem:[%s4 + $0x20] sm:$0xff]
        %v758 = vld [vmem:[%s4 + $0x28] sm:$0xff]
        %v759 = vld [vmem:[%s4 + $0x30] sm:$0xff]
        %v760 = vld [vmem:[%s4 + $0x38] sm:$0xff]
        %v761 = vld [vmem:[%s9] sm:$0xff]
        %v762 = vld [vmem:[%s9 + $0x8] sm:$0xff]
        %v763 = vld [vmem:[%s9 + $0x10] sm:$0xff]
        %v764 = vld [vmem:[%s9 + $0x18] sm:$0xff]
        %v765 = vld [vmem:[%s9 + $0x20] sm:$0xff]
        %v766 = vld [vmem:[%s9 + $0x28] sm:$0xff]
        %v767 = vld [vmem:[%s9 + $0x30] sm:$0xff]
        %v768 = vld [vmem:[%s9 + $0x38] sm:$0xff]
        %770 = vset.pattern.permute.xlu0 0
        %771 = vperm.xlu0 %770, %v761
        %v772 = vpop.permute.xlu0 %771
        %775 = vset.pattern.permute.xlu0 0
        %776 = vperm.xlu0 %775, %v762
        %v777 = vpop.permute.xlu0 %776
        %780 = vset.pattern.permute.xlu0 0
        %781 = vperm.xlu0 %780, %v763
        %v782 = vpop.permute.xlu0 %781
        %785 = vset.pattern.permute.xlu0 0
        %786 = vperm.xlu0 %785, %v764
        %v787 = vpop.permute.xlu0 %786
        %790 = vset.pattern.permute.xlu0 0
        %791 = vperm.xlu0 %790, %v765
        %v792 = vpop.permute.xlu0 %791
        %795 = vset.pattern.permute.xlu0 0
        %796 = vperm.xlu0 %795, %v766
        %v797 = vpop.permute.xlu0 %796
        %800 = vset.pattern.permute.xlu0 0
        %801 = vperm.xlu0 %800, %v767
        %v802 = vpop.permute.xlu0 %801
        %805 = vset.pattern.permute.xlu0 0
        %806 = vperm.xlu0 %805, %v768
        %v807 = vpop.permute.xlu0 %806
        %vm809 = vcmask 261120
        %v811 = vsel %vm809, %v753, 0
        %v814 = vsel %vm809, %v754, 0
        %v817 = vsel %vm809, %v755, 0
        %v820 = vsel %vm809, %v756, 0
        %v823 = vsel %vm809, %v757, 0
        %v826 = vsel %vm809, %v758, 0
        %v829 = vsel %vm809, %v759, 0
        %v832 = vsel %vm809, %v760, 0
        %834 = vmatpush.msra.mxu0 0.0
        %835 = vmatpush.msra.mxu0 0.0
        %836 = vmatpush.msra.mxu0 0.0
        %837 = vmatpush.msra.mxu0 0.0
        %838 = vmatpush.msra.mxu0 0.0
        %839 = vmatpush.msra.mxu0 0.0
        %840 = vmatpush.msra.mxu0 0.0
        %841 = vmatpush.msra.mxu0 0.0
        %842 = vmatpush.msra.mxu0 0.0
        %843 = vmatpush.msra.mxu0 0.0
        %844 = vmatpush.msra.mxu0 0.0
        %845 = vmatpush.msra.mxu0 0.0
        %846 = vmatpush.msra.mxu0 %v752
        %847 = vmatpush.msra.mxu0 %v751
        %848 = vmatpush.msra.mxu0 %v750
        %849 = vmatpush.msra.mxu0 %v749
        %850 = vmatmul.f32.gmra.mxu0 %v811
        %v851 = vpop.f32.mrf.mxu0
        %v852 = vadd.f32 %v772, %v851
        %853 = vmatmul.f32.gmra.mxu0 %v814
        %v854 = vpop.f32.mrf.mxu0
        %v855 = vadd.f32 %v777, %v854
        %856 = vmatmul.f32.gmra.mxu0 %v817
        %v857 = vpop.f32.mrf.mxu0
        %v858 = vadd.f32 %v782, %v857
        %859 = vmatmul.f32.gmra.mxu0 %v820
        %v860 = vpop.f32.mrf.mxu0
        %v861 = vadd.f32 %v787, %v860
        %862 = vmatmul.f32.gmra.mxu0 %v823
        %v863 = vpop.f32.mrf.mxu0
        %v864 = vadd.f32 %v792, %v863
        %865 = vmatmul.f32.gmra.mxu0 %v826
        %v866 = vpop.f32.mrf.mxu0
        %v867 = vadd.f32 %v797, %v866
        %868 = vmatmul.f32.gmra.mxu0 %v829
        %v869 = vpop.f32.mrf.mxu0
        %v870 = vadd.f32 %v802, %v869
        %871 = vmatmul.f32.gmra.mxu0 %v832
        %v872 = vpop.f32.mrf.mxu0
        %v873 = vadd.f32 %v807, %v872
        %874 = vdwg.mxu0
        %v875 = vld [vmem:[%s5] sm:$0xf]
        %v876 = vld [vmem:[%s5 + $0x4] sm:$0xf]
        %v877 = vunpack.c.l.bf16 %v875
        %v878 = vunpack.c.l.bf16 %v876
        %s879 = scalar_lea.vmem %s5, 8
        %v880 = vld [vmem:[%s879] sm:$0xf]
        %v881 = vld [vmem:[%s879 + $0x4] sm:$0xf]
        %v882 = vunpack.c.l.bf16 %v880
        %v883 = vunpack.c.l.bf16 %v881
        %vm884 = vcmask 130048
        %v886 = vsel %vm884, %v858, 0
        %v889 = vsel %vm884, %v861, 0
        %891 = vmatpush.msra.mxu0 0.0
        %892 = vmatpush.msra.mxu0 0.0
        %893 = vmatpush.msra.mxu0 0.0
        %894 = vmatpush.msra.mxu0 0.0
        %895 = vmatpush.msra.mxu0 0.0
        %896 = vmatpush.msra.mxu0 0.0
        %897 = vmatpush.msra.mxu0 0.0
        %898 = vmatpush.msra.mxu0 0.0
        %899 = vmatpush.msra.mxu0 0.0
        %900 = vmatpush.msra.mxu0 0.0
        %901 = vmatpush.msra.mxu0 0.0
        %902 = vmatpush.msra.mxu0 0.0
        %903 = vmatpush.msra.mxu0 0.0
        %904 = vmatpush.msra.mxu0 0.0
        %905 = vmatpush.msra.mxu0 %v883
        %906 = vmatpush.msra.mxu0 %v882
        %907 = vmatmul.f32.gmra.mxu0 %v886
        %v908 = vpop.f32.mrf.mxu0
        %v909 = vadd.f32 0.0, %v908
        %910 = vmatmul.f32.gmra.mxu0 %v889
        %v911 = vpop.f32.mrf.mxu0
        %v912 = vadd.f32 0.0, %v911
        %913 = vdwg.mxu0
        %v915 = vsel %vm884, %v852, 0
        %v918 = vsel %vm884, %v855, 0
        %920 = vmatpush.msra.mxu0 0.0
        %921 = vmatpush.msra.mxu0 0.0
        %922 = vmatpush.msra.mxu0 0.0
        %923 = vmatpush.msra.mxu0 0.0
        %924 = vmatpush.msra.mxu0 0.0
        %925 = vmatpush.msra.mxu0 0.0
        %926 = vmatpush.msra.mxu0 0.0
        %927 = vmatpush.msra.mxu0 0.0
        %928 = vmatpush.msra.mxu0 0.0
        %929 = vmatpush.msra.mxu0 0.0
        %930 = vmatpush.msra.mxu0 0.0
        %931 = vmatpush.msra.mxu0 0.0
        %932 = vmatpush.msra.mxu0 0.0
        %933 = vmatpush.msra.mxu0 0.0
        %934 = vmatpush.msra.mxu0 %v878
        %935 = vmatpush.msra.mxu0 %v877
        %936 = vmatmul.f32.gmra.mxu0 %v915
        %v937 = vpop.f32.mrf.mxu0
        %v938 = vadd.f32 %v909, %v937
        %939 = vmatmul.f32.gmra.mxu0 %v918
        %v940 = vpop.f32.mrf.mxu0
        %v941 = vadd.f32 %v912, %v940
        %942 = vdwg.mxu0
        %s943 = scalar_lea.vmem %s5, 16
        %v944 = vld [vmem:[%s943] sm:$0xf]
        %v945 = vld [vmem:[%s943 + $0x4] sm:$0xf]
        %v946 = vunpack.c.l.bf16 %v944
        %v947 = vunpack.c.l.bf16 %v945
        %v949 = vsel %vm884, %v864, 0
        %v952 = vsel %vm884, %v867, 0
        %954 = vmatpush.msra.mxu0 0.0
        %955 = vmatpush.msra.mxu0 0.0
        %956 = vmatpush.msra.mxu0 0.0
        %957 = vmatpush.msra.mxu0 0.0
        %958 = vmatpush.msra.mxu0 0.0
        %959 = vmatpush.msra.mxu0 0.0
        %960 = vmatpush.msra.mxu0 0.0
        %961 = vmatpush.msra.mxu0 0.0
        %962 = vmatpush.msra.mxu0 0.0
        %963 = vmatpush.msra.mxu0 0.0
        %964 = vmatpush.msra.mxu0 0.0
        %965 = vmatpush.msra.mxu0 0.0
        %966 = vmatpush.msra.mxu0 0.0
        %967 = vmatpush.msra.mxu0 0.0
        %968 = vmatpush.msra.mxu0 %v947
        %969 = vmatpush.msra.mxu0 %v946
        %970 = vmatmul.f32.gmra.mxu0 %v949
        %v971 = vpop.f32.mrf.mxu0
        %v972 = vadd.f32 0.0, %v971
        %973 = vmatmul.f32.gmra.mxu0 %v952
        %v974 = vpop.f32.mrf.mxu0
        %v975 = vadd.f32 0.0, %v974
        %976 = vdwg.mxu0
        %v977 = vadd.f32 %v938, %v972
        %v978 = vadd.f32 %v941, %v975
        %s979 = scalar_lea.vmem %s5, 24
        %v980 = vld [vmem:[%s979] sm:$0xf]
        %v981 = vld [vmem:[%s979 + $0x4] sm:$0xf]
        %v982 = vunpack.c.l.bf16 %v980
        %v983 = vunpack.c.l.bf16 %v981
        %v985 = vsel %vm884, %v870, 0
        %v988 = vsel %vm884, %v873, 0
        %990 = vmatpush.msra.mxu0 0.0
        %991 = vmatpush.msra.mxu0 0.0
        %992 = vmatpush.msra.mxu0 0.0
        %993 = vmatpush.msra.mxu0 0.0
        %994 = vmatpush.msra.mxu0 0.0
        %995 = vmatpush.msra.mxu0 0.0
        %996 = vmatpush.msra.mxu0 0.0
        %997 = vmatpush.msra.mxu0 0.0
        %998 = vmatpush.msra.mxu0 0.0
        %999 = vmatpush.msra.mxu0 0.0
        %1000 = vmatpush.msra.mxu0 0.0
        %1001 = vmatpush.msra.mxu0 0.0
        %1002 = vmatpush.msra.mxu0 0.0
        %1003 = vmatpush.msra.mxu0 0.0
        %1004 = vmatpush.msra.mxu0 %v983
        %1005 = vmatpush.msra.mxu0 %v982
        %1006 = vmatmul.f32.gmra.mxu0 %v985
        %v1007 = vpop.f32.mrf.mxu0
        %v1008 = vadd.f32 0.0, %v1007
        %1009 = vmatmul.f32.gmra.mxu0 %v988
        %v1010 = vpop.f32.mrf.mxu0
        %v1011 = vadd.f32 0.0, %v1010
        %1012 = vdwg.mxu0
        %v1013 = vadd.f32 %v977, %v1008
        %v1014 = vadd.f32 %v978, %v1011
        %vm1015 = vcmask 900096
        %1016 = vst.msk [vmem:[#allocation2] sm:$0xff] %vm1015, %v1013
        %1017 = vst.msk [vmem:[#allocation2 + $0x8] sm:$0xff] %vm1015, %v1014
        %1018 = vst.msk [vmem:[#allocation2 + $0x10] sm:$0xff] %vm1015, 0.0
        %1019 = vst.msk [vmem:[#allocation2 + $0x18] sm:$0xff] %vm1015, 0.0
        %v1020 = vld [vmem:[%s725] sm:$0xff]
        %v1021 = vld [vmem:[%s725 + $0x8] sm:$0xff]
        %1024 = vrot.lane.b32.xlu0 %v1020, 11
        %v1025 = vpop.permute.xlu0 %1024
        %1026 = vrot.lane.b32.xlu0 %v1021, 11
        %v1027 = vpop.permute.xlu0 %1026
        %vm1030 = vcmask 154712
        %1031 = vst.msk [vmem:[#allocation2 + $0x10] sm:$0xff] %vm1030, %v1025
        %1032 = vst.msk [vmem:[#allocation2 + $0x18] sm:$0xff] %vm1030, %v1027
        %v1033 = vld [vmem:[%s725] sm:$0xff]
        %v1034 = vld [vmem:[%s725 + $0x8] sm:$0xff]
        %1037 = vrot.lane.b32.xlu0 %v1033, 13
        %v1038 = vpop.permute.xlu0 %1037
        %1039 = vrot.lane.b32.xlu0 %v1034, 13
        %v1040 = vpop.permute.xlu0 %1039
        %vm1043 = vcmask 236712
        %1044 = vst.msk [vmem:[#allocation2 + $0x10] sm:$0xff] %vm1043, %v1038
        %1045 = vst.msk [vmem:[#allocation2 + $0x18] sm:$0xff] %vm1043, %v1040
        %v1046 = vld [vmem:[%s725] sm:$0xff]
        %v1047 = vld [vmem:[%s725 + $0x8] sm:$0xff]
        %1050 = vrot.lane.b32.xlu0 %v1046, 15
        %v1051 = vpop.permute.xlu0 %1050
        %1052 = vrot.lane.b32.xlu0 %v1047, 15
        %v1053 = vpop.permute.xlu0 %1052
        %vm1056 = vcmask 318712
        %1057 = vst.msk [vmem:[#allocation2 + $0x10] sm:$0xff] %vm1056, %v1051
        %1058 = vst.msk [vmem:[#allocation2 + $0x18] sm:$0xff] %vm1056, %v1053
        %v1059 = vld [vmem:[%s725] sm:$0xff]
        %v1060 = vld [vmem:[%s725 + $0x8] sm:$0xff]
        %1063 = vrot.lane.b32.xlu0 %v1059, 17
        %v1064 = vpop.permute.xlu0 %1063
        %1065 = vrot.lane.b32.xlu0 %v1060, 17
        %v1066 = vpop.permute.xlu0 %1065
        %vm1069 = vcmask 400712
        %1070 = vst.msk [vmem:[#allocation2 + $0x10] sm:$0xff] %vm1069, %v1064
        %1071 = vst.msk [vmem:[#allocation2 + $0x18] sm:$0xff] %vm1069, %v1066
        %v1072 = vld [vmem:[%s725] sm:$0xff]
        %v1073 = vld [vmem:[%s725 + $0x8] sm:$0xff]
        %1076 = vrot.lane.b32.xlu0 %v1072, 19
        %v1077 = vpop.permute.xlu0 %1076
        %1078 = vrot.lane.b32.xlu0 %v1073, 19
        %v1079 = vpop.permute.xlu0 %1078
        %vm1082 = vcmask 482712
        %1083 = vst.msk [vmem:[#allocation2 + $0x10] sm:$0xff] %vm1082, %v1077
        %1084 = vst.msk [vmem:[#allocation2 + $0x18] sm:$0xff] %vm1082, %v1079
        %v1085 = vld [vmem:[%s725] sm:$0xff]
        %v1086 = vld [vmem:[%s725 + $0x8] sm:$0xff]
        %1089 = vrot.lane.b32.xlu0 %v1085, 21
        %v1090 = vpop.permute.xlu0 %1089
        %1091 = vrot.lane.b32.xlu0 %v1086, 21
        %v1092 = vpop.permute.xlu0 %1091
        %vm1095 = vcmask 564712
        %1096 = vst.msk [vmem:[#allocation2 + $0x10] sm:$0xff] %vm1095, %v1090
        %1097 = vst.msk [vmem:[#allocation2 + $0x18] sm:$0xff] %vm1095, %v1092
        %v1098 = vld [vmem:[%s725] sm:$0xff]
        %v1099 = vld [vmem:[%s725 + $0x8] sm:$0xff]
        %1102 = vrot.lane.b32.xlu0 %v1098, 23
        %v1103 = vpop.permute.xlu0 %1102
        %1104 = vrot.lane.b32.xlu0 %v1099, 23
        %v1105 = vpop.permute.xlu0 %1104
        %vm1108 = vcmask 646712
        %1109 = vst.msk [vmem:[#allocation2 + $0x10] sm:$0xff] %vm1108, %v1103
        %1110 = vst.msk [vmem:[#allocation2 + $0x18] sm:$0xff] %vm1108, %v1105
        %v1111 = vld [vmem:[%s725] sm:$0xff]
        %v1112 = vld [vmem:[%s725 + $0x8] sm:$0xff]
        %1115 = vrot.lane.b32.xlu0 %v1111, 25
        %v1116 = vpop.permute.xlu0 %1115
        %1117 = vrot.lane.b32.xlu0 %v1112, 25
        %v1118 = vpop.permute.xlu0 %1117
        %vm1121 = vcmask 728712
        %1122 = vst.msk [vmem:[#allocation2 + $0x10] sm:$0xff] %vm1121, %v1116
        %1123 = vst.msk [vmem:[#allocation2 + $0x18] sm:$0xff] %vm1121, %v1118
        %v1124 = vld [vmem:[%s8] sm:$0xff]
        %v1125 = vld [vmem:[%s8 + $0x8] sm:$0xff]
        %v1126 = vld [vmem:[%s8 + $0x10] sm:$0xff]
        %v1127 = vld [vmem:[%s8 + $0x18] sm:$0xff]
        %v1128 = vld [vmem:[%s9] sm:$0xff]
        %v1129 = vld [vmem:[%s9 + $0x8] sm:$0xff]
        %v1130 = vld [vmem:[%s9 + $0x10] sm:$0xff]
        %v1131 = vld [vmem:[%s9 + $0x18] sm:$0xff]
        %1136 = vrot.lane.b32.xlu0 %v1128, 127
        %v1137 = vpop.permute.xlu0 %1136
        %1138 = vrot.lane.b32.xlu0 %v1129, 127
        %v1139 = vpop.permute.xlu0 %1138
        %1140 = vrot.lane.b32.xlu0 %v1130, 127
        %v1141 = vpop.permute.xlu0 %1140
        %1142 = vrot.lane.b32.xlu0 %v1131, 127
        %v1143 = vpop.permute.xlu0 %1142
        %v1149 = vsel %vm809, %v1124, 0
        %v1152 = vsel %vm809, %v1125, 0
        %v1155 = vsel %vm809, %v1126, 0
        %v1158 = vsel %vm809, %v1127, 0
        %1160 = vmatpush.msra.mxu0 0.0
        %1161 = vmatpush.msra.mxu0 0.0
        %1162 = vmatpush.msra.mxu0 0.0
        %1163 = vmatpush.msra.mxu0 0.0
        %1164 = vmatpush.msra.mxu0 0.0
        %1165 = vmatpush.msra.mxu0 0.0
        %1166 = vmatpush.msra.mxu0 0.0
        %1167 = vmatpush.msra.mxu0 0.0
        %1168 = vmatpush.msra.mxu0 0.0
        %1169 = vmatpush.msra.mxu0 0.0
        %1170 = vmatpush.msra.mxu0 0.0
        %1171 = vmatpush.msra.mxu0 0.0
        %1172 = vmatpush.msra.mxu0 %v748
        %1173 = vmatpush.msra.mxu0 %v747
        %1174 = vmatpush.msra.mxu0 %v746
        %1175 = vmatpush.msra.mxu0 %v745
        %1176 = vmatmul.f32.gmra.mxu0 %v1149
        %v1177 = vpop.f32.mrf.mxu0
        %v1178 = vadd.f32 %v1137, %v1177
        %1179 = vmatmul.f32.gmra.mxu0 %v1152
        %v1180 = vpop.f32.mrf.mxu0
        %v1181 = vadd.f32 %v1139, %v1180
        %1182 = vmatmul.f32.gmra.mxu0 %v1155
        %v1183 = vpop.f32.mrf.mxu0
        %v1184 = vadd.f32 %v1141, %v1183
        %1185 = vmatmul.f32.gmra.mxu0 %v1158
        %v1186 = vpop.f32.mrf.mxu0
        %v1187 = vadd.f32 %v1143, %v1186
        %1188 = vdwg.mxu0
        %v1189 = vld [vmem:[%s11] sm:$0x1]
        %v1190 = vld [vmem:[%s9] sm:$0xff]
        %v1191 = vld [vmem:[%s9 + $0x8] sm:$0xff]
        %v1192 = vld [vmem:[%s6] sm:$0xff]
        %v1193 = vld [vmem:[%s6 + $0x8] sm:$0xff]
        %v1194 = vld [vmem:[#allocation2] sm:$0xff]
        %v1195 = vld [vmem:[#allocation2 + $0x8] sm:$0xff]
        %v1196 = vld [vmem:[#allocation2 + $0x10] sm:$0xff]
        %v1197 = vld [vmem:[#allocation2 + $0x18] sm:$0xff]
        %s1198 = scalar_lea.vmem %s6, 16
        %v1199 = vld [vmem:[%s1198] sm:$0xff]
        %v1200 = vld [vmem:[%s1198 + $0x8] sm:$0xff]
        %1205 = vrot.lane.b32.xlu0 %v1194, 127
        %v1206 = vpop.permute.xlu0 %1205
        %1207 = vrot.lane.b32.xlu0 %v1195, 127
        %v1208 = vpop.permute.xlu0 %1207
        %1209 = vrot.lane.b32.xlu0 %v1196, 127
        %v1210 = vpop.permute.xlu0 %1209
        %1211 = vrot.lane.b32.xlu0 %v1197, 127
        %v1212 = vpop.permute.xlu0 %1211
        %v1218 = vsel %vm809, %v1199, 0
        %v1221 = vsel %vm809, %v1200, 0
        %1223 = vmatpush.msra.mxu0 0.0
        %1224 = vmatpush.msra.mxu0 0.0
        %1225 = vmatpush.msra.mxu0 0.0
        %1226 = vmatpush.msra.mxu0 0.0
        %1227 = vmatpush.msra.mxu0 0.0
        %1228 = vmatpush.msra.mxu0 0.0
        %1229 = vmatpush.msra.mxu0 0.0
        %1230 = vmatpush.msra.mxu0 0.0
        %1231 = vmatpush.msra.mxu0 0.0
        %1232 = vmatpush.msra.mxu0 0.0
        %1233 = vmatpush.msra.mxu0 0.0
        %1234 = vmatpush.msra.mxu0 0.0
        %1235 = vmatpush.msra.mxu0 %v1212
        %1236 = vmatpush.msra.mxu0 %v1210
        %1237 = vmatpush.msra.mxu0 %v1208
        %1238 = vmatpush.msra.mxu0 %v1206
        %1239 = vmatmul.f32.gmra.mxu0 %v1218
        %v1240 = vpop.f32.mrf.mxu0
        %v1241 = vadd.f32 0.0, %v1240
        %1242 = vmatmul.f32.gmra.mxu0 %v1221
        %v1243 = vpop.f32.mrf.mxu0
        %v1244 = vadd.f32 0.0, %v1243
        %1245 = vdwg.mxu0
        %v1247 = vsel %vm809, %v1192, 0
        %v1250 = vsel %vm809, %v1193, 0
        %1252 = vmatpush.msra.mxu0 0.0
        %1253 = vmatpush.msra.mxu0 0.0
        %1254 = vmatpush.msra.mxu0 0.0
        %1255 = vmatpush.msra.mxu0 0.0
        %1256 = vmatpush.msra.mxu0 0.0
        %1257 = vmatpush.msra.mxu0 0.0
        %1258 = vmatpush.msra.mxu0 0.0
        %1259 = vmatpush.msra.mxu0 0.0
        %1260 = vmatpush.msra.mxu0 0.0
        %1261 = vmatpush.msra.mxu0 0.0
        %1262 = vmatpush.msra.mxu0 0.0
        %1263 = vmatpush.msra.mxu0 0.0
        %1264 = vmatpush.msra.mxu0 %v1197
        %1265 = vmatpush.msra.mxu0 %v1196
        %1266 = vmatpush.msra.mxu0 %v1195
        %1267 = vmatpush.msra.mxu0 %v1194
        %1268 = vmatmul.f32.gmra.mxu0 %v1247
        %v1269 = vpop.f32.mrf.mxu0
        %v1270 = vadd.f32 %v1241, %v1269
        %1271 = vmatmul.f32.gmra.mxu0 %v1250
        %v1272 = vpop.f32.mrf.mxu0
        %v1273 = vadd.f32 %v1244, %v1272
        %1274 = vdwg.mxu0
        %s1275 = scalar_lea.vmem %s6, 32
        %v1276 = vld [vmem:[%s1275] sm:$0xff]
        %v1277 = vld [vmem:[%s1275 + $0x8] sm:$0xff]
        %1278 = vrot.lane.b32.xlu0 %v1194, 126
        %v1279 = vpop.permute.xlu0 %1278
        %1280 = vrot.lane.b32.xlu0 %v1195, 126
        %v1281 = vpop.permute.xlu0 %1280
        %1282 = vrot.lane.b32.xlu0 %v1196, 126
        %v1283 = vpop.permute.xlu0 %1282
        %1284 = vrot.lane.b32.xlu0 %v1197, 126
        %v1285 = vpop.permute.xlu0 %1284
        %v1291 = vsel %vm809, %v1276, 0
        %v1294 = vsel %vm809, %v1277, 0
        %1296 = vmatpush.msra.mxu0 0.0
        %1297 = vmatpush.msra.mxu0 0.0
        %1298 = vmatpush.msra.mxu0 0.0
        %1299 = vmatpush.msra.mxu0 0.0
        %1300 = vmatpush.msra.mxu0 0.0
        %1301 = vmatpush.msra.mxu0 0.0
        %1302 = vmatpush.msra.mxu0 0.0
        %1303 = vmatpush.msra.mxu0 0.0
        %1304 = vmatpush.msra.mxu0 0.0
        %1305 = vmatpush.msra.mxu0 0.0
        %1306 = vmatpush.msra.mxu0 0.0
        %1307 = vmatpush.msra.mxu0 0.0
        %1308 = vmatpush.msra.mxu0 %v1285
        %1309 = vmatpush.msra.mxu0 %v1283
        %1310 = vmatpush.msra.mxu0 %v1281
        %1311 = vmatpush.msra.mxu0 %v1279
        %1312 = vmatmul.f32.gmra.mxu0 %v1291
        %v1313 = vpop.f32.mrf.mxu0
        %v1314 = vadd.f32 0.0, %v1313
        %1315 = vmatmul.f32.gmra.mxu0 %v1294
        %v1316 = vpop.f32.mrf.mxu0
        %v1317 = vadd.f32 0.0, %v1316
        %1318 = vdwg.mxu0
        %v1319 = vadd.f32 %v1270, %v1314
        %v1320 = vadd.f32 %v1273, %v1317
        %s1321 = scalar_lea.vmem %s6, 48
        %v1322 = vld [vmem:[%s1321] sm:$0xff]
        %v1323 = vld [vmem:[%s1321 + $0x8] sm:$0xff]
        %1324 = vrot.lane.b32.xlu0 %v1194, 118
        %v1325 = vpop.permute.xlu0 %1324
        %1326 = vrot.lane.b32.xlu0 %v1195, 118
        %v1327 = vpop.permute.xlu0 %1326
        %1328 = vrot.lane.b32.xlu0 %v1196, 118
        %v1329 = vpop.permute.xlu0 %1328
        %1330 = vrot.lane.b32.xlu0 %v1197, 118
        %v1331 = vpop.permute.xlu0 %1330
        %v1337 = vsel %vm809, %v1322, 0
        %v1340 = vsel %vm809, %v1323, 0
        %1342 = vmatpush.msra.mxu0 0.0
        %1343 = vmatpush.msra.mxu0 0.0
        %1344 = vmatpush.msra.mxu0 0.0
        %1345 = vmatpush.msra.mxu0 0.0
        %1346 = vmatpush.msra.mxu0 0.0
        %1347 = vmatpush.msra.mxu0 0.0
        %1348 = vmatpush.msra.mxu0 0.0
        %1349 = vmatpush.msra.mxu0 0.0
        %1350 = vmatpush.msra.mxu0 0.0
        %1351 = vmatpush.msra.mxu0 0.0
        %1352 = vmatpush.msra.mxu0 0.0
        %1353 = vmatpush.msra.mxu0 0.0
        %1354 = vmatpush.msra.mxu0 %v1331
        %1355 = vmatpush.msra.mxu0 %v1329
        %1356 = vmatpush.msra.mxu0 %v1327
        %1357 = vmatpush.msra.mxu0 %v1325
        %1358 = vmatmul.f32.gmra.mxu0 %v1337
        %v1359 = vpop.f32.mrf.mxu0
        %v1360 = vadd.f32 0.0, %v1359
        %1361 = vmatmul.f32.gmra.mxu0 %v1340
        %v1362 = vpop.f32.mrf.mxu0
        %v1363 = vadd.f32 0.0, %v1362
        %1364 = vdwg.mxu0
        %v1365 = vadd.f32 %v1319, %v1360
        %v1366 = vadd.f32 %v1320, %v1363
        %s1367 = scalar_lea.vmem %s6, 64
        %v1368 = vld [vmem:[%s1367] sm:$0xff]
        %v1369 = vld [vmem:[%s1367 + $0x8] sm:$0xff]
        %1370 = vrot.lane.b32.xlu0 %v1194, 117
        %v1371 = vpop.permute.xlu0 %1370
        %1372 = vrot.lane.b32.xlu0 %v1195, 117
        %v1373 = vpop.permute.xlu0 %1372
        %1374 = vrot.lane.b32.xlu0 %v1196, 117
        %v1375 = vpop.permute.xlu0 %1374
        %1376 = vrot.lane.b32.xlu0 %v1197, 117
        %v1377 = vpop.permute.xlu0 %1376
        %v1383 = vsel %vm809, %v1368, 0
        %v1386 = vsel %vm809, %v1369, 0
        %1388 = vmatpush.msra.mxu0 0.0
        %1389 = vmatpush.msra.mxu0 0.0
        %1390 = vmatpush.msra.mxu0 0.0
        %1391 = vmatpush.msra.mxu0 0.0
        %1392 = vmatpush.msra.mxu0 0.0
        %1393 = vmatpush.msra.mxu0 0.0
        %1394 = vmatpush.msra.mxu0 0.0
        %1395 = vmatpush.msra.mxu0 0.0
        %1396 = vmatpush.msra.mxu0 0.0
        %1397 = vmatpush.msra.mxu0 0.0
        %1398 = vmatpush.msra.mxu0 0.0
        %1399 = vmatpush.msra.mxu0 0.0
        %1400 = vmatpush.msra.mxu0 %v1377
        %1401 = vmatpush.msra.mxu0 %v1375
        %1402 = vmatpush.msra.mxu0 %v1373
        %1403 = vmatpush.msra.mxu0 %v1371
        %1404 = vmatmul.f32.gmra.mxu0 %v1383
        %v1405 = vpop.f32.mrf.mxu0
        %v1406 = vadd.f32 0.0, %v1405
        %1407 = vmatmul.f32.gmra.mxu0 %v1386
        %v1408 = vpop.f32.mrf.mxu0
        %v1409 = vadd.f32 0.0, %v1408
        %1410 = vdwg.mxu0
        %v1411 = vadd.f32 %v1365, %v1406
        %v1412 = vadd.f32 %v1366, %v1409
        %s1413 = scalar_lea.vmem %s6, 80
        %v1414 = vld [vmem:[%s1413] sm:$0xff]
        %v1415 = vld [vmem:[%s1413 + $0x8] sm:$0xff]
        %1416 = vrot.lane.b32.xlu0 %v1194, 116
        %v1417 = vpop.permute.xlu0 %1416
        %1418 = vrot.lane.b32.xlu0 %v1195, 116
        %v1419 = vpop.permute.xlu0 %1418
        %1420 = vrot.lane.b32.xlu0 %v1196, 116
        %v1421 = vpop.permute.xlu0 %1420
        %1422 = vrot.lane.b32.xlu0 %v1197, 116
        %v1423 = vpop.permute.xlu0 %1422
        %v1429 = vsel %vm809, %v1414, 0
        %v1432 = vsel %vm809, %v1415, 0
        %1434 = vmatpush.msra.mxu0 0.0
        %1435 = vmatpush.msra.mxu0 0.0
        %1436 = vmatpush.msra.mxu0 0.0
        %1437 = vmatpush.msra.mxu0 0.0
        %1438 = vmatpush.msra.mxu0 0.0
        %1439 = vmatpush.msra.mxu0 0.0
        %1440 = vmatpush.msra.mxu0 0.0
        %1441 = vmatpush.msra.mxu0 0.0
        %1442 = vmatpush.msra.mxu0 0.0
        %1443 = vmatpush.msra.mxu0 0.0
        %1444 = vmatpush.msra.mxu0 0.0
        %1445 = vmatpush.msra.mxu0 0.0
        %1446 = vmatpush.msra.mxu0 %v1423
        %1447 = vmatpush.msra.mxu0 %v1421
        %1448 = vmatpush.msra.mxu0 %v1419
        %1449 = vmatpush.msra.mxu0 %v1417
        %1450 = vmatmul.f32.gmra.mxu0 %v1429
        %v1451 = vpop.f32.mrf.mxu0
        %v1452 = vadd.f32 0.0, %v1451
        %1453 = vmatmul.f32.gmra.mxu0 %v1432
        %v1454 = vpop.f32.mrf.mxu0
        %v1455 = vadd.f32 0.0, %v1454
        %1456 = vdwg.mxu0
        %v1457 = vadd.f32 %v1411, %v1452
        %v1458 = vadd.f32 %v1412, %v1455
        %s1459 = scalar_lea.vmem %s6, 96
        %v1460 = vld [vmem:[%s1459] sm:$0xff]
        %v1461 = vld [vmem:[%s1459 + $0x8] sm:$0xff]
        %1462 = vrot.lane.b32.xlu0 %v1194, 108
        %v1463 = vpop.permute.xlu0 %1462
        %1464 = vrot.lane.b32.xlu0 %v1195, 108
        %v1465 = vpop.permute.xlu0 %1464
        %1466 = vrot.lane.b32.xlu0 %v1196, 108
        %v1467 = vpop.permute.xlu0 %1466
        %1468 = vrot.lane.b32.xlu0 %v1197, 108
        %v1469 = vpop.permute.xlu0 %1468
        %v1475 = vsel %vm809, %v1460, 0
        %v1478 = vsel %vm809, %v1461, 0
        %1480 = vmatpush.msra.mxu0 0.0
        %1481 = vmatpush.msra.mxu0 0.0
        %1482 = vmatpush.msra.mxu0 0.0
        %1483 = vmatpush.msra.mxu0 0.0
        %1484 = vmatpush.msra.mxu0 0.0
        %1485 = vmatpush.msra.mxu0 0.0
        %1486 = vmatpush.msra.mxu0 0.0
        %1487 = vmatpush.msra.mxu0 0.0
        %1488 = vmatpush.msra.mxu0 0.0
        %1489 = vmatpush.msra.mxu0 0.0
        %1490 = vmatpush.msra.mxu0 0.0
        %1491 = vmatpush.msra.mxu0 0.0
        %1492 = vmatpush.msra.mxu0 %v1469
        %1493 = vmatpush.msra.mxu0 %v1467
        %1494 = vmatpush.msra.mxu0 %v1465
        %1495 = vmatpush.msra.mxu0 %v1463
        %1496 = vmatmul.f32.gmra.mxu0 %v1475
        %v1497 = vpop.f32.mrf.mxu0
        %v1498 = vadd.f32 0.0, %v1497
        %1499 = vmatmul.f32.gmra.mxu0 %v1478
        %v1500 = vpop.f32.mrf.mxu0
        %v1501 = vadd.f32 0.0, %v1500
        %1502 = vdwg.mxu0
        %v1503 = vadd.f32 %v1457, %v1498
        %v1504 = vadd.f32 %v1458, %v1501
        %s1505 = scalar_lea.vmem %s6, 112
        %v1506 = vld [vmem:[%s1505] sm:$0xff]
        %v1507 = vld [vmem:[%s1505 + $0x8] sm:$0xff]
        %1508 = vrot.lane.b32.xlu0 %v1194, 107
        %v1509 = vpop.permute.xlu0 %1508
        %1510 = vrot.lane.b32.xlu0 %v1195, 107
        %v1511 = vpop.permute.xlu0 %1510
        %1512 = vrot.lane.b32.xlu0 %v1196, 107
        %v1513 = vpop.permute.xlu0 %1512
        %1514 = vrot.lane.b32.xlu0 %v1197, 107
        %v1515 = vpop.permute.xlu0 %1514
        %v1521 = vsel %vm809, %v1506, 0
        %v1524 = vsel %vm809, %v1507, 0
        %1526 = vmatpush.msra.mxu0 0.0
        %1527 = vmatpush.msra.mxu0 0.0
        %1528 = vmatpush.msra.mxu0 0.0
        %1529 = vmatpush.msra.mxu0 0.0
        %1530 = vmatpush.msra.mxu0 0.0
        %1531 = vmatpush.msra.mxu0 0.0
        %1532 = vmatpush.msra.mxu0 0.0
        %1533 = vmatpush.msra.mxu0 0.0
        %1534 = vmatpush.msra.mxu0 0.0
        %1535 = vmatpush.msra.mxu0 0.0
        %1536 = vmatpush.msra.mxu0 0.0
        %1537 = vmatpush.msra.mxu0 0.0
        %1538 = vmatpush.msra.mxu0 %v1515
        %1539 = vmatpush.msra.mxu0 %v1513
        %1540 = vmatpush.msra.mxu0 %v1511
        %1541 = vmatpush.msra.mxu0 %v1509
        %1542 = vmatmul.f32.gmra.mxu0 %v1521
        %v1543 = vpop.f32.mrf.mxu0
        %v1544 = vadd.f32 0.0, %v1543
        %1545 = vmatmul.f32.gmra.mxu0 %v1524
        %v1546 = vpop.f32.mrf.mxu0
        %v1547 = vadd.f32 0.0, %v1546
        %1548 = vdwg.mxu0
        %v1549 = vadd.f32 %v1503, %v1544
        %v1550 = vadd.f32 %v1504, %v1547
        %s1551 = scalar_lea.vmem %s6, 128
        %v1552 = vld [vmem:[%s1551] sm:$0xff]
        %v1553 = vld [vmem:[%s1551 + $0x8] sm:$0xff]
        %1554 = vrot.lane.b32.xlu0 %v1194, 106
        %v1555 = vpop.permute.xlu0 %1554
        %1556 = vrot.lane.b32.xlu0 %v1195, 106
        %v1557 = vpop.permute.xlu0 %1556
        %1558 = vrot.lane.b32.xlu0 %v1196, 106
        %v1559 = vpop.permute.xlu0 %1558
        %1560 = vrot.lane.b32.xlu0 %v1197, 106
        %v1561 = vpop.permute.xlu0 %1560
        %v1567 = vsel %vm809, %v1552, 0
        %v1570 = vsel %vm809, %v1553, 0
        %1572 = vmatpush.msra.mxu0 0.0
        %1573 = vmatpush.msra.mxu0 0.0
        %1574 = vmatpush.msra.mxu0 0.0
        %1575 = vmatpush.msra.mxu0 0.0
        %1576 = vmatpush.msra.mxu0 0.0
        %1577 = vmatpush.msra.mxu0 0.0
        %1578 = vmatpush.msra.mxu0 0.0
        %1579 = vmatpush.msra.mxu0 0.0
        %1580 = vmatpush.msra.mxu0 0.0
        %1581 = vmatpush.msra.mxu0 0.0
        %1582 = vmatpush.msra.mxu0 0.0
        %1583 = vmatpush.msra.mxu0 0.0
        %1584 = vmatpush.msra.mxu0 %v1561
        %1585 = vmatpush.msra.mxu0 %v1559
        %1586 = vmatpush.msra.mxu0 %v1557
        %1587 = vmatpush.msra.mxu0 %v1555
        %1588 = vmatmul.f32.gmra.mxu0 %v1567
        %v1589 = vpop.f32.mrf.mxu0
        %v1590 = vadd.f32 0.0, %v1589
        %1591 = vmatmul.f32.gmra.mxu0 %v1570
        %v1592 = vpop.f32.mrf.mxu0
        %v1593 = vadd.f32 0.0, %v1592
        %1594 = vdwg.mxu0
        %v1595 = vadd.f32 %v1549, %v1590
        %v1596 = vadd.f32 %v1550, %v1593
        %1598 = vset.pattern.permute.xlu0 0
        %1599 = vperm.xlu0 %1598, %v1178
        %v1600 = vpop.permute.xlu0 %1599
        %1603 = vset.pattern.permute.xlu0 0
        %1604 = vperm.xlu0 %1603, %v1181
        %v1605 = vpop.permute.xlu0 %1604
        %v1607 = vadd.f32 %v1595, %v1600
        %v1608 = vadd.f32 %v1596, %v1605
        %v1610 = vperm.slane %v1189, 0
        %v1612 = vmul.f32 %v1607, %v1610
        %v1613 = vmul.f32 %v1608, %v1610
        %vm1614 = vcmask 654336
        %v1615 = vsel %vm1614, %v1612, 0.0
        %1616 = vadd.xlane.f32.xlu0 %v1615
        %v1617 = vpop.xlane.xlu0 %1616
        %v1618 = vsel %vm1614, %v1613, 0.0
        %1619 = vadd.xlane.f32.xlu0 %v1618
        %v1620 = vpop.xlane.xlu0 %1619
        %v1621 = vmul.f32 %v1617, 0.015625
        %v1622 = vmul.f32 %v1620, 0.015625
        %v1623 = vsub.f32 %v1607, %v1621
        %v1624 = vsub.f32 %v1608, %v1622
        %v1625 = vmul.f32 %v1623, %v1610
        %v1626 = vmul.f32 %v1624, %v1610
        %v1627 = vmul.f32 %v1625, %v1625
        %v1628 = vmul.f32 %v1626, %v1626
        %v1629 = vsel %vm1614, %v1627, 0.0
        %1630 = vadd.xlane.f32.xlu0 %v1629
        %v1631 = vpop.xlane.xlu0 %1630
        %v1632 = vsel %vm1614, %v1628, 0.0
        %1633 = vadd.xlane.f32.xlu0 %v1632
        %v1634 = vpop.xlane.xlu0 %1633
        %v1635 = vmul.f32 %v1631, 0.015625
        %v1636 = vmul.f32 %v1634, 0.015625
        %v1637 = vadd.f32 %v1635, 1e-05
        %v1638 = vadd.f32 %v1636, 1e-05
        %v1639 = vrsqrt.pop %v1637
        %v1640 = vmul.f32 %v1639, %v1637
        %v1641 = vmul.f32 %v1640, %v1639
        %v1642 = vmul.f32 0.5, %v1641
        %v1643 = vsub.f32 1.5, %v1642
        %v1644 = vmul.f32 %v1639, %v1643
        %vm1645 = vweird.f32 %v1637
        %vm1646 = vweird.f32 %v1639
        %vm1647 = vmor %vm1645, %vm1646
        %v1648 = vsel %vm1647, %v1639, %v1644
        %v1649 = vrsqrt.pop %v1638
        %v1650 = vmul.f32 %v1649, %v1638
        %v1651 = vmul.f32 %v1650, %v1649
        %v1652 = vmul.f32 0.5, %v1651
        %v1653 = vsub.f32 1.5, %v1652
        %v1654 = vmul.f32 %v1649, %v1653
        %vm1655 = vweird.f32 %v1638
        %vm1656 = vweird.f32 %v1649
        %vm1657 = vmor %vm1655, %vm1656
        %v1658 = vsel %vm1657, %v1649, %v1654
        %v1659 = vmul.f32 %v1623, %v1648
        %v1660 = vmul.f32 %v1624, %v1658
        %1662 = vset.pattern.permute.xlu0 2
        %1663 = vperm.xlu0 %1662, %v1190
        %v1664 = vpop.permute.xlu0 %1663
        %1667 = vset.pattern.permute.xlu0 2
        %1668 = vperm.xlu0 %1667, %v1191
        %v1669 = vpop.permute.xlu0 %1668
        %v1671 = vmul.f32 %v1659, %v1664
        %v1672 = vmul.f32 %v1660, %v1669
        %1673 = vset.pattern.permute.xlu0 3
        %1674 = vperm.xlu0 %1673, %v1190
        %v1675 = vpop.permute.xlu0 %1674
        %1677 = vset.pattern.permute.xlu0 3
        %1678 = vperm.xlu0 %1677, %v1191
        %v1679 = vpop.permute.xlu0 %1678
        %v1681 = vadd.f32 %v1671, %v1675
        %v1682 = vadd.f32 %v1672, %v1679
        %vm1683 = vcmp.ge.f32.partialorder %v1681, 0.0
        %vm1684 = vcmp.ge.f32.partialorder %v1682, 0.0
        %v1685 = vmul.f32 %v1681, 0.01
        %v1686 = vmul.f32 %v1682, 0.01
        %v1687 = vsel %vm1683, %v1681, %v1685
        %v1688 = vsel %vm1684, %v1682, %v1686
        %v1689 = vmul.f32 %v1687, %v1610
        %v1690 = vmul.f32 %v1688, %v1610
        %1693 = vrot.lane.b32.xlu0 %v1689, 11
        %v1694 = vpop.permute.xlu0 %1693
        %1695 = vrot.lane.b32.xlu0 %v1690, 11
        %v1696 = vpop.permute.xlu0 %1695
        %vm1699 = vcmask 744536
        %1700 = vst.msk [vmem:[#allocation2] sm:$0xff] %vm1699, %v1694
        %1701 = vst.msk [vmem:[#allocation2 + $0x8] sm:$0xff] %vm1699, %v1696
        %v1702 = vld [vmem:[%s9 + $0x10] sm:$0xff]
        %v1703 = vld [vmem:[%s9 + $0x18] sm:$0xff]
        %v1704 = vld [vmem:[%s7] sm:$0xff]
        %v1705 = vld [vmem:[%s7 + $0x8] sm:$0xff]
        %v1706 = vld [vmem:[#allocation2] sm:$0xff]
        %v1707 = vld [vmem:[#allocation2 + $0x8] sm:$0xff]
        %s1708 = scalar_lea.vmem %s7, 16
        %v1709 = vld [vmem:[%s1708] sm:$0xff]
        %v1710 = vld [vmem:[%s1708 + $0x8] sm:$0xff]
        %1713 = vrot.lane.b32.xlu0 %v1706, 127
        %v1714 = vpop.permute.xlu0 %1713
        %1715 = vrot.lane.b32.xlu0 %v1707, 127
        %v1716 = vpop.permute.xlu0 %1715
        %v1720 = vsel %vm884, %v1709, 0
        %v1723 = vsel %vm884, %v1710, 0
        %1725 = vmatpush.msra.mxu0 0.0
        %1726 = vmatpush.msra.mxu0 0.0
        %1727 = vmatpush.msra.mxu0 0.0
        %1728 = vmatpush.msra.mxu0 0.0
        %1729 = vmatpush.msra.mxu0 0.0
        %1730 = vmatpush.msra.mxu0 0.0
        %1731 = vmatpush.msra.mxu0 0.0
        %1732 = vmatpush.msra.mxu0 0.0
        %1733 = vmatpush.msra.mxu0 0.0
        %1734 = vmatpush.msra.mxu0 0.0
        %1735 = vmatpush.msra.mxu0 0.0
        %1736 = vmatpush.msra.mxu0 0.0
        %1737 = vmatpush.msra.mxu0 0.0
        %1738 = vmatpush.msra.mxu0 0.0
        %1739 = vmatpush.msra.mxu0 %v1716
        %1740 = vmatpush.msra.mxu0 %v1714
        %1741 = vmatmul.f32.gmra.mxu0 %v1720
        %v1742 = vpop.f32.mrf.mxu0
        %v1743 = vadd.f32 0.0, %v1742
        %1744 = vmatmul.f32.gmra.mxu0 %v1723
        %v1745 = vpop.f32.mrf.mxu0
        %v1746 = vadd.f32 0.0, %v1745
        %1747 = vdwg.mxu0
        %v1749 = vsel %vm884, %v1704, 0
        %v1752 = vsel %vm884, %v1705, 0
        %1754 = vmatpush.msra.mxu0 0.0
        %1755 = vmatpush.msra.mxu0 0.0
        %1756 = vmatpush.msra.mxu0 0.0
        %1757 = vmatpush.msra.mxu0 0.0
        %1758 = vmatpush.msra.mxu0 0.0
        %1759 = vmatpush.msra.mxu0 0.0
        %1760 = vmatpush.msra.mxu0 0.0
        %1761 = vmatpush.msra.mxu0 0.0
        %1762 = vmatpush.msra.mxu0 0.0
        %1763 = vmatpush.msra.mxu0 0.0
        %1764 = vmatpush.msra.mxu0 0.0
        %1765 = vmatpush.msra.mxu0 0.0
        %1766 = vmatpush.msra.mxu0 0.0
        %1767 = vmatpush.msra.mxu0 0.0
        %1768 = vmatpush.msra.mxu0 %v1707
        %1769 = vmatpush.msra.mxu0 %v1706
        %1770 = vmatmul.f32.gmra.mxu0 %v1749
        %v1771 = vpop.f32.mrf.mxu0
        %v1772 = vadd.f32 %v1743, %v1771
        %1773 = vmatmul.f32.gmra.mxu0 %v1752
        %v1774 = vpop.f32.mrf.mxu0
        %v1775 = vadd.f32 %v1746, %v1774
        %1776 = vdwg.mxu0
        %s1777 = scalar_lea.vmem %s7, 32
        %v1778 = vld [vmem:[%s1777] sm:$0xff]
        %v1779 = vld [vmem:[%s1777 + $0x8] sm:$0xff]
        %1780 = vrot.lane.b32.xlu0 %v1706, 126
        %v1781 = vpop.permute.xlu0 %1780
        %1782 = vrot.lane.b32.xlu0 %v1707, 126
        %v1783 = vpop.permute.xlu0 %1782
        %v1787 = vsel %vm884, %v1778, 0
        %v1790 = vsel %vm884, %v1779, 0
        %1792 = vmatpush.msra.mxu0 0.0
        %1793 = vmatpush.msra.mxu0 0.0
        %1794 = vmatpush.msra.mxu0 0.0
        %1795 = vmatpush.msra.mxu0 0.0
        %1796 = vmatpush.msra.mxu0 0.0
        %1797 = vmatpush.msra.mxu0 0.0
        %1798 = vmatpush.msra.mxu0 0.0
        %1799 = vmatpush.msra.mxu0 0.0
        %1800 = vmatpush.msra.mxu0 0.0
        %1801 = vmatpush.msra.mxu0 0.0
        %1802 = vmatpush.msra.mxu0 0.0
        %1803 = vmatpush.msra.mxu0 0.0
        %1804 = vmatpush.msra.mxu0 0.0
        %1805 = vmatpush.msra.mxu0 0.0
        %1806 = vmatpush.msra.mxu0 %v1783
        %1807 = vmatpush.msra.mxu0 %v1781
        %1808 = vmatmul.f32.gmra.mxu0 %v1787
        %v1809 = vpop.f32.mrf.mxu0
        %v1810 = vadd.f32 0.0, %v1809
        %1811 = vmatmul.f32.gmra.mxu0 %v1790
        %v1812 = vpop.f32.mrf.mxu0
        %v1813 = vadd.f32 0.0, %v1812
        %1814 = vdwg.mxu0
        %v1815 = vadd.f32 %v1772, %v1810
        %v1816 = vadd.f32 %v1775, %v1813
        %s1817 = scalar_lea.vmem %s7, 48
        %v1818 = vld [vmem:[%s1817] sm:$0xff]
        %v1819 = vld [vmem:[%s1817 + $0x8] sm:$0xff]
        %1820 = vrot.lane.b32.xlu0 %v1706, 118
        %v1821 = vpop.permute.xlu0 %1820
        %1822 = vrot.lane.b32.xlu0 %v1707, 118
        %v1823 = vpop.permute.xlu0 %1822
        %v1827 = vsel %vm884, %v1818, 0
        %v1830 = vsel %vm884, %v1819, 0
        %1832 = vmatpush.msra.mxu0 0.0
        %1833 = vmatpush.msra.mxu0 0.0
        %1834 = vmatpush.msra.mxu0 0.0
        %1835 = vmatpush.msra.mxu0 0.0
        %1836 = vmatpush.msra.mxu0 0.0
        %1837 = vmatpush.msra.mxu0 0.0
        %1838 = vmatpush.msra.mxu0 0.0
        %1839 = vmatpush.msra.mxu0 0.0
        %1840 = vmatpush.msra.mxu0 0.0
        %1841 = vmatpush.msra.mxu0 0.0
        %1842 = vmatpush.msra.mxu0 0.0
        %1843 = vmatpush.msra.mxu0 0.0
        %1844 = vmatpush.msra.mxu0 0.0
        %1845 = vmatpush.msra.mxu0 0.0
        %1846 = vmatpush.msra.mxu0 %v1823
        %1847 = vmatpush.msra.mxu0 %v1821
        %1848 = vmatmul.f32.gmra.mxu0 %v1827
        %v1849 = vpop.f32.mrf.mxu0
        %v1850 = vadd.f32 0.0, %v1849
        %1851 = vmatmul.f32.gmra.mxu0 %v1830
        %v1852 = vpop.f32.mrf.mxu0
        %v1853 = vadd.f32 0.0, %v1852
        %1854 = vdwg.mxu0
        %v1855 = vadd.f32 %v1815, %v1850
        %v1856 = vadd.f32 %v1816, %v1853
        %s1857 = scalar_lea.vmem %s7, 64
        %v1858 = vld [vmem:[%s1857] sm:$0xff]
        %v1859 = vld [vmem:[%s1857 + $0x8] sm:$0xff]
        %1860 = vrot.lane.b32.xlu0 %v1706, 117
        %v1861 = vpop.permute.xlu0 %1860
        %1862 = vrot.lane.b32.xlu0 %v1707, 117
        %v1863 = vpop.permute.xlu0 %1862
        %v1867 = vsel %vm884, %v1858, 0
        %v1870 = vsel %vm884, %v1859, 0
        %1872 = vmatpush.msra.mxu0 0.0
        %1873 = vmatpush.msra.mxu0 0.0
        %1874 = vmatpush.msra.mxu0 0.0
        %1875 = vmatpush.msra.mxu0 0.0
        %1876 = vmatpush.msra.mxu0 0.0
        %1877 = vmatpush.msra.mxu0 0.0
        %1878 = vmatpush.msra.mxu0 0.0
        %1879 = vmatpush.msra.mxu0 0.0
        %1880 = vmatpush.msra.mxu0 0.0
        %1881 = vmatpush.msra.mxu0 0.0
        %1882 = vmatpush.msra.mxu0 0.0
        %1883 = vmatpush.msra.mxu0 0.0
        %1884 = vmatpush.msra.mxu0 0.0
        %1885 = vmatpush.msra.mxu0 0.0
        %1886 = vmatpush.msra.mxu0 %v1863
        %1887 = vmatpush.msra.mxu0 %v1861
        %1888 = vmatmul.f32.gmra.mxu0 %v1867
        %v1889 = vpop.f32.mrf.mxu0
        %v1890 = vadd.f32 0.0, %v1889
        %1891 = vmatmul.f32.gmra.mxu0 %v1870
        %v1892 = vpop.f32.mrf.mxu0
        %v1893 = vadd.f32 0.0, %v1892
        %1894 = vdwg.mxu0
        %v1895 = vadd.f32 %v1855, %v1890
        %v1896 = vadd.f32 %v1856, %v1893
        %s1897 = scalar_lea.vmem %s7, 80
        %v1898 = vld [vmem:[%s1897] sm:$0xff]
        %v1899 = vld [vmem:[%s1897 + $0x8] sm:$0xff]
        %1900 = vrot.lane.b32.xlu0 %v1706, 116
        %v1901 = vpop.permute.xlu0 %1900
        %1902 = vrot.lane.b32.xlu0 %v1707, 116
        %v1903 = vpop.permute.xlu0 %1902
        %v1907 = vsel %vm884, %v1898, 0
        %v1910 = vsel %vm884, %v1899, 0
        %1912 = vmatpush.msra.mxu0 0.0
        %1913 = vmatpush.msra.mxu0 0.0
        %1914 = vmatpush.msra.mxu0 0.0
        %1915 = vmatpush.msra.mxu0 0.0
        %1916 = vmatpush.msra.mxu0 0.0
        %1917 = vmatpush.msra.mxu0 0.0
        %1918 = vmatpush.msra.mxu0 0.0
        %1919 = vmatpush.msra.mxu0 0.0
        %1920 = vmatpush.msra.mxu0 0.0
        %1921 = vmatpush.msra.mxu0 0.0
        %1922 = vmatpush.msra.mxu0 0.0
        %1923 = vmatpush.msra.mxu0 0.0
        %1924 = vmatpush.msra.mxu0 0.0
        %1925 = vmatpush.msra.mxu0 0.0
        %1926 = vmatpush.msra.mxu0 %v1903
        %1927 = vmatpush.msra.mxu0 %v1901
        %1928 = vmatmul.f32.gmra.mxu0 %v1907
        %v1929 = vpop.f32.mrf.mxu0
        %v1930 = vadd.f32 0.0, %v1929
        %1931 = vmatmul.f32.gmra.mxu0 %v1910
        %v1932 = vpop.f32.mrf.mxu0
        %v1933 = vadd.f32 0.0, %v1932
        %1934 = vdwg.mxu0
        %v1935 = vadd.f32 %v1895, %v1930
        %v1936 = vadd.f32 %v1896, %v1933
        %s1937 = scalar_lea.vmem %s7, 96
        %v1938 = vld [vmem:[%s1937] sm:$0xff]
        %v1939 = vld [vmem:[%s1937 + $0x8] sm:$0xff]
        %1940 = vrot.lane.b32.xlu0 %v1706, 108
        %v1941 = vpop.permute.xlu0 %1940
        %1942 = vrot.lane.b32.xlu0 %v1707, 108
        %v1943 = vpop.permute.xlu0 %1942
        %v1947 = vsel %vm884, %v1938, 0
        %v1950 = vsel %vm884, %v1939, 0
        %1952 = vmatpush.msra.mxu0 0.0
        %1953 = vmatpush.msra.mxu0 0.0
        %1954 = vmatpush.msra.mxu0 0.0
        %1955 = vmatpush.msra.mxu0 0.0
        %1956 = vmatpush.msra.mxu0 0.0
        %1957 = vmatpush.msra.mxu0 0.0
        %1958 = vmatpush.msra.mxu0 0.0
        %1959 = vmatpush.msra.mxu0 0.0
        %1960 = vmatpush.msra.mxu0 0.0
        %1961 = vmatpush.msra.mxu0 0.0
        %1962 = vmatpush.msra.mxu0 0.0
        %1963 = vmatpush.msra.mxu0 0.0
        %1964 = vmatpush.msra.mxu0 0.0
        %1965 = vmatpush.msra.mxu0 0.0
        %1966 = vmatpush.msra.mxu0 %v1943
        %1967 = vmatpush.msra.mxu0 %v1941
        %1968 = vmatmul.f32.gmra.mxu0 %v1947
        %v1969 = vpop.f32.mrf.mxu0
        %v1970 = vadd.f32 0.0, %v1969
        %1971 = vmatmul.f32.gmra.mxu0 %v1950
        %v1972 = vpop.f32.mrf.mxu0
        %v1973 = vadd.f32 0.0, %v1972
        %1974 = vdwg.mxu0
        %v1975 = vadd.f32 %v1935, %v1970
        %v1976 = vadd.f32 %v1936, %v1973
        %s1977 = scalar_lea.vmem %s7, 112
        %v1978 = vld [vmem:[%s1977] sm:$0xff]
        %v1979 = vld [vmem:[%s1977 + $0x8] sm:$0xff]
        %1980 = vrot.lane.b32.xlu0 %v1706, 107
        %v1981 = vpop.permute.xlu0 %1980
        %1982 = vrot.lane.b32.xlu0 %v1707, 107
        %v1983 = vpop.permute.xlu0 %1982
        %v1987 = vsel %vm884, %v1978, 0
        %v1990 = vsel %vm884, %v1979, 0
        %1992 = vmatpush.msra.mxu0 0.0
        %1993 = vmatpush.msra.mxu0 0.0
        %1994 = vmatpush.msra.mxu0 0.0
        %1995 = vmatpush.msra.mxu0 0.0
        %1996 = vmatpush.msra.mxu0 0.0
        %1997 = vmatpush.msra.mxu0 0.0
        %1998 = vmatpush.msra.mxu0 0.0
        %1999 = vmatpush.msra.mxu0 0.0
        %2000 = vmatpush.msra.mxu0 0.0
        %2001 = vmatpush.msra.mxu0 0.0
        %2002 = vmatpush.msra.mxu0 0.0
        %2003 = vmatpush.msra.mxu0 0.0
        %2004 = vmatpush.msra.mxu0 0.0
        %2005 = vmatpush.msra.mxu0 0.0
        %2006 = vmatpush.msra.mxu0 %v1983
        %2007 = vmatpush.msra.mxu0 %v1981
        %2008 = vmatmul.f32.gmra.mxu0 %v1987
        %v2009 = vpop.f32.mrf.mxu0
        %v2010 = vadd.f32 0.0, %v2009
        %2011 = vmatmul.f32.gmra.mxu0 %v1990
        %v2012 = vpop.f32.mrf.mxu0
        %v2013 = vadd.f32 0.0, %v2012
        %2014 = vdwg.mxu0
        %v2015 = vadd.f32 %v1975, %v2010
        %v2016 = vadd.f32 %v1976, %v2013
        %s2017 = scalar_lea.vmem %s7, 128
        %v2018 = vld [vmem:[%s2017] sm:$0xff]
        %v2019 = vld [vmem:[%s2017 + $0x8] sm:$0xff]
        %2020 = vrot.lane.b32.xlu0 %v1706, 106
        %v2021 = vpop.permute.xlu0 %2020
        %2022 = vrot.lane.b32.xlu0 %v1707, 106
        %v2023 = vpop.permute.xlu0 %2022
        %v2027 = vsel %vm884, %v2018, 0
        %v2030 = vsel %vm884, %v2019, 0
        %2032 = vmatpush.msra.mxu0 0.0
        %2033 = vmatpush.msra.mxu0 0.0
        %2034 = vmatpush.msra.mxu0 0.0
        %2035 = vmatpush.msra.mxu0 0.0
        %2036 = vmatpush.msra.mxu0 0.0
        %2037 = vmatpush.msra.mxu0 0.0
        %2038 = vmatpush.msra.mxu0 0.0
        %2039 = vmatpush.msra.mxu0 0.0
        %2040 = vmatpush.msra.mxu0 0.0
        %2041 = vmatpush.msra.mxu0 0.0
        %2042 = vmatpush.msra.mxu0 0.0
        %2043 = vmatpush.msra.mxu0 0.0
        %2044 = vmatpush.msra.mxu0 0.0
        %2045 = vmatpush.msra.mxu0 0.0
        %2046 = vmatpush.msra.mxu0 %v2023
        %2047 = vmatpush.msra.mxu0 %v2021
        %2048 = vmatmul.f32.gmra.mxu0 %v2027
        %v2049 = vpop.f32.mrf.mxu0
        %v2050 = vadd.f32 0.0, %v2049
        %2051 = vmatmul.f32.gmra.mxu0 %v2030
        %v2052 = vpop.f32.mrf.mxu0
        %v2053 = vadd.f32 0.0, %v2052
        %2054 = vdwg.mxu0
        %v2055 = vadd.f32 %v2015, %v2050
        %v2056 = vadd.f32 %v2016, %v2053
        %2058 = vset.pattern.permute.xlu0 0
        %2059 = vperm.xlu0 %2058, %v1184
        %v2060 = vpop.permute.xlu0 %2059
        %2063 = vset.pattern.permute.xlu0 0
        %2064 = vperm.xlu0 %2063, %v1187
        %v2065 = vpop.permute.xlu0 %2064
        %v2067 = vadd.f32 %v2055, %v2060
        %v2068 = vadd.f32 %v2056, %v2065
        %v2069 = vmul.f32 %v2067, %v1610
        %v2070 = vmul.f32 %v2068, %v1610
        %v2071 = vsel %vm1614, %v2069, 0.0
        %2072 = vadd.xlane.f32.xlu0 %v2071
        %v2073 = vpop.xlane.xlu0 %2072
        %v2074 = vsel %vm1614, %v2070, 0.0
        %2075 = vadd.xlane.f32.xlu0 %v2074
        %v2076 = vpop.xlane.xlu0 %2075
        %v2077 = vmul.f32 %v2073, 0.015625
        %v2078 = vmul.f32 %v2076, 0.015625
        %v2079 = vsub.f32 %v2067, %v2077
        %v2080 = vsub.f32 %v2068, %v2078
        %v2081 = vmul.f32 %v2079, %v1610
        %v2082 = vmul.f32 %v2080, %v1610
        %v2083 = vmul.f32 %v2081, %v2081
        %v2084 = vmul.f32 %v2082, %v2082
        %v2085 = vsel %vm1614, %v2083, 0.0
        %2086 = vadd.xlane.f32.xlu0 %v2085
        %v2087 = vpop.xlane.xlu0 %2086
        %v2088 = vsel %vm1614, %v2084, 0.0
        %2089 = vadd.xlane.f32.xlu0 %v2088
        %v2090 = vpop.xlane.xlu0 %2089
        %v2091 = vmul.f32 %v2087, 0.015625
        %v2092 = vmul.f32 %v2090, 0.015625
        %v2093 = vadd.f32 %v2091, 1e-05
        %v2094 = vadd.f32 %v2092, 1e-05
        %v2095 = vrsqrt.pop %v2093
        %v2096 = vmul.f32 %v2095, %v2093
        %v2097 = vmul.f32 %v2096, %v2095
        %v2098 = vmul.f32 0.5, %v2097
        %v2099 = vsub.f32 1.5, %v2098
        %v2100 = vmul.f32 %v2095, %v2099
        %vm2101 = vweird.f32 %v2093
        %vm2102 = vweird.f32 %v2095
        %vm2103 = vmor %vm2101, %vm2102
        %v2104 = vsel %vm2103, %v2095, %v2100
        %v2105 = vrsqrt.pop %v2094
        %v2106 = vmul.f32 %v2105, %v2094
        %v2107 = vmul.f32 %v2106, %v2105
        %v2108 = vmul.f32 0.5, %v2107
        %v2109 = vsub.f32 1.5, %v2108
        %v2110 = vmul.f32 %v2105, %v2109
        %vm2111 = vweird.f32 %v2094
        %vm2112 = vweird.f32 %v2105
        %vm2113 = vmor %vm2111, %vm2112
        %v2114 = vsel %vm2113, %v2105, %v2110
        %v2115 = vmul.f32 %v2079, %v2104
        %v2116 = vmul.f32 %v2080, %v2114
        %2118 = vset.pattern.permute.xlu0 2
        %2119 = vperm.xlu0 %2118, %v1702
        %v2120 = vpop.permute.xlu0 %2119
        %2123 = vset.pattern.permute.xlu0 2
        %2124 = vperm.xlu0 %2123, %v1703
        %v2125 = vpop.permute.xlu0 %2124
        %v2127 = vmul.f32 %v2115, %v2120
        %v2128 = vmul.f32 %v2116, %v2125
        %2129 = vset.pattern.permute.xlu0 3
        %2130 = vperm.xlu0 %2129, %v1702
        %v2131 = vpop.permute.xlu0 %2130
        %2133 = vset.pattern.permute.xlu0 3
        %2134 = vperm.xlu0 %2133, %v1703
        %v2135 = vpop.permute.xlu0 %2134
        %v2137 = vadd.f32 %v2127, %v2131
        %v2138 = vadd.f32 %v2128, %v2135
        %vm2139 = vcmp.ge.f32.partialorder %v2137, 0.0
        %vm2140 = vcmp.ge.f32.partialorder %v2138, 0.0
        %v2141 = vmul.f32 %v2137, 0.01
        %v2142 = vmul.f32 %v2138, 0.01
        %v2143 = vsel %vm2139, %v2137, %v2141
        %v2144 = vsel %vm2140, %v2138, %v2142
        %v2145 = vmul.f32 %v2143, %v1610
        %v2146 = vmul.f32 %v2144, %v1610
        %v2147 = vld [vmem:[%s10] sm:$0xff]
        %v2148 = vld [vmem:[%s9] sm:$0xff]
        %2150 = vset.pattern.permute.xlu0 4
        %2151 = vperm.xlu0 %2150, %v2148
        %v2152 = vpop.permute.xlu0 %2151
        %v2155 = vsel %vm884, %v2147, 0
        %2157 = vmatpush.msra.mxu0 0.0
        %2158 = vmatpush.msra.mxu0 0.0
        %2159 = vmatpush.msra.mxu0 0.0
        %2160 = vmatpush.msra.mxu0 0.0
        %2161 = vmatpush.msra.mxu0 0.0
        %2162 = vmatpush.msra.mxu0 0.0
        %2163 = vmatpush.msra.mxu0 0.0
        %2164 = vmatpush.msra.mxu0 0.0
        %2165 = vmatpush.msra.mxu0 0.0
        %2166 = vmatpush.msra.mxu0 0.0
        %2167 = vmatpush.msra.mxu0 0.0
        %2168 = vmatpush.msra.mxu0 0.0
        %2169 = vmatpush.msra.mxu0 0.0
        %2170 = vmatpush.msra.mxu0 0.0
        %2171 = vmatpush.msra.mxu0 %v2146
        %2172 = vmatpush.msra.mxu0 %v2145
        %2173 = vmatmul.f32.gmra.mxu0 %v2155
        %v2174 = vpop.f32.mrf.mxu0
        %v2175 = vadd.f32 %v2152, %v2174
        %2176 = vdwg.mxu0
        %2177 = vst.msk [vmem:[%s739] sm:$0xff] %vm1614, %v2175
        %v2178 = vld [vmem:[%s12] sm:$0xff]
        %v2179 = vld [vmem:[%s12 + $0x8] sm:$0xff]
        %v2180 = vld [vmem:[%s12 + $0x10] sm:$0xff]
        %v2181 = vld [vmem:[%s12 + $0x18] sm:$0xff]
        %v2182 = vld [vmem:[%s17] sm:$0xff]
        %v2183 = vld [vmem:[%s17 + $0x8] sm:$0xff]
        %v2184 = vld [vmem:[%s17 + $0x10] sm:$0xff]
        %v2185 = vld [vmem:[%s17 + $0x18] sm:$0xff]
        %2187 = vset.pattern.permute.xlu0 0
        %2188 = vperm.xlu0 %2187, %v2182
        %v2189 = vpop.permute.xlu0 %2188
        %2192 = vset.pattern.permute.xlu0 0
        %2193 = vperm.xlu0 %2192, %v2183
        %v2194 = vpop.permute.xlu0 %2193
        %2197 = vset.pattern.permute.xlu0 0
        %2198 = vperm.xlu0 %2197, %v2184
        %v2199 = vpop.permute.xlu0 %2198
        %2202 = vset.pattern.permute.xlu0 0
        %2203 = vperm.xlu0 %2202, %v2185
        %v2204 = vpop.permute.xlu0 %2203
        %v2207 = vsel %vm884, %v2178, 0
        %v2210 = vsel %vm884, %v2179, 0
        %v2213 = vsel %vm884, %v2180, 0
        %v2216 = vsel %vm884, %v2181, 0
        %2218 = vmatpush.msra.mxu0 0.0
        %2219 = vmatpush.msra.mxu0 0.0
        %2220 = vmatpush.msra.mxu0 0.0
        %2221 = vmatpush.msra.mxu0 0.0
        %2222 = vmatpush.msra.mxu0 0.0
        %2223 = vmatpush.msra.mxu0 0.0
        %2224 = vmatpush.msra.mxu0 0.0
        %2225 = vmatpush.msra.mxu0 0.0
        %2226 = vmatpush.msra.mxu0 0.0
        %2227 = vmatpush.msra.mxu0 0.0
        %2228 = vmatpush.msra.mxu0 0.0
        %2229 = vmatpush.msra.mxu0 0.0
        %2230 = vmatpush.msra.mxu0 0.0
        %2231 = vmatpush.msra.mxu0 0.0
        %2232 = vmatpush.msra.mxu0 %v2146
        %2233 = vmatpush.msra.mxu0 %v2145
        %2234 = vmatmul.f32.gmra.mxu0 %v2207
        %v2235 = vpop.f32.mrf.mxu0
        %v2236 = vadd.f32 %v2189, %v2235
        %2237 = vmatmul.f32.gmra.mxu0 %v2210
        %v2238 = vpop.f32.mrf.mxu0
        %v2239 = vadd.f32 %v2194, %v2238
        %2240 = vmatmul.f32.gmra.mxu0 %v2213
        %v2241 = vpop.f32.mrf.mxu0
        %v2242 = vadd.f32 %v2199, %v2241
        %2243 = vmatmul.f32.gmra.mxu0 %v2216
        %v2244 = vpop.f32.mrf.mxu0
        %v2245 = vadd.f32 %v2204, %v2244
        %2246 = vdwg.mxu0
        %v2247 = vld [vmem:[#allocation4] sm:$0xff]
        %v2248 = vld [vmem:[#allocation4 + $0x8] sm:$0xf]
        %v2249 = vld [vmem:[#allocation4 + $0xc] sm:$0xff]
        %v2250 = vld [vmem:[#allocation4 + $0x14] sm:$0xf]
        %v2251 = vld [vmem:[#allocation4 + $0x18] sm:$0xff]
        %v2252 = vld [vmem:[#allocation4 + $0x20] sm:$0xf]
        %v2253 = vld [vmem:[#allocation4 + $0x24] sm:$0xff]
        %v2254 = vld [vmem:[#allocation4 + $0x2c] sm:$0xf]
        %v2255 = vld [vmem:[#allocation4 + $0x30] sm:$0xff]
        %v2256 = vld [vmem:[#allocation4 + $0x38] sm:$0xf]
        %v2257 = vld [vmem:[#allocation4 + $0x3c] sm:$0xff]
        %v2258 = vld [vmem:[#allocation4 + $0x44] sm:$0xf]
        %v2259 = vld [vmem:[#allocation4 + $0x48] sm:$0xff]
        %v2260 = vld [vmem:[#allocation4 + $0x50] sm:$0xf]
        %v2261 = vld [vmem:[#allocation4 + $0x54] sm:$0xff]
        %v2262 = vld [vmem:[#allocation4 + $0x5c] sm:$0xf]
        %v2263 = vld [vmem:[#allocation4 + $0x60] sm:$0xff]
        %v2264 = vld [vmem:[#allocation4 + $0x68] sm:$0xf]
        %v2265 = vld [vmem:[#allocation4 + $0x6c] sm:$0xff]
        %v2266 = vld [vmem:[#allocation4 + $0x74] sm:$0xf]
        %v2267 = vunpack.c.l.bf16 %v2247
        %v2268 = vunpack.c.h.bf16 %v2247
        %v2269 = vunpack.c.l.bf16 %v2248
        %v2270 = vunpack.c.l.bf16 %v2249
        %v2271 = vunpack.c.h.bf16 %v2249
        %v2272 = vunpack.c.l.bf16 %v2250
        %v2273 = vunpack.c.l.bf16 %v2251
        %v2274 = vunpack.c.h.bf16 %v2251
        %v2275 = vunpack.c.l.bf16 %v2252
        %v2276 = vunpack.c.l.bf16 %v2253
        %v2277 = vunpack.c.h.bf16 %v2253
        %v2278 = vunpack.c.l.bf16 %v2254
        %v2279 = vunpack.c.l.bf16 %v2255
        %v2280 = vunpack.c.h.bf16 %v2255
        %v2281 = vunpack.c.l.bf16 %v2256
        %v2282 = vunpack.c.l.bf16 %v2257
        %v2283 = vunpack.c.h.bf16 %v2257
        %v2284 = vunpack.c.l.bf16 %v2258
        %v2285 = vunpack.c.l.bf16 %v2259
        %v2286 = vunpack.c.h.bf16 %v2259
        %v2287 = vunpack.c.l.bf16 %v2260
        %v2288 = vunpack.c.l.bf16 %v2261
        %v2289 = vunpack.c.h.bf16 %v2261
        %v2290 = vunpack.c.l.bf16 %v2262
        %v2291 = vunpack.c.l.bf16 %v2263
        %v2292 = vunpack.c.h.bf16 %v2263
        %v2293 = vunpack.c.l.bf16 %v2264
        %v2294 = vunpack.c.l.bf16 %v2265
        %v2295 = vunpack.c.h.bf16 %v2265
        %v2296 = vunpack.c.l.bf16 %v2266
        %s2297 = scalar_lea.vmem [#allocation4], 120
        %v2298 = vld [vmem:[%s2297] sm:$0xff]
        %v2299 = vld [vmem:[%s2297 + $0x8] sm:$0xf]
        %v2300 = vld [vmem:[%s2297 + $0xc] sm:$0xff]
        %v2301 = vld [vmem:[%s2297 + $0x14] sm:$0xf]
        %v2302 = vld [vmem:[%s2297 + $0x18] sm:$0xff]
        %v2303 = vld [vmem:[%s2297 + $0x20] sm:$0xf]
        %v2304 = vld [vmem:[%s2297 + $0x24] sm:$0xff]
        %v2305 = vld [vmem:[%s2297 + $0x2c] sm:$0xf]
        %v2306 = vld [vmem:[%s2297 + $0x30] sm:$0xff]
        %v2307 = vld [vmem:[%s2297 + $0x38] sm:$0xf]
        %v2308 = vld [vmem:[%s2297 + $0x3c] sm:$0xff]
        %v2309 = vld [vmem:[%s2297 + $0x44] sm:$0xf]
        %v2310 = vld [vmem:[%s2297 + $0x48] sm:$0xff]
        %v2311 = vld [vmem:[%s2297 + $0x50] sm:$0xf]
        %v2312 = vld [vmem:[%s2297 + $0x54] sm:$0xff]
        %v2313 = vld [vmem:[%s2297 + $0x5c] sm:$0xf]
        %v2314 = vld [vmem:[%s2297 + $0x60] sm:$0xff]
        %v2315 = vld [vmem:[%s2297 + $0x68] sm:$0xf]
        %v2316 = vld [vmem:[%s2297 + $0x6c] sm:$0xff]
        %v2317 = vld [vmem:[%s2297 + $0x74] sm:$0xf]
        %v2318 = vunpack.c.l.bf16 %v2298
        %v2319 = vunpack.c.h.bf16 %v2298
        %v2320 = vunpack.c.l.bf16 %v2299
        %v2321 = vunpack.c.l.bf16 %v2300
        %v2322 = vunpack.c.h.bf16 %v2300
        %v2323 = vunpack.c.l.bf16 %v2301
        %v2324 = vunpack.c.l.bf16 %v2302
        %v2325 = vunpack.c.h.bf16 %v2302
        %v2326 = vunpack.c.l.bf16 %v2303
        %v2327 = vunpack.c.l.bf16 %v2304
        %v2328 = vunpack.c.h.bf16 %v2304
        %v2329 = vunpack.c.l.bf16 %v2305
        %v2330 = vunpack.c.l.bf16 %v2306
        %v2331 = vunpack.c.h.bf16 %v2306
        %v2332 = vunpack.c.l.bf16 %v2307
        %v2333 = vunpack.c.l.bf16 %v2308
        %v2334 = vunpack.c.h.bf16 %v2308
        %v2335 = vunpack.c.l.bf16 %v2309
        %v2336 = vunpack.c.l.bf16 %v2310
        %v2337 = vunpack.c.h.bf16 %v2310
        %v2338 = vunpack.c.l.bf16 %v2311
        %v2339 = vunpack.c.l.bf16 %v2312
        %v2340 = vunpack.c.h.bf16 %v2312
        %v2341 = vunpack.c.l.bf16 %v2313
        %v2342 = vunpack.c.l.bf16 %v2314
        %v2343 = vunpack.c.h.bf16 %v2314
        %v2344 = vunpack.c.l.bf16 %v2315
        %v2345 = vunpack.c.l.bf16 %v2316
        %v2346 = vunpack.c.h.bf16 %v2316
        %v2347 = vunpack.c.l.bf16 %v2317
        %v2349 = vsel %vm1614, %v2239, 0
        %2351 = vmatpush.msra.mxu0 0.0
        %2352 = vmatpush.msra.mxu0 0.0
        %2353 = vmatpush.msra.mxu0 0.0
        %2354 = vmatpush.msra.mxu0 0.0
        %2355 = vmatpush.msra.mxu0 0.0
        %2356 = vmatpush.msra.mxu0 0.0
        %2357 = vmatpush.msra.mxu0 %v2345
        %2358 = vmatpush.msra.mxu0 %v2342
        %2359 = vmatpush.msra.mxu0 %v2339
        %2360 = vmatpush.msra.mxu0 %v2336
        %2361 = vmatpush.msra.mxu0 %v2333
        %2362 = vmatpush.msra.mxu0 %v2330
        %2363 = vmatpush.msra.mxu0 %v2327
        %2364 = vmatpush.msra.mxu0 %v2324
        %2365 = vmatpush.msra.mxu0 %v2321
        %2366 = vmatpush.msra.mxu0 %v2318
        %2367 = vmatmul.f32.gmra.mxu0 %v2349
        %v2368 = vpop.f32.mrf.mxu0
        %v2369 = vadd.f32 0.0, %v2368
        %2370 = vdwg.mxu0
        %2371 = vmatpush.msra.mxu0 0.0
        %2372 = vmatpush.msra.mxu0 0.0
        %2373 = vmatpush.msra.mxu0 0.0
        %2374 = vmatpush.msra.mxu0 0.0
        %2375 = vmatpush.msra.mxu0 0.0
        %2376 = vmatpush.msra.mxu0 0.0
        %2377 = vmatpush.msra.mxu0 %v2346
        %2378 = vmatpush.msra.mxu0 %v2343
        %2379 = vmatpush.msra.mxu0 %v2340
        %2380 = vmatpush.msra.mxu0 %v2337
        %2381 = vmatpush.msra.mxu0 %v2334
        %2382 = vmatpush.msra.mxu0 %v2331
        %2383 = vmatpush.msra.mxu0 %v2328
        %2384 = vmatpush.msra.mxu0 %v2325
        %2385 = vmatpush.msra.mxu0 %v2322
        %2386 = vmatpush.msra.mxu0 %v2319
        %2387 = vmatmul.f32.gmra.mxu0 %v2349
        %v2388 = vpop.f32.mrf.mxu0
        %v2389 = vadd.f32 0.0, %v2388
        %2390 = vdwg.mxu0
        %2391 = vmatpush.msra.mxu0 0.0
        %2392 = vmatpush.msra.mxu0 0.0
        %2393 = vmatpush.msra.mxu0 0.0
        %2394 = vmatpush.msra.mxu0 0.0
        %2395 = vmatpush.msra.mxu0 0.0
        %2396 = vmatpush.msra.mxu0 0.0
        %2397 = vmatpush.msra.mxu0 %v2347
        %2398 = vmatpush.msra.mxu0 %v2344
        %2399 = vmatpush.msra.mxu0 %v2341
        %2400 = vmatpush.msra.mxu0 %v2338
        %2401 = vmatpush.msra.mxu0 %v2335
        %2402 = vmatpush.msra.mxu0 %v2332
        %2403 = vmatpush.msra.mxu0 %v2329
        %2404 = vmatpush.msra.mxu0 %v2326
        %2405 = vmatpush.msra.mxu0 %v2323
        %2406 = vmatpush.msra.mxu0 %v2320
        %2407 = vmatmul.f32.gmra.mxu0 %v2349
        %v2408 = vpop.f32.mrf.mxu0
        %v2409 = vadd.f32 0.0, %v2408
        %2410 = vdwg.mxu0
        %v2412 = vsel %vm1614, %v2236, 0
        %2414 = vmatpush.msra.mxu0 0.0
        %2415 = vmatpush.msra.mxu0 0.0
        %2416 = vmatpush.msra.mxu0 0.0
        %2417 = vmatpush.msra.mxu0 0.0
        %2418 = vmatpush.msra.mxu0 0.0
        %2419 = vmatpush.msra.mxu0 0.0
        %2420 = vmatpush.msra.mxu0 %v2294
        %2421 = vmatpush.msra.mxu0 %v2291
        %2422 = vmatpush.msra.mxu0 %v2288
        %2423 = vmatpush.msra.mxu0 %v2285
        %2424 = vmatpush.msra.mxu0 %v2282
        %2425 = vmatpush.msra.mxu0 %v2279
        %2426 = vmatpush.msra.mxu0 %v2276
        %2427 = vmatpush.msra.mxu0 %v2273
        %2428 = vmatpush.msra.mxu0 %v2270
        %2429 = vmatpush.msra.mxu0 %v2267
        %2430 = vmatmul.f32.gmra.mxu0 %v2412
        %v2431 = vpop.f32.mrf.mxu0
        %v2432 = vadd.f32 %v2369, %v2431
        %2433 = vdwg.mxu0
        %2434 = vmatpush.msra.mxu0 0.0
        %2435 = vmatpush.msra.mxu0 0.0
        %2436 = vmatpush.msra.mxu0 0.0
        %2437 = vmatpush.msra.mxu0 0.0
        %2438 = vmatpush.msra.mxu0 0.0
        %2439 = vmatpush.msra.mxu0 0.0
        %2440 = vmatpush.msra.mxu0 %v2295
        %2441 = vmatpush.msra.mxu0 %v2292
        %2442 = vmatpush.msra.mxu0 %v2289
        %2443 = vmatpush.msra.mxu0 %v2286
        %2444 = vmatpush.msra.mxu0 %v2283
        %2445 = vmatpush.msra.mxu0 %v2280
        %2446 = vmatpush.msra.mxu0 %v2277
        %2447 = vmatpush.msra.mxu0 %v2274
        %2448 = vmatpush.msra.mxu0 %v2271
        %2449 = vmatpush.msra.mxu0 %v2268
        %2450 = vmatmul.f32.gmra.mxu0 %v2412
        %v2451 = vpop.f32.mrf.mxu0
        %v2452 = vadd.f32 %v2389, %v2451
        %2453 = vdwg.mxu0
        %2454 = vmatpush.msra.mxu0 0.0
        %2455 = vmatpush.msra.mxu0 0.0
        %2456 = vmatpush.msra.mxu0 0.0
        %2457 = vmatpush.msra.mxu0 0.0
        %2458 = vmatpush.msra.mxu0 0.0
        %2459 = vmatpush.msra.mxu0 0.0
        %2460 = vmatpush.msra.mxu0 %v2296
        %2461 = vmatpush.msra.mxu0 %v2293
        %2462 = vmatpush.msra.mxu0 %v2290
        %2463 = vmatpush.msra.mxu0 %v2287
        %2464 = vmatpush.msra.mxu0 %v2284
        %2465 = vmatpush.msra.mxu0 %v2281
        %2466 = vmatpush.msra.mxu0 %v2278
        %2467 = vmatpush.msra.mxu0 %v2275
        %2468 = vmatpush.msra.mxu0 %v2272
        %2469 = vmatpush.msra.mxu0 %v2269
        %2470 = vmatmul.f32.gmra.mxu0 %v2412
        %v2471 = vpop.f32.mrf.mxu0
        %v2472 = vadd.f32 %v2409, %v2471
        %2473 = vdwg.mxu0
        %s2474 = scalar_lea.vmem [#allocation4], 240
        %v2475 = vld [vmem:[%s2474] sm:$0xff]
        %v2476 = vld [vmem:[%s2474 + $0x8] sm:$0xf]
        %v2477 = vld [vmem:[%s2474 + $0xc] sm:$0xff]
        %v2478 = vld [vmem:[%s2474 + $0x14] sm:$0xf]
        %v2479 = vld [vmem:[%s2474 + $0x18] sm:$0xff]
        %v2480 = vld [vmem:[%s2474 + $0x20] sm:$0xf]
        %v2481 = vld [vmem:[%s2474 + $0x24] sm:$0xff]
        %v2482 = vld [vmem:[%s2474 + $0x2c] sm:$0xf]
        %v2483 = vld [vmem:[%s2474 + $0x30] sm:$0xff]
        %v2484 = vld [vmem:[%s2474 + $0x38] sm:$0xf]
        %v2485 = vld [vmem:[%s2474 + $0x3c] sm:$0xff]
        %v2486 = vld [vmem:[%s2474 + $0x44] sm:$0xf]
        %v2487 = vld [vmem:[%s2474 + $0x48] sm:$0xff]
        %v2488 = vld [vmem:[%s2474 + $0x50] sm:$0xf]
        %v2489 = vld [vmem:[%s2474 + $0x54] sm:$0xff]
        %v2490 = vld [vmem:[%s2474 + $0x5c] sm:$0xf]
        %v2491 = vld [vmem:[%s2474 + $0x60] sm:$0xff]
        %v2492 = vld [vmem:[%s2474 + $0x68] sm:$0xf]
        %v2493 = vld [vmem:[%s2474 + $0x6c] sm:$0xff]
        %v2494 = vld [vmem:[%s2474 + $0x74] sm:$0xf]
        %v2495 = vunpack.c.l.bf16 %v2475
        %v2496 = vunpack.c.h.bf16 %v2475
        %v2497 = vunpack.c.l.bf16 %v2476
        %v2498 = vunpack.c.l.bf16 %v2477
        %v2499 = vunpack.c.h.bf16 %v2477
        %v2500 = vunpack.c.l.bf16 %v2478
        %v2501 = vunpack.c.l.bf16 %v2479
        %v2502 = vunpack.c.h.bf16 %v2479
        %v2503 = vunpack.c.l.bf16 %v2480
        %v2504 = vunpack.c.l.bf16 %v2481
        %v2505 = vunpack.c.h.bf16 %v2481
        %v2506 = vunpack.c.l.bf16 %v2482
        %v2507 = vunpack.c.l.bf16 %v2483
        %v2508 = vunpack.c.h.bf16 %v2483
        %v2509 = vunpack.c.l.bf16 %v2484
        %v2510 = vunpack.c.l.bf16 %v2485
        %v2511 = vunpack.c.h.bf16 %v2485
        %v2512 = vunpack.c.l.bf16 %v2486
        %v2513 = vunpack.c.l.bf16 %v2487
        %v2514 = vunpack.c.h.bf16 %v2487
        %v2515 = vunpack.c.l.bf16 %v2488
        %v2516 = vunpack.c.l.bf16 %v2489
        %v2517 = vunpack.c.h.bf16 %v2489
        %v2518 = vunpack.c.l.bf16 %v2490
        %v2519 = vunpack.c.l.bf16 %v2491
        %v2520 = vunpack.c.h.bf16 %v2491
        %v2521 = vunpack.c.l.bf16 %v2492
        %v2522 = vunpack.c.l.bf16 %v2493
        %v2523 = vunpack.c.h.bf16 %v2493
        %v2524 = vunpack.c.l.bf16 %v2494
        %v2526 = vsel %vm1614, %v2242, 0
        %2528 = vmatpush.msra.mxu0 0.0
        %2529 = vmatpush.msra.mxu0 0.0
        %2530 = vmatpush.msra.mxu0 0.0
        %2531 = vmatpush.msra.mxu0 0.0
        %2532 = vmatpush.msra.mxu0 0.0
        %2533 = vmatpush.msra.mxu0 0.0
        %2534 = vmatpush.msra.mxu0 %v2522
        %2535 = vmatpush.msra.mxu0 %v2519
        %2536 = vmatpush.msra.mxu0 %v2516
        %2537 = vmatpush.msra.mxu0 %v2513
        %2538 = vmatpush.msra.mxu0 %v2510
        %2539 = vmatpush.msra.mxu0 %v2507
        %2540 = vmatpush.msra.mxu0 %v2504
        %2541 = vmatpush.msra.mxu0 %v2501
        %2542 = vmatpush.msra.mxu0 %v2498
        %2543 = vmatpush.msra.mxu0 %v2495
        %2544 = vmatmul.f32.gmra.mxu0 %v2526
        %v2545 = vpop.f32.mrf.mxu0
        %v2546 = vadd.f32 0.0, %v2545
        %2547 = vdwg.mxu0
        %2548 = vmatpush.msra.mxu0 0.0
        %2549 = vmatpush.msra.mxu0 0.0
        %2550 = vmatpush.msra.mxu0 0.0
        %2551 = vmatpush.msra.mxu0 0.0
        %2552 = vmatpush.msra.mxu0 0.0
        %2553 = vmatpush.msra.mxu0 0.0
        %2554 = vmatpush.msra.mxu0 %v2523
        %2555 = vmatpush.msra.mxu0 %v2520
        %2556 = vmatpush.msra.mxu0 %v2517
        %2557 = vmatpush.msra.mxu0 %v2514
        %2558 = vmatpush.msra.mxu0 %v2511
        %2559 = vmatpush.msra.mxu0 %v2508
        %2560 = vmatpush.msra.mxu0 %v2505
        %2561 = vmatpush.msra.mxu0 %v2502
        %2562 = vmatpush.msra.mxu0 %v2499
        %2563 = vmatpush.msra.mxu0 %v2496
        %2564 = vmatmul.f32.gmra.mxu0 %v2526
        %v2565 = vpop.f32.mrf.mxu0
        %v2566 = vadd.f32 0.0, %v2565
        %2567 = vdwg.mxu0
        %2568 = vmatpush.msra.mxu0 0.0
        %2569 = vmatpush.msra.mxu0 0.0
        %2570 = vmatpush.msra.mxu0 0.0
        %2571 = vmatpush.msra.mxu0 0.0
        %2572 = vmatpush.msra.mxu0 0.0
        %2573 = vmatpush.msra.mxu0 0.0
        %2574 = vmatpush.msra.mxu0 %v2524
        %2575 = vmatpush.msra.mxu0 %v2521
        %2576 = vmatpush.msra.mxu0 %v2518
        %2577 = vmatpush.msra.mxu0 %v2515
        %2578 = vmatpush.msra.mxu0 %v2512
        %2579 = vmatpush.msra.mxu0 %v2509
        %2580 = vmatpush.msra.mxu0 %v2506
        %2581 = vmatpush.msra.mxu0 %v2503
        %2582 = vmatpush.msra.mxu0 %v2500
        %2583 = vmatpush.msra.mxu0 %v2497
        %2584 = vmatmul.f32.gmra.mxu0 %v2526
        %v2585 = vpop.f32.mrf.mxu0
        %v2586 = vadd.f32 0.0, %v2585
        %2587 = vdwg.mxu0
        %v2588 = vadd.f32 %v2432, %v2546
        %v2589 = vadd.f32 %v2452, %v2566
        %v2590 = vadd.f32 %v2472, %v2586
        %s2591 = scalar_lea.vmem [#allocation4], 360
        %v2592 = vld [vmem:[%s2591] sm:$0xff]
        %v2593 = vld [vmem:[%s2591 + $0x8] sm:$0xf]
        %v2594 = vld [vmem:[%s2591 + $0xc] sm:$0xff]
        %v2595 = vld [vmem:[%s2591 + $0x14] sm:$0xf]
        %v2596 = vld [vmem:[%s2591 + $0x18] sm:$0xff]
        %v2597 = vld [vmem:[%s2591 + $0x20] sm:$0xf]
        %v2598 = vld [vmem:[%s2591 + $0x24] sm:$0xff]
        %v2599 = vld [vmem:[%s2591 + $0x2c] sm:$0xf]
        %v2600 = vld [vmem:[%s2591 + $0x30] sm:$0xff]
        %v2601 = vld [vmem:[%s2591 + $0x38] sm:$0xf]
        %v2602 = vld [vmem:[%s2591 + $0x3c] sm:$0xff]
        %v2603 = vld [vmem:[%s2591 + $0x44] sm:$0xf]
        %v2604 = vld [vmem:[%s2591 + $0x48] sm:$0xff]
        %v2605 = vld [vmem:[%s2591 + $0x50] sm:$0xf]
        %v2606 = vld [vmem:[%s2591 + $0x54] sm:$0xff]
        %v2607 = vld [vmem:[%s2591 + $0x5c] sm:$0xf]
        %v2608 = vld [vmem:[%s2591 + $0x60] sm:$0xff]
        %v2609 = vld [vmem:[%s2591 + $0x68] sm:$0xf]
        %v2610 = vld [vmem:[%s2591 + $0x6c] sm:$0xff]
        %v2611 = vld [vmem:[%s2591 + $0x74] sm:$0xf]
        %v2612 = vunpack.c.l.bf16 %v2592
        %v2613 = vunpack.c.h.bf16 %v2592
        %v2614 = vunpack.c.l.bf16 %v2593
        %v2615 = vunpack.c.l.bf16 %v2594
        %v2616 = vunpack.c.h.bf16 %v2594
        %v2617 = vunpack.c.l.bf16 %v2595
        %v2618 = vunpack.c.l.bf16 %v2596
        %v2619 = vunpack.c.h.bf16 %v2596
        %v2620 = vunpack.c.l.bf16 %v2597
        %v2621 = vunpack.c.l.bf16 %v2598
        %v2622 = vunpack.c.h.bf16 %v2598
        %v2623 = vunpack.c.l.bf16 %v2599
        %v2624 = vunpack.c.l.bf16 %v2600
        %v2625 = vunpack.c.h.bf16 %v2600
        %v2626 = vunpack.c.l.bf16 %v2601
        %v2627 = vunpack.c.l.bf16 %v2602
        %v2628 = vunpack.c.h.bf16 %v2602
        %v2629 = vunpack.c.l.bf16 %v2603
        %v2630 = vunpack.c.l.bf16 %v2604
        %v2631 = vunpack.c.h.bf16 %v2604
        %v2632 = vunpack.c.l.bf16 %v2605
        %v2633 = vunpack.c.l.bf16 %v2606
        %v2634 = vunpack.c.h.bf16 %v2606
        %v2635 = vunpack.c.l.bf16 %v2607
        %v2636 = vunpack.c.l.bf16 %v2608
        %v2637 = vunpack.c.h.bf16 %v2608
        %v2638 = vunpack.c.l.bf16 %v2609
        %v2639 = vunpack.c.l.bf16 %v2610
        %v2640 = vunpack.c.h.bf16 %v2610
        %v2641 = vunpack.c.l.bf16 %v2611
        %v2643 = vsel %vm1614, %v2245, 0
        %2645 = vmatpush.msra.mxu0 0.0
        %2646 = vmatpush.msra.mxu0 0.0
        %2647 = vmatpush.msra.mxu0 0.0
        %2648 = vmatpush.msra.mxu0 0.0
        %2649 = vmatpush.msra.mxu0 0.0
        %2650 = vmatpush.msra.mxu0 0.0
        %2651 = vmatpush.msra.mxu0 %v2639
        %2652 = vmatpush.msra.mxu0 %v2636
        %2653 = vmatpush.msra.mxu0 %v2633
        %2654 = vmatpush.msra.mxu0 %v2630
        %2655 = vmatpush.msra.mxu0 %v2627
        %2656 = vmatpush.msra.mxu0 %v2624
        %2657 = vmatpush.msra.mxu0 %v2621
        %2658 = vmatpush.msra.mxu0 %v2618
        %2659 = vmatpush.msra.mxu0 %v2615
        %2660 = vmatpush.msra.mxu0 %v2612
        %2661 = vmatmul.f32.gmra.mxu0 %v2643
        %v2662 = vpop.f32.mrf.mxu0
        %v2663 = vadd.f32 0.0, %v2662
        %2664 = vdwg.mxu0
        %2665 = vmatpush.msra.mxu0 0.0
        %2666 = vmatpush.msra.mxu0 0.0
        %2667 = vmatpush.msra.mxu0 0.0
        %2668 = vmatpush.msra.mxu0 0.0
        %2669 = vmatpush.msra.mxu0 0.0
        %2670 = vmatpush.msra.mxu0 0.0
        %2671 = vmatpush.msra.mxu0 %v2640
        %2672 = vmatpush.msra.mxu0 %v2637
        %2673 = vmatpush.msra.mxu0 %v2634
        %2674 = vmatpush.msra.mxu0 %v2631
        %2675 = vmatpush.msra.mxu0 %v2628
        %2676 = vmatpush.msra.mxu0 %v2625
        %2677 = vmatpush.msra.mxu0 %v2622
        %2678 = vmatpush.msra.mxu0 %v2619
        %2679 = vmatpush.msra.mxu0 %v2616
        %2680 = vmatpush.msra.mxu0 %v2613
        %2681 = vmatmul.f32.gmra.mxu0 %v2643
        %v2682 = vpop.f32.mrf.mxu0
        %v2683 = vadd.f32 0.0, %v2682
        %2684 = vdwg.mxu0
        %2685 = vmatpush.msra.mxu0 0.0
        %2686 = vmatpush.msra.mxu0 0.0
        %2687 = vmatpush.msra.mxu0 0.0
        %2688 = vmatpush.msra.mxu0 0.0
        %2689 = vmatpush.msra.mxu0 0.0
        %2690 = vmatpush.msra.mxu0 0.0
        %2691 = vmatpush.msra.mxu0 %v2641
        %2692 = vmatpush.msra.mxu0 %v2638
        %2693 = vmatpush.msra.mxu0 %v2635
        %2694 = vmatpush.msra.mxu0 %v2632
        %2695 = vmatpush.msra.mxu0 %v2629
        %2696 = vmatpush.msra.mxu0 %v2626
        %2697 = vmatpush.msra.mxu0 %v2623
        %2698 = vmatpush.msra.mxu0 %v2620
        %2699 = vmatpush.msra.mxu0 %v2617
        %2700 = vmatpush.msra.mxu0 %v2614
        %2701 = vmatmul.f32.gmra.mxu0 %v2643
        %v2702 = vpop.f32.mrf.mxu0
        %v2703 = vadd.f32 0.0, %v2702
        %2704 = vdwg.mxu0
        %v2705 = vadd.f32 %v2588, %v2663
        %v2706 = vadd.f32 %v2589, %v2683
        %v2707 = vadd.f32 %v2590, %v2703
        %2708 = vst [vmem:[#allocation3] sm:$0xff] %v2705
        %2709 = vst [vmem:[#allocation3 + $0x8] sm:$0xff] %v2706
        %vm2710 = vcmask 703488
        %2711 = vst.msk [vmem:[#allocation3 + $0x10] sm:$0xff] %vm2710, %v2707
        %2712 = vst [vmem:[#allocation3 + $0x18] sm:$0xff] 0.0
        %2713 = vst [vmem:[#allocation3 + $0x20] sm:$0xff] 0.0
        %2714 = vst.msk [vmem:[#allocation3 + $0x28] sm:$0xff] %vm2710, 0.0
        %v2715 = vld [vmem:[%s730] sm:$0xff]
        %2717 = vrot.lane.b32.xlu0 %v2715, 19
        %v2718 = vpop.permute.xlu0 %2717
        %vm2720 = vcmask 285848
        %2721 = vst.msk [vmem:[#allocation3 + $0x18] sm:$0xff] %vm2720, %v2718
        %v2722 = vld [vmem:[%s730] sm:$0xff]
        %2724 = vrot.lane.b32.xlu0 %v2722, 21
        %v2725 = vpop.permute.xlu0 %2724
        %vm2727 = vcmask 433448
        %2728 = vst.msk [vmem:[#allocation3 + $0x18] sm:$0xff] %vm2727, %v2725
        %v2729 = vld [vmem:[%s730] sm:$0xff]
        %2731 = vrot.lane.b32.xlu0 %v2729, 23
        %v2732 = vpop.permute.xlu0 %2731
        %vm2734 = vcmask 581048
        %2735 = vst.msk [vmem:[#allocation3 + $0x18] sm:$0xff] %vm2734, %v2732
        %v2736 = vld [vmem:[%s730] sm:$0xff]
        %2738 = vrot.lane.b32.xlu0 %v2736, 25
        %v2739 = vpop.permute.xlu0 %2738
        %vm2741 = vcmask 728648
        %2742 = vst.msk [vmem:[#allocation3 + $0x18] sm:$0xff] %vm2741, %v2739
        %v2743 = vld [vmem:[%s730] sm:$0xff]
        %2745 = vrot.lane.b32.xlu0 %v2743, 27
        %v2746 = vpop.permute.xlu0 %2745
        %vm2748 = vcmask 876248
        %2749 = vst.msk [vmem:[#allocation3 + $0x18] sm:$0xff] %vm2748, %v2746
        %v2750 = vld [vmem:[%s730] sm:$0xff]
        %2752 = vrot.lane.b32.xlu0 %v2750, 29
        %v2753 = vpop.permute.xlu0 %2752
        %vm2755 = vcmask 1023848
        %2756 = vst.msk [vmem:[#allocation3 + $0x18] sm:$0xff] %vm2755, %v2753
        %v2757 = vld [vmem:[%s730] sm:$0xff]
        %2759 = vrot.lane.b32.xlu0 %v2757, 31
        %v2760 = vpop.permute.xlu0 %2759
        %vm2762 = vcmask 1048568
        %2763 = vst.msk [vmem:[#allocation3 + $0x18] sm:$0xff] %vm2762, %v2760
        %vm2764 = vcmask 121856
        %2765 = vst.msk [vmem:[#allocation3 + $0x20] sm:$0xff] %vm2764, %v2760
        %v2766 = vld [vmem:[%s730] sm:$0xff]
        %2768 = vrot.lane.b32.xlu0 %v2766, 33
        %v2769 = vpop.permute.xlu0 %2768
        %vm2771 = vcmask 269448
        %2772 = vst.msk [vmem:[#allocation3 + $0x20] sm:$0xff] %vm2771, %v2769
        %v2773 = vld [vmem:[%s730 + $0x8] sm:$0xff]
        %2775 = vrot.lane.b32.xlu0 %v2773, 35
        %v2776 = vpop.permute.xlu0 %2775
        %vm2778 = vcmask 417048
        %2779 = vst.msk [vmem:[#allocation3 + $0x20] sm:$0xff] %vm2778, %v2776
        %v2780 = vld [vmem:[%s730 + $0x8] sm:$0xff]
        %2782 = vrot.lane.b32.xlu0 %v2780, 37
        %v2783 = vpop.permute.xlu0 %2782
        %vm2785 = vcmask 564648
        %2786 = vst.msk [vmem:[#allocation3 + $0x20] sm:$0xff] %vm2785, %v2783
        %v2787 = vld [vmem:[%s730 + $0x8] sm:$0xff]
        %2789 = vrot.lane.b32.xlu0 %v2787, 39
        %v2790 = vpop.permute.xlu0 %2789
        %vm2792 = vcmask 712248
        %2793 = vst.msk [vmem:[#allocation3 + $0x20] sm:$0xff] %vm2792, %v2790
        %v2794 = vld [vmem:[%s730 + $0x8] sm:$0xff]
        %2796 = vrot.lane.b32.xlu0 %v2794, 41
        %v2797 = vpop.permute.xlu0 %2796
        %vm2799 = vcmask 859848
        %2800 = vst.msk [vmem:[#allocation3 + $0x20] sm:$0xff] %vm2799, %v2797
        %v2801 = vld [vmem:[%s730 + $0x8] sm:$0xff]
        %2803 = vrot.lane.b32.xlu0 %v2801, 43
        %v2804 = vpop.permute.xlu0 %2803
        %vm2806 = vcmask 1007448
        %2807 = vst.msk [vmem:[#allocation3 + $0x20] sm:$0xff] %vm2806, %v2804
        %v2808 = vld [vmem:[%s730 + $0x8] sm:$0xff]
        %2810 = vrot.lane.b32.xlu0 %v2808, 45
        %v2811 = vpop.permute.xlu0 %2810
        %vm2813 = vcmask 1048552
        %2814 = vst.msk [vmem:[#allocation3 + $0x20] sm:$0xff] %vm2813, %v2811
        %vm2815 = vcmask 105472
        %2816 = vst.msk [vmem:[#allocation3 + $0x28] sm:$0xff] %vm2815, %v2811
        %v2817 = vld [vmem:[%s730 + $0x8] sm:$0xff]
        %2819 = vrot.lane.b32.xlu0 %v2817, 47
        %v2820 = vpop.permute.xlu0 %2819
        %vm2822 = vcmask 253048
        %2823 = vst.msk [vmem:[#allocation3 + $0x28] sm:$0xff] %vm2822, %v2820
        %v2824 = vld [vmem:[%s730 + $0x8] sm:$0xff]
        %2826 = vrot.lane.b32.xlu0 %v2824, 49
        %v2827 = vpop.permute.xlu0 %2826
        %vm2829 = vcmask 400648
        %2830 = vst.msk [vmem:[#allocation3 + $0x28] sm:$0xff] %vm2829, %v2827
        %v2831 = vld [vmem:[%s16] sm:$0xff]
        %v2832 = vld [vmem:[%s16 + $0x8] sm:$0xff]
        %v2833 = vld [vmem:[%s17] sm:$0xff]
        %v2834 = vld [vmem:[%s17 + $0x8] sm:$0xff]
        %2837 = vrot.lane.b32.xlu0 %v2833, 127
        %v2838 = vpop.permute.xlu0 %2837
        %2839 = vrot.lane.b32.xlu0 %v2834, 127
        %v2840 = vpop.permute.xlu0 %2839
        %v2844 = vsel %vm809, %v2831, 0
        %v2847 = vsel %vm809, %v2832, 0
        %2849 = vmatpush.msra.mxu0 0.0
        %2850 = vmatpush.msra.mxu0 0.0
        %2851 = vmatpush.msra.mxu0 0.0
        %2852 = vmatpush.msra.mxu0 0.0
        %2853 = vmatpush.msra.mxu0 0.0
        %2854 = vmatpush.msra.mxu0 0.0
        %2855 = vmatpush.msra.mxu0 0.0
        %2856 = vmatpush.msra.mxu0 0.0
        %2857 = vmatpush.msra.mxu0 0.0
        %2858 = vmatpush.msra.mxu0 0.0
        %2859 = vmatpush.msra.mxu0 0.0
        %2860 = vmatpush.msra.mxu0 0.0
        %2861 = vmatpush.msra.mxu0 %v748
        %2862 = vmatpush.msra.mxu0 %v747
        %2863 = vmatpush.msra.mxu0 %v746
        %2864 = vmatpush.msra.mxu0 %v745
        %2865 = vmatmul.f32.gmra.mxu0 %v2844
        %v2866 = vpop.f32.mrf.mxu0
        %v2867 = vadd.f32 %v2838, %v2866
        %2868 = vmatmul.f32.gmra.mxu0 %v2847
        %v2869 = vpop.f32.mrf.mxu0
        %v2870 = vadd.f32 %v2840, %v2869
        %2871 = vdwg.mxu0
        %v2872 = vld [vmem:[%s19] sm:$0x7]
        %v2873 = vld [vmem:[%s17] sm:$0xff]
        %v2874 = vld [vmem:[%s14] sm:$0xff]
        %v2875 = vld [vmem:[#allocation3] sm:$0xff]
        %v2876 = vld [vmem:[#allocation3 + $0x8] sm:$0xff]
        %v2877 = vld [vmem:[#allocation3 + $0x10] sm:$0xff]
        %v2878 = vld [vmem:[#allocation3 + $0x18] sm:$0xff]
        %v2879 = vld [vmem:[#allocation3 + $0x20] sm:$0xff]
        %v2880 = vld [vmem:[#allocation3 + $0x28] sm:$0xff]
        %s2881 = scalar_lea.vmem %s14, 8
        %v2882 = vld [vmem:[%s2881] sm:$0xff]
        %2889 = vrot.lane.b32.xlu0 %v2875, 127
        %v2890 = vpop.permute.xlu0 %2889
        %2891 = vrot.lane.b32.xlu0 %v2876, 127
        %v2892 = vpop.permute.xlu0 %2891
        %2893 = vrot.lane.b32.xlu0 %v2877, 127
        %v2894 = vpop.permute.xlu0 %2893
        %2895 = vrot.lane.b32.xlu0 %v2878, 127
        %v2896 = vpop.permute.xlu0 %2895
        %2897 = vrot.lane.b32.xlu0 %v2879, 127
        %v2898 = vpop.permute.xlu0 %2897
        %2899 = vrot.lane.b32.xlu0 %v2880, 127
        %v2900 = vpop.permute.xlu0 %2899
        %vm2901 = vcmask 1039360
        %v2902 = vsel %vm2901, %v2890, %v2892
        %v2903 = vsel %vm2901, %v2892, %v2894
        %v2904 = vsel %vm2901, %v2896, %v2898
        %v2905 = vsel %vm2901, %v2898, %v2900
        %v2913 = vsel %vm884, %v2882, 0
        %2915 = vmatpush.msra.mxu0 0.0
        %2916 = vmatpush.msra.mxu0 0.0
        %2917 = vmatpush.msra.mxu0 0.0
        %2918 = vmatpush.msra.mxu0 0.0
        %2919 = vmatpush.msra.mxu0 0.0
        %2920 = vmatpush.msra.mxu0 0.0
        %2921 = vmatpush.msra.mxu0 0.0
        %2922 = vmatpush.msra.mxu0 0.0
        %2923 = vmatpush.msra.mxu0 0.0
        %2924 = vmatpush.msra.mxu0 0.0
        %2925 = vmatpush.msra.mxu0 0.0
        %2926 = vmatpush.msra.mxu0 0.0
        %2927 = vmatpush.msra.mxu0 0.0
        %2928 = vmatpush.msra.mxu0 0.0
        %2929 = vmatpush.msra.mxu0 %v2904
        %2930 = vmatpush.msra.mxu0 %v2902
        %2931 = vmatmul.f32.gmra.mxu0 %v2913
        %v2932 = vpop.f32.mrf.mxu0
        %v2933 = vadd.f32 0.0, %v2932
        %2934 = vdwg.mxu0
        %2935 = vmatpush.msra.mxu0 0.0
        %2936 = vmatpush.msra.mxu0 0.0
        %2937 = vmatpush.msra.mxu0 0.0
        %2938 = vmatpush.msra.mxu0 0.0
        %2939 = vmatpush.msra.mxu0 0.0
        %2940 = vmatpush.msra.mxu0 0.0
        %2941 = vmatpush.msra.mxu0 0.0
        %2942 = vmatpush.msra.mxu0 0.0
        %2943 = vmatpush.msra.mxu0 0.0
        %2944 = vmatpush.msra.mxu0 0.0
        %2945 = vmatpush.msra.mxu0 0.0
        %2946 = vmatpush.msra.mxu0 0.0
        %2947 = vmatpush.msra.mxu0 0.0
        %2948 = vmatpush.msra.mxu0 0.0
        %2949 = vmatpush.msra.mxu0 %v2905
        %2950 = vmatpush.msra.mxu0 %v2903
        %2951 = vmatmul.f32.gmra.mxu0 %v2913
        %v2952 = vpop.f32.mrf.mxu0
        %v2953 = vadd.f32 0.0, %v2952
        %2954 = vdwg.mxu0
        %2955 = vmatpush.msra.mxu0 0.0
        %2956 = vmatpush.msra.mxu0 0.0
        %2957 = vmatpush.msra.mxu0 0.0
        %2958 = vmatpush.msra.mxu0 0.0
        %2959 = vmatpush.msra.mxu0 0.0
        %2960 = vmatpush.msra.mxu0 0.0
        %2961 = vmatpush.msra.mxu0 0.0
        %2962 = vmatpush.msra.mxu0 0.0
        %2963 = vmatpush.msra.mxu0 0.0
        %2964 = vmatpush.msra.mxu0 0.0
        %2965 = vmatpush.msra.mxu0 0.0
        %2966 = vmatpush.msra.mxu0 0.0
        %2967 = vmatpush.msra.mxu0 0.0
        %2968 = vmatpush.msra.mxu0 0.0
        %2969 = vmatpush.msra.mxu0 %v2900
        %2970 = vmatpush.msra.mxu0 %v2894
        %2971 = vmatmul.f32.gmra.mxu0 %v2913
        %v2972 = vpop.f32.mrf.mxu0
        %v2973 = vadd.f32 0.0, %v2972
        %2974 = vdwg.mxu0
        %v2976 = vsel %vm884, %v2874, 0
        %2978 = vmatpush.msra.mxu0 0.0
        %2979 = vmatpush.msra.mxu0 0.0
        %2980 = vmatpush.msra.mxu0 0.0
        %2981 = vmatpush.msra.mxu0 0.0
        %2982 = vmatpush.msra.mxu0 0.0
        %2983 = vmatpush.msra.mxu0 0.0
        %2984 = vmatpush.msra.mxu0 0.0
        %2985 = vmatpush.msra.mxu0 0.0
        %2986 = vmatpush.msra.mxu0 0.0
        %2987 = vmatpush.msra.mxu0 0.0
        %2988 = vmatpush.msra.mxu0 0.0
        %2989 = vmatpush.msra.mxu0 0.0
        %2990 = vmatpush.msra.mxu0 0.0
        %2991 = vmatpush.msra.mxu0 0.0
        %2992 = vmatpush.msra.mxu0 %v2878
        %2993 = vmatpush.msra.mxu0 %v2875
        %2994 = vmatmul.f32.gmra.mxu0 %v2976
        %v2995 = vpop.f32.mrf.mxu0
        %v2996 = vadd.f32 %v2933, %v2995
        %2997 = vdwg.mxu0
        %2998 = vmatpush.msra.mxu0 0.0
        %2999 = vmatpush.msra.mxu0 0.0
        %3000 = vmatpush.msra.mxu0 0.0
        %3001 = vmatpush.msra.mxu0 0.0
        %3002 = vmatpush.msra.mxu0 0.0
        %3003 = vmatpush.msra.mxu0 0.0
        %3004 = vmatpush.msra.mxu0 0.0
        %3005 = vmatpush.msra.mxu0 0.0
        %3006 = vmatpush.msra.mxu0 0.0
        %3007 = vmatpush.msra.mxu0 0.0
        %3008 = vmatpush.msra.mxu0 0.0
        %3009 = vmatpush.msra.mxu0 0.0
        %3010 = vmatpush.msra.mxu0 0.0
        %3011 = vmatpush.msra.mxu0 0.0
        %3012 = vmatpush.msra.mxu0 %v2879
        %3013 = vmatpush.msra.mxu0 %v2876
        %3014 = vmatmul.f32.gmra.mxu0 %v2976
        %v3015 = vpop.f32.mrf.mxu0
        %v3016 = vadd.f32 %v2953, %v3015
        %3017 = vdwg.mxu0
        %3018 = vmatpush.msra.mxu0 0.0
        %3019 = vmatpush.msra.mxu0 0.0
        %3020 = vmatpush.msra.mxu0 0.0
        %3021 = vmatpush.msra.mxu0 0.0
        %3022 = vmatpush.msra.mxu0 0.0
        %3023 = vmatpush.msra.mxu0 0.0
        %3024 = vmatpush.msra.mxu0 0.0
        %3025 = vmatpush.msra.mxu0 0.0
        %3026 = vmatpush.msra.mxu0 0.0
        %3027 = vmatpush.msra.mxu0 0.0
        %3028 = vmatpush.msra.mxu0 0.0
        %3029 = vmatpush.msra.mxu0 0.0
        %3030 = vmatpush.msra.mxu0 0.0
        %3031 = vmatpush.msra.mxu0 0.0
        %3032 = vmatpush.msra.mxu0 %v2880
        %3033 = vmatpush.msra.mxu0 %v2877
        %3034 = vmatmul.f32.gmra.mxu0 %v2976
        %v3035 = vpop.f32.mrf.mxu0
        %v3036 = vadd.f32 %v2973, %v3035
        %3037 = vdwg.mxu0
        %s3038 = scalar_lea.vmem %s14, 16
        %v3039 = vld [vmem:[%s3038] sm:$0xff]
        %3040 = vrot.lane.b32.xlu0 %v2875, 126
        %v3041 = vpop.permute.xlu0 %3040
        %3042 = vrot.lane.b32.xlu0 %v2876, 126
        %v3043 = vpop.permute.xlu0 %3042
        %3044 = vrot.lane.b32.xlu0 %v2877, 126
        %v3045 = vpop.permute.xlu0 %3044
        %3046 = vrot.lane.b32.xlu0 %v2878, 126
        %v3047 = vpop.permute.xlu0 %3046
        %3048 = vrot.lane.b32.xlu0 %v2879, 126
        %v3049 = vpop.permute.xlu0 %3048
        %3050 = vrot.lane.b32.xlu0 %v2880, 126
        %v3051 = vpop.permute.xlu0 %3050
        %vm3052 = vcmask 1031168
        %v3053 = vsel %vm3052, %v3041, %v3043
        %v3054 = vsel %vm3052, %v3043, %v3045
        %v3055 = vsel %vm3052, %v3047, %v3049
        %v3056 = vsel %vm3052, %v3049, %v3051
        %v3064 = vsel %vm884, %v3039, 0
        %3066 = vmatpush.msra.mxu0 0.0
        %3067 = vmatpush.msra.mxu0 0.0
        %3068 = vmatpush.msra.mxu0 0.0
        %3069 = vmatpush.msra.mxu0 0.0
        %3070 = vmatpush.msra.mxu0 0.0
        %3071 = vmatpush.msra.mxu0 0.0
        %3072 = vmatpush.msra.mxu0 0.0
        %3073 = vmatpush.msra.mxu0 0.0
        %3074 = vmatpush.msra.mxu0 0.0
        %3075 = vmatpush.msra.mxu0 0.0
        %3076 = vmatpush.msra.mxu0 0.0
        %3077 = vmatpush.msra.mxu0 0.0
        %3078 = vmatpush.msra.mxu0 0.0
        %3079 = vmatpush.msra.mxu0 0.0
        %3080 = vmatpush.msra.mxu0 %v3055
        %3081 = vmatpush.msra.mxu0 %v3053
        %3082 = vmatmul.f32.gmra.mxu0 %v3064
        %v3083 = vpop.f32.mrf.mxu0
        %v3084 = vadd.f32 0.0, %v3083
        %3085 = vdwg.mxu0
        %3086 = vmatpush.msra.mxu0 0.0
        %3087 = vmatpush.msra.mxu0 0.0
        %3088 = vmatpush.msra.mxu0 0.0
        %3089 = vmatpush.msra.mxu0 0.0
        %3090 = vmatpush.msra.mxu0 0.0
        %3091 = vmatpush.msra.mxu0 0.0
        %3092 = vmatpush.msra.mxu0 0.0
        %3093 = vmatpush.msra.mxu0 0.0
        %3094 = vmatpush.msra.mxu0 0.0
        %3095 = vmatpush.msra.mxu0 0.0
        %3096 = vmatpush.msra.mxu0 0.0
        %3097 = vmatpush.msra.mxu0 0.0
        %3098 = vmatpush.msra.mxu0 0.0
        %3099 = vmatpush.msra.mxu0 0.0
        %3100 = vmatpush.msra.mxu0 %v3056
        %3101 = vmatpush.msra.mxu0 %v3054
        %3102 = vmatmul.f32.gmra.mxu0 %v3064
        %v3103 = vpop.f32.mrf.mxu0
        %v3104 = vadd.f32 0.0, %v3103
        %3105 = vdwg.mxu0
        %3106 = vmatpush.msra.mxu0 0.0
        %3107 = vmatpush.msra.mxu0 0.0
        %3108 = vmatpush.msra.mxu0 0.0
        %3109 = vmatpush.msra.mxu0 0.0
        %3110 = vmatpush.msra.mxu0 0.0
        %3111 = vmatpush.msra.mxu0 0.0
        %3112 = vmatpush.msra.mxu0 0.0
        %3113 = vmatpush.msra.mxu0 0.0
        %3114 = vmatpush.msra.mxu0 0.0
        %3115 = vmatpush.msra.mxu0 0.0
        %3116 = vmatpush.msra.mxu0 0.0
        %3117 = vmatpush.msra.mxu0 0.0
        %3118 = vmatpush.msra.mxu0 0.0
        %3119 = vmatpush.msra.mxu0 0.0
        %3120 = vmatpush.msra.mxu0 %v3051
        %3121 = vmatpush.msra.mxu0 %v3045
        %3122 = vmatmul.f32.gmra.mxu0 %v3064
        %v3123 = vpop.f32.mrf.mxu0
        %v3124 = vadd.f32 0.0, %v3123
        %3125 = vdwg.mxu0
        %v3126 = vadd.f32 %v2996, %v3084
        %v3127 = vadd.f32 %v3016, %v3104
        %v3128 = vadd.f32 %v3036, %v3124
        %s3129 = scalar_lea.vmem %s14, 24
        %v3130 = vld [vmem:[%s3129] sm:$0xff]
        %3131 = vrot.lane.b32.xlu0 %v2875, 110
        %v3132 = vpop.permute.xlu0 %3131
        %3133 = vrot.lane.b32.xlu0 %v2876, 110
        %v3134 = vpop.permute.xlu0 %3133
        %3135 = vrot.lane.b32.xlu0 %v2877, 110
        %v3136 = vpop.permute.xlu0 %3135
        %3137 = vrot.lane.b32.xlu0 %v2878, 110
        %v3138 = vpop.permute.xlu0 %3137
        %3139 = vrot.lane.b32.xlu0 %v2879, 110
        %v3140 = vpop.permute.xlu0 %3139
        %3141 = vrot.lane.b32.xlu0 %v2880, 110
        %v3142 = vpop.permute.xlu0 %3141
        %v3143 = vsel %vm1015, %v3132, %v3134
        %v3144 = vsel %vm1015, %v3134, %v3136
        %v3145 = vsel %vm1015, %v3138, %v3140
        %v3146 = vsel %vm1015, %v3140, %v3142
        %v3154 = vsel %vm884, %v3130, 0
        %3156 = vmatpush.msra.mxu0 0.0
        %3157 = vmatpush.msra.mxu0 0.0
        %3158 = vmatpush.msra.mxu0 0.0
        %3159 = vmatpush.msra.mxu0 0.0
        %3160 = vmatpush.msra.mxu0 0.0
        %3161 = vmatpush.msra.mxu0 0.0
        %3162 = vmatpush.msra.mxu0 0.0
        %3163 = vmatpush.msra.mxu0 0.0
        %3164 = vmatpush.msra.mxu0 0.0
        %3165 = vmatpush.msra.mxu0 0.0
        %3166 = vmatpush.msra.mxu0 0.0
        %3167 = vmatpush.msra.mxu0 0.0
        %3168 = vmatpush.msra.mxu0 0.0
        %3169 = vmatpush.msra.mxu0 0.0
        %3170 = vmatpush.msra.mxu0 %v3145
        %3171 = vmatpush.msra.mxu0 %v3143
        %3172 = vmatmul.f32.gmra.mxu0 %v3154
        %v3173 = vpop.f32.mrf.mxu0
        %v3174 = vadd.f32 0.0, %v3173
        %3175 = vdwg.mxu0
        %3176 = vmatpush.msra.mxu0 0.0
        %3177 = vmatpush.msra.mxu0 0.0
        %3178 = vmatpush.msra.mxu0 0.0
        %3179 = vmatpush.msra.mxu0 0.0
        %3180 = vmatpush.msra.mxu0 0.0
        %3181 = vmatpush.msra.mxu0 0.0
        %3182 = vmatpush.msra.mxu0 0.0
        %3183 = vmatpush.msra.mxu0 0.0
        %3184 = vmatpush.msra.mxu0 0.0
        %3185 = vmatpush.msra.mxu0 0.0
        %3186 = vmatpush.msra.mxu0 0.0
        %3187 = vmatpush.msra.mxu0 0.0
        %3188 = vmatpush.msra.mxu0 0.0
        %3189 = vmatpush.msra.mxu0 0.0
        %3190 = vmatpush.msra.mxu0 %v3146
        %3191 = vmatpush.msra.mxu0 %v3144
        %3192 = vmatmul.f32.gmra.mxu0 %v3154
        %v3193 = vpop.f32.mrf.mxu0
        %v3194 = vadd.f32 0.0, %v3193
        %3195 = vdwg.mxu0
        %3196 = vmatpush.msra.mxu0 0.0
        %3197 = vmatpush.msra.mxu0 0.0
        %3198 = vmatpush.msra.mxu0 0.0
        %3199 = vmatpush.msra.mxu0 0.0
        %3200 = vmatpush.msra.mxu0 0.0
        %3201 = vmatpush.msra.mxu0 0.0
        %3202 = vmatpush.msra.mxu0 0.0
        %3203 = vmatpush.msra.mxu0 0.0
        %3204 = vmatpush.msra.mxu0 0.0
        %3205 = vmatpush.msra.mxu0 0.0
        %3206 = vmatpush.msra.mxu0 0.0
        %3207 = vmatpush.msra.mxu0 0.0
        %3208 = vmatpush.msra.mxu0 0.0
        %3209 = vmatpush.msra.mxu0 0.0
        %3210 = vmatpush.msra.mxu0 %v3142
        %3211 = vmatpush.msra.mxu0 %v3136
        %3212 = vmatmul.f32.gmra.mxu0 %v3154
        %v3213 = vpop.f32.mrf.mxu0
        %v3214 = vadd.f32 0.0, %v3213
        %3215 = vdwg.mxu0
        %v3216 = vadd.f32 %v3126, %v3174
        %v3217 = vadd.f32 %v3127, %v3194
        %v3218 = vadd.f32 %v3128, %v3214
        %s3219 = scalar_lea.vmem %s14, 32
        %v3220 = vld [vmem:[%s3219] sm:$0xff]
        %3221 = vrot.lane.b32.xlu0 %v2875, 109
        %v3222 = vpop.permute.xlu0 %3221
        %3223 = vrot.lane.b32.xlu0 %v2876, 109
        %v3224 = vpop.permute.xlu0 %3223
        %3225 = vrot.lane.b32.xlu0 %v2877, 109
        %v3226 = vpop.permute.xlu0 %3225
        %3227 = vrot.lane.b32.xlu0 %v2878, 109
        %v3228 = vpop.permute.xlu0 %3227
        %3229 = vrot.lane.b32.xlu0 %v2879, 109
        %v3230 = vpop.permute.xlu0 %3229
        %3231 = vrot.lane.b32.xlu0 %v2880, 109
        %v3232 = vpop.permute.xlu0 %3231
        %vm3233 = vcmask 891904
        %v3234 = vsel %vm3233, %v3222, %v3224
        %v3235 = vsel %vm3233, %v3224, %v3226
        %v3236 = vsel %vm3233, %v3228, %v3230
        %v3237 = vsel %vm3233, %v3230, %v3232
        %v3245 = vsel %vm884, %v3220, 0
        %3247 = vmatpush.msra.mxu0 0.0
        %3248 = vmatpush.msra.mxu0 0.0
        %3249 = vmatpush.msra.mxu0 0.0
        %3250 = vmatpush.msra.mxu0 0.0
        %3251 = vmatpush.msra.mxu0 0.0
        %3252 = vmatpush.msra.mxu0 0.0
        %3253 = vmatpush.msra.mxu0 0.0
        %3254 = vmatpush.msra.mxu0 0.0
        %3255 = vmatpush.msra.mxu0 0.0
        %3256 = vmatpush.msra.mxu0 0.0
        %3257 = vmatpush.msra.mxu0 0.0
        %3258 = vmatpush.msra.mxu0 0.0
        %3259 = vmatpush.msra.mxu0 0.0
        %3260 = vmatpush.msra.mxu0 0.0
        %3261 = vmatpush.msra.mxu0 %v3236
        %3262 = vmatpush.msra.mxu0 %v3234
        %3263 = vmatmul.f32.gmra.mxu0 %v3245
        %v3264 = vpop.f32.mrf.mxu0
        %v3265 = vadd.f32 0.0, %v3264
        %3266 = vdwg.mxu0
        %3267 = vmatpush.msra.mxu0 0.0
        %3268 = vmatpush.msra.mxu0 0.0
        %3269 = vmatpush.msra.mxu0 0.0
        %3270 = vmatpush.msra.mxu0 0.0
        %3271 = vmatpush.msra.mxu0 0.0
        %3272 = vmatpush.msra.mxu0 0.0
        %3273 = vmatpush.msra.mxu0 0.0
        %3274 = vmatpush.msra.mxu0 0.0
        %3275 = vmatpush.msra.mxu0 0.0
        %3276 = vmatpush.msra.mxu0 0.0
        %3277 = vmatpush.msra.mxu0 0.0
        %3278 = vmatpush.msra.mxu0 0.0
        %3279 = vmatpush.msra.mxu0 0.0
        %3280 = vmatpush.msra.mxu0 0.0
        %3281 = vmatpush.msra.mxu0 %v3237
        %3282 = vmatpush.msra.mxu0 %v3235
        %3283 = vmatmul.f32.gmra.mxu0 %v3245
        %v3284 = vpop.f32.mrf.mxu0
        %v3285 = vadd.f32 0.0, %v3284
        %3286 = vdwg.mxu0
        %3287 = vmatpush.msra.mxu0 0.0
        %3288 = vmatpush.msra.mxu0 0.0
        %3289 = vmatpush.msra.mxu0 0.0
        %3290 = vmatpush.msra.mxu0 0.0
        %3291 = vmatpush.msra.mxu0 0.0
        %3292 = vmatpush.msra.mxu0 0.0
        %3293 = vmatpush.msra.mxu0 0.0
        %3294 = vmatpush.msra.mxu0 0.0
        %3295 = vmatpush.msra.mxu0 0.0
        %3296 = vmatpush.msra.mxu0 0.0
        %3297 = vmatpush.msra.mxu0 0.0
        %3298 = vmatpush.msra.mxu0 0.0
        %3299 = vmatpush.msra.mxu0 0.0
        %3300 = vmatpush.msra.mxu0 0.0
        %3301 = vmatpush.msra.mxu0 %v3232
        %3302 = vmatpush.msra.mxu0 %v3226
        %3303 = vmatmul.f32.gmra.mxu0 %v3245
        %v3304 = vpop.f32.mrf.mxu0
        %v3305 = vadd.f32 0.0, %v3304
        %3306 = vdwg.mxu0
        %v3307 = vadd.f32 %v3216, %v3265
        %v3308 = vadd.f32 %v3217, %v3285
        %v3309 = vadd.f32 %v3218, %v3305
        %s3310 = scalar_lea.vmem %s14, 40
        %v3311 = vld [vmem:[%s3310] sm:$0xff]
        %3312 = vrot.lane.b32.xlu0 %v2875, 108
        %v3313 = vpop.permute.xlu0 %3312
        %3314 = vrot.lane.b32.xlu0 %v2876, 108
        %v3315 = vpop.permute.xlu0 %3314
        %3316 = vrot.lane.b32.xlu0 %v2877, 108
        %v3317 = vpop.permute.xlu0 %3316
        %3318 = vrot.lane.b32.xlu0 %v2878, 108
        %v3319 = vpop.permute.xlu0 %3318
        %3320 = vrot.lane.b32.xlu0 %v2879, 108
        %v3321 = vpop.permute.xlu0 %3320
        %3322 = vrot.lane.b32.xlu0 %v2880, 108
        %v3323 = vpop.permute.xlu0 %3322
        %vm3324 = vcmask 883712
        %v3325 = vsel %vm3324, %v3313, %v3315
        %v3326 = vsel %vm3324, %v3315, %v3317
        %v3327 = vsel %vm3324, %v3319, %v3321
        %v3328 = vsel %vm3324, %v3321, %v3323
        %v3336 = vsel %vm884, %v3311, 0
        %3338 = vmatpush.msra.mxu0 0.0
        %3339 = vmatpush.msra.mxu0 0.0
        %3340 = vmatpush.msra.mxu0 0.0
        %3341 = vmatpush.msra.mxu0 0.0
        %3342 = vmatpush.msra.mxu0 0.0
        %3343 = vmatpush.msra.mxu0 0.0
        %3344 = vmatpush.msra.mxu0 0.0
        %3345 = vmatpush.msra.mxu0 0.0
        %3346 = vmatpush.msra.mxu0 0.0
        %3347 = vmatpush.msra.mxu0 0.0
        %3348 = vmatpush.msra.mxu0 0.0
        %3349 = vmatpush.msra.mxu0 0.0
        %3350 = vmatpush.msra.mxu0 0.0
        %3351 = vmatpush.msra.mxu0 0.0
        %3352 = vmatpush.msra.mxu0 %v3327
        %3353 = vmatpush.msra.mxu0 %v3325
        %3354 = vmatmul.f32.gmra.mxu0 %v3336
        %v3355 = vpop.f32.mrf.mxu0
        %v3356 = vadd.f32 0.0, %v3355
        %3357 = vdwg.mxu0
        %3358 = vmatpush.msra.mxu0 0.0
        %3359 = vmatpush.msra.mxu0 0.0
        %3360 = vmatpush.msra.mxu0 0.0
        %3361 = vmatpush.msra.mxu0 0.0
        %3362 = vmatpush.msra.mxu0 0.0
        %3363 = vmatpush.msra.mxu0 0.0
        %3364 = vmatpush.msra.mxu0 0.0
        %3365 = vmatpush.msra.mxu0 0.0
        %3366 = vmatpush.msra.mxu0 0.0
        %3367 = vmatpush.msra.mxu0 0.0
        %3368 = vmatpush.msra.mxu0 0.0
        %3369 = vmatpush.msra.mxu0 0.0
        %3370 = vmatpush.msra.mxu0 0.0
        %3371 = vmatpush.msra.mxu0 0.0
        %3372 = vmatpush.msra.mxu0 %v3328
        %3373 = vmatpush.msra.mxu0 %v3326
        %3374 = vmatmul.f32.gmra.mxu0 %v3336
        %v3375 = vpop.f32.mrf.mxu0
        %v3376 = vadd.f32 0.0, %v3375
        %3377 = vdwg.mxu0
        %3378 = vmatpush.msra.mxu0 0.0
        %3379 = vmatpush.msra.mxu0 0.0
        %3380 = vmatpush.msra.mxu0 0.0
        %3381 = vmatpush.msra.mxu0 0.0
        %3382 = vmatpush.msra.mxu0 0.0
        %3383 = vmatpush.msra.mxu0 0.0
        %3384 = vmatpush.msra.mxu0 0.0
        %3385 = vmatpush.msra.mxu0 0.0
        %3386 = vmatpush.msra.mxu0 0.0
        %3387 = vmatpush.msra.mxu0 0.0
        %3388 = vmatpush.msra.mxu0 0.0
        %3389 = vmatpush.msra.mxu0 0.0
        %3390 = vmatpush.msra.mxu0 0.0
        %3391 = vmatpush.msra.mxu0 0.0
        %3392 = vmatpush.msra.mxu0 %v3323
        %3393 = vmatpush.msra.mxu0 %v3317
        %3394 = vmatmul.f32.gmra.mxu0 %v3336
        %v3395 = vpop.f32.mrf.mxu0
        %v3396 = vadd.f32 0.0, %v3395
        %3397 = vdwg.mxu0
        %v3398 = vadd.f32 %v3307, %v3356
        %v3399 = vadd.f32 %v3308, %v3376
        %v3400 = vadd.f32 %v3309, %v3396
        %s3401 = scalar_lea.vmem %s14, 48
        %v3402 = vld [vmem:[%s3401] sm:$0xff]
        %3403 = vrot.lane.b32.xlu0 %v2875, 92
        %v3404 = vpop.permute.xlu0 %3403
        %3405 = vrot.lane.b32.xlu0 %v2876, 92
        %v3406 = vpop.permute.xlu0 %3405
        %3407 = vrot.lane.b32.xlu0 %v2877, 92
        %v3408 = vpop.permute.xlu0 %3407
        %3409 = vrot.lane.b32.xlu0 %v2878, 92
        %v3410 = vpop.permute.xlu0 %3409
        %3411 = vrot.lane.b32.xlu0 %v2879, 92
        %v3412 = vpop.permute.xlu0 %3411
        %3413 = vrot.lane.b32.xlu0 %v2880, 92
        %v3414 = vpop.permute.xlu0 %3413
        %vm3415 = vcmask 752640
        %v3416 = vsel %vm3415, %v3404, %v3406
        %v3417 = vsel %vm3415, %v3406, %v3408
        %v3418 = vsel %vm3415, %v3410, %v3412
        %v3419 = vsel %vm3415, %v3412, %v3414
        %v3427 = vsel %vm884, %v3402, 0
        %3429 = vmatpush.msra.mxu0 0.0
        %3430 = vmatpush.msra.mxu0 0.0
        %3431 = vmatpush.msra.mxu0 0.0
        %3432 = vmatpush.msra.mxu0 0.0
        %3433 = vmatpush.msra.mxu0 0.0
        %3434 = vmatpush.msra.mxu0 0.0
        %3435 = vmatpush.msra.mxu0 0.0
        %3436 = vmatpush.msra.mxu0 0.0
        %3437 = vmatpush.msra.mxu0 0.0
        %3438 = vmatpush.msra.mxu0 0.0
        %3439 = vmatpush.msra.mxu0 0.0
        %3440 = vmatpush.msra.mxu0 0.0
        %3441 = vmatpush.msra.mxu0 0.0
        %3442 = vmatpush.msra.mxu0 0.0
        %3443 = vmatpush.msra.mxu0 %v3418
        %3444 = vmatpush.msra.mxu0 %v3416
        %3445 = vmatmul.f32.gmra.mxu0 %v3427
        %v3446 = vpop.f32.mrf.mxu0
        %v3447 = vadd.f32 0.0, %v3446
        %3448 = vdwg.mxu0
        %3449 = vmatpush.msra.mxu0 0.0
        %3450 = vmatpush.msra.mxu0 0.0
        %3451 = vmatpush.msra.mxu0 0.0
        %3452 = vmatpush.msra.mxu0 0.0
        %3453 = vmatpush.msra.mxu0 0.0
        %3454 = vmatpush.msra.mxu0 0.0
        %3455 = vmatpush.msra.mxu0 0.0
        %3456 = vmatpush.msra.mxu0 0.0
        %3457 = vmatpush.msra.mxu0 0.0
        %3458 = vmatpush.msra.mxu0 0.0
        %3459 = vmatpush.msra.mxu0 0.0
        %3460 = vmatpush.msra.mxu0 0.0
        %3461 = vmatpush.msra.mxu0 0.0
        %3462 = vmatpush.msra.mxu0 0.0
        %3463 = vmatpush.msra.mxu0 %v3419
        %3464 = vmatpush.msra.mxu0 %v3417
        %3465 = vmatmul.f32.gmra.mxu0 %v3427
        %v3466 = vpop.f32.mrf.mxu0
        %v3467 = vadd.f32 0.0, %v3466
        %3468 = vdwg.mxu0
        %3469 = vmatpush.msra.mxu0 0.0
        %3470 = vmatpush.msra.mxu0 0.0
        %3471 = vmatpush.msra.mxu0 0.0
        %3472 = vmatpush.msra.mxu0 0.0
        %3473 = vmatpush.msra.mxu0 0.0
        %3474 = vmatpush.msra.mxu0 0.0
        %3475 = vmatpush.msra.mxu0 0.0
        %3476 = vmatpush.msra.mxu0 0.0
        %3477 = vmatpush.msra.mxu0 0.0
        %3478 = vmatpush.msra.mxu0 0.0
        %3479 = vmatpush.msra.mxu0 0.0
        %3480 = vmatpush.msra.mxu0 0.0
        %3481 = vmatpush.msra.mxu0 0.0
        %3482 = vmatpush.msra.mxu0 0.0
        %3483 = vmatpush.msra.mxu0 %v3414
        %3484 = vmatpush.msra.mxu0 %v3408
        %3485 = vmatmul.f32.gmra.mxu0 %v3427
        %v3486 = vpop.f32.mrf.mxu0
        %v3487 = vadd.f32 0.0, %v3486
        %3488 = vdwg.mxu0
        %v3489 = vadd.f32 %v3398, %v3447
        %v3490 = vadd.f32 %v3399, %v3467
        %v3491 = vadd.f32 %v3400, %v3487
        %s3492 = scalar_lea.vmem %s14, 56
        %v3493 = vld [vmem:[%s3492] sm:$0xff]
        %3494 = vrot.lane.b32.xlu0 %v2875, 91
        %v3495 = vpop.permute.xlu0 %3494
        %3496 = vrot.lane.b32.xlu0 %v2876, 91
        %v3497 = vpop.permute.xlu0 %3496
        %3498 = vrot.lane.b32.xlu0 %v2877, 91
        %v3499 = vpop.permute.xlu0 %3498
        %3500 = vrot.lane.b32.xlu0 %v2878, 91
        %v3501 = vpop.permute.xlu0 %3500
        %3502 = vrot.lane.b32.xlu0 %v2879, 91
        %v3503 = vpop.permute.xlu0 %3502
        %3504 = vrot.lane.b32.xlu0 %v2880, 91
        %v3505 = vpop.permute.xlu0 %3504
        %vm3506 = vcmask 744448
        %v3507 = vsel %vm3506, %v3495, %v3497
        %v3508 = vsel %vm3506, %v3497, %v3499
        %v3509 = vsel %vm3506, %v3501, %v3503
        %v3510 = vsel %vm3506, %v3503, %v3505
        %v3518 = vsel %vm884, %v3493, 0
        %3520 = vmatpush.msra.mxu0 0.0
        %3521 = vmatpush.msra.mxu0 0.0
        %3522 = vmatpush.msra.mxu0 0.0
        %3523 = vmatpush.msra.mxu0 0.0
        %3524 = vmatpush.msra.mxu0 0.0
        %3525 = vmatpush.msra.mxu0 0.0
        %3526 = vmatpush.msra.mxu0 0.0
        %3527 = vmatpush.msra.mxu0 0.0
        %3528 = vmatpush.msra.mxu0 0.0
        %3529 = vmatpush.msra.mxu0 0.0
        %3530 = vmatpush.msra.mxu0 0.0
        %3531 = vmatpush.msra.mxu0 0.0
        %3532 = vmatpush.msra.mxu0 0.0
        %3533 = vmatpush.msra.mxu0 0.0
        %3534 = vmatpush.msra.mxu0 %v3509
        %3535 = vmatpush.msra.mxu0 %v3507
        %3536 = vmatmul.f32.gmra.mxu0 %v3518
        %v3537 = vpop.f32.mrf.mxu0
        %v3538 = vadd.f32 0.0, %v3537
        %3539 = vdwg.mxu0
        %3540 = vmatpush.msra.mxu0 0.0
        %3541 = vmatpush.msra.mxu0 0.0
        %3542 = vmatpush.msra.mxu0 0.0
        %3543 = vmatpush.msra.mxu0 0.0
        %3544 = vmatpush.msra.mxu0 0.0
        %3545 = vmatpush.msra.mxu0 0.0
        %3546 = vmatpush.msra.mxu0 0.0
        %3547 = vmatpush.msra.mxu0 0.0
        %3548 = vmatpush.msra.mxu0 0.0
        %3549 = vmatpush.msra.mxu0 0.0
        %3550 = vmatpush.msra.mxu0 0.0
        %3551 = vmatpush.msra.mxu0 0.0
        %3552 = vmatpush.msra.mxu0 0.0
        %3553 = vmatpush.msra.mxu0 0.0
        %3554 = vmatpush.msra.mxu0 %v3510
        %3555 = vmatpush.msra.mxu0 %v3508
        %3556 = vmatmul.f32.gmra.mxu0 %v3518
        %v3557 = vpop.f32.mrf.mxu0
        %v3558 = vadd.f32 0.0, %v3557
        %3559 = vdwg.mxu0
        %3560 = vmatpush.msra.mxu0 0.0
        %3561 = vmatpush.msra.mxu0 0.0
        %3562 = vmatpush.msra.mxu0 0.0
        %3563 = vmatpush.msra.mxu0 0.0
        %3564 = vmatpush.msra.mxu0 0.0
        %3565 = vmatpush.msra.mxu0 0.0
        %3566 = vmatpush.msra.mxu0 0.0
        %3567 = vmatpush.msra.mxu0 0.0
        %3568 = vmatpush.msra.mxu0 0.0
        %3569 = vmatpush.msra.mxu0 0.0
        %3570 = vmatpush.msra.mxu0 0.0
        %3571 = vmatpush.msra.mxu0 0.0
        %3572 = vmatpush.msra.mxu0 0.0
        %3573 = vmatpush.msra.mxu0 0.0
        %3574 = vmatpush.msra.mxu0 %v3505
        %3575 = vmatpush.msra.mxu0 %v3499
        %3576 = vmatmul.f32.gmra.mxu0 %v3518
        %v3577 = vpop.f32.mrf.mxu0
        %v3578 = vadd.f32 0.0, %v3577
        %3579 = vdwg.mxu0
        %v3580 = vadd.f32 %v3489, %v3538
        %v3581 = vadd.f32 %v3490, %v3558
        %v3582 = vadd.f32 %v3491, %v3578
        %s3583 = scalar_lea.vmem %s14, 64
        %v3584 = vld [vmem:[%s3583] sm:$0xff]
        %3585 = vrot.lane.b32.xlu0 %v2875, 90
        %v3586 = vpop.permute.xlu0 %3585
        %3587 = vrot.lane.b32.xlu0 %v2876, 90
        %v3588 = vpop.permute.xlu0 %3587
        %3589 = vrot.lane.b32.xlu0 %v2877, 90
        %v3590 = vpop.permute.xlu0 %3589
        %3591 = vrot.lane.b32.xlu0 %v2878, 90
        %v3592 = vpop.permute.xlu0 %3591
        %3593 = vrot.lane.b32.xlu0 %v2879, 90
        %v3594 = vpop.permute.xlu0 %3593
        %3595 = vrot.lane.b32.xlu0 %v2880, 90
        %v3596 = vpop.permute.xlu0 %3595
        %vm3597 = vcmask 736256
        %v3598 = vsel %vm3597, %v3586, %v3588
        %v3599 = vsel %vm3597, %v3588, %v3590
        %v3600 = vsel %vm3597, %v3592, %v3594
        %v3601 = vsel %vm3597, %v3594, %v3596
        %v3609 = vsel %vm884, %v3584, 0
        %3611 = vmatpush.msra.mxu0 0.0
        %3612 = vmatpush.msra.mxu0 0.0
        %3613 = vmatpush.msra.mxu0 0.0
        %3614 = vmatpush.msra.mxu0 0.0
        %3615 = vmatpush.msra.mxu0 0.0
        %3616 = vmatpush.msra.mxu0 0.0
        %3617 = vmatpush.msra.mxu0 0.0
        %3618 = vmatpush.msra.mxu0 0.0
        %3619 = vmatpush.msra.mxu0 0.0
        %3620 = vmatpush.msra.mxu0 0.0
        %3621 = vmatpush.msra.mxu0 0.0
        %3622 = vmatpush.msra.mxu0 0.0
        %3623 = vmatpush.msra.mxu0 0.0
        %3624 = vmatpush.msra.mxu0 0.0
        %3625 = vmatpush.msra.mxu0 %v3600
        %3626 = vmatpush.msra.mxu0 %v3598
        %3627 = vmatmul.f32.gmra.mxu0 %v3609
        %v3628 = vpop.f32.mrf.mxu0
        %v3629 = vadd.f32 0.0, %v3628
        %3630 = vdwg.mxu0
        %3631 = vmatpush.msra.mxu0 0.0
        %3632 = vmatpush.msra.mxu0 0.0
        %3633 = vmatpush.msra.mxu0 0.0
        %3634 = vmatpush.msra.mxu0 0.0
        %3635 = vmatpush.msra.mxu0 0.0
        %3636 = vmatpush.msra.mxu0 0.0
        %3637 = vmatpush.msra.mxu0 0.0
        %3638 = vmatpush.msra.mxu0 0.0
        %3639 = vmatpush.msra.mxu0 0.0
        %3640 = vmatpush.msra.mxu0 0.0
        %3641 = vmatpush.msra.mxu0 0.0
        %3642 = vmatpush.msra.mxu0 0.0
        %3643 = vmatpush.msra.mxu0 0.0
        %3644 = vmatpush.msra.mxu0 0.0
        %3645 = vmatpush.msra.mxu0 %v3601
        %3646 = vmatpush.msra.mxu0 %v3599
        %3647 = vmatmul.f32.gmra.mxu0 %v3609
        %v3648 = vpop.f32.mrf.mxu0
        %v3649 = vadd.f32 0.0, %v3648
        %3650 = vdwg.mxu0
        %3651 = vmatpush.msra.mxu0 0.0
        %3652 = vmatpush.msra.mxu0 0.0
        %3653 = vmatpush.msra.mxu0 0.0
        %3654 = vmatpush.msra.mxu0 0.0
        %3655 = vmatpush.msra.mxu0 0.0
        %3656 = vmatpush.msra.mxu0 0.0
        %3657 = vmatpush.msra.mxu0 0.0
        %3658 = vmatpush.msra.mxu0 0.0
        %3659 = vmatpush.msra.mxu0 0.0
        %3660 = vmatpush.msra.mxu0 0.0
        %3661 = vmatpush.msra.mxu0 0.0
        %3662 = vmatpush.msra.mxu0 0.0
        %3663 = vmatpush.msra.mxu0 0.0
        %3664 = vmatpush.msra.mxu0 0.0
        %3665 = vmatpush.msra.mxu0 %v3596
        %3666 = vmatpush.msra.mxu0 %v3590
        %3667 = vmatmul.f32.gmra.mxu0 %v3609
        %v3668 = vpop.f32.mrf.mxu0
        %v3669 = vadd.f32 0.0, %v3668
        %3670 = vdwg.mxu0
        %v3671 = vadd.f32 %v3580, %v3629
        %v3672 = vadd.f32 %v3581, %v3649
        %v3673 = vadd.f32 %v3582, %v3669
        %3675 = vset.pattern.permute.xlu0 0
        %3676 = vperm.xlu0 %3675, %v2867
        %v3677 = vpop.permute.xlu0 %3676
        %v3679 = vadd.f32 %v3671, %v3677
        %v3680 = vadd.f32 %v3672, %v3677
        %v3681 = vadd.f32 %v3673, %v3677
        %v3683 = vperm.slane %v2872, 0
        %v3684 = vperm.slane %v2872, 1
        %v3685 = vperm.slane %v2872, 2
        %v3689 = vmul.f32 %v3679, %v3683
        %v3690 = vmul.f32 %v3680, %v3684
        %v3691 = vmul.f32 %v3681, %v3685
        %v3692 = vadd.f32 %v3689, %v3690
        %v3693 = vsel %vm809, %v3691, 0.0
        %v3694 = vadd.f32 %v3692, %v3693
        %3695 = vadd.xlane.f32.xlu0 %v3694
        %v3696 = vpop.xlane.xlu0 %3695
        %v3697 = vmul.f32 %v3696, 0.00390625
        %v3698 = vsub.f32 %v3679, %v3697
        %v3699 = vsub.f32 %v3680, %v3697
        %v3700 = vsub.f32 %v3681, %v3697
        %v3701 = vmul.f32 %v3698, %v3683
        %v3702 = vmul.f32 %v3699, %v3684
        %v3703 = vmul.f32 %v3700, %v3685
        %v3704 = vmul.f32 %v3701, %v3701
        %v3705 = vmul.f32 %v3702, %v3702
        %v3706 = vmul.f32 %v3703, %v3703
        %v3707 = vadd.f32 %v3704, %v3705
        %v3708 = vsel %vm809, %v3706, 0.0
        %v3709 = vadd.f32 %v3707, %v3708
        %3710 = vadd.xlane.f32.xlu0 %v3709
        %v3711 = vpop.xlane.xlu0 %3710
        %v3712 = vmul.f32 %v3711, 0.00390625
        %v3713 = vadd.f32 %v3712, 1e-05
        %v3714 = vrsqrt.pop %v3713
        %v3715 = vmul.f32 %v3714, %v3713
        %v3716 = vmul.f32 %v3715, %v3714
        %v3717 = vmul.f32 0.5, %v3716
        %v3718 = vsub.f32 1.5, %v3717
        %v3719 = vmul.f32 %v3714, %v3718
        %vm3720 = vweird.f32 %v3713
        %vm3721 = vweird.f32 %v3714
        %vm3722 = vmor %vm3720, %vm3721
        %v3723 = vsel %vm3722, %v3714, %v3719
        %v3724 = vmul.f32 %v3698, %v3723
        %v3725 = vmul.f32 %v3699, %v3723
        %v3726 = vmul.f32 %v3700, %v3723
        %3728 = vset.pattern.permute.xlu0 2
        %3729 = vperm.xlu0 %3728, %v2873
        %v3730 = vpop.permute.xlu0 %3729
        %v3732 = vmul.f32 %v3724, %v3730
        %v3733 = vmul.f32 %v3725, %v3730
        %v3734 = vmul.f32 %v3726, %v3730
        %3735 = vset.pattern.permute.xlu0 3
        %3736 = vperm.xlu0 %3735, %v2873
        %v3737 = vpop.permute.xlu0 %3736
        %v3739 = vadd.f32 %v3732, %v3737
        %v3740 = vadd.f32 %v3733, %v3737
        %v3741 = vadd.f32 %v3734, %v3737
        %vm3742 = vcmp.ge.f32.partialorder %v3739, 0.0
        %vm3743 = vcmp.ge.f32.partialorder %v3740, 0.0
        %vm3744 = vcmp.ge.f32.partialorder %v3741, 0.0
        %v3745 = vmul.f32 %v3739, 0.01
        %v3746 = vmul.f32 %v3740, 0.01
        %v3747 = vmul.f32 %v3741, 0.01
        %v3748 = vsel %vm3742, %v3739, %v3745
        %v3749 = vsel %vm3743, %v3740, %v3746
        %v3750 = vsel %vm3744, %v3741, %v3747
        %v3751 = vmul.f32 %v3748, %v3683
        %v3752 = vmul.f32 %v3749, %v3684
        %v3753 = vmul.f32 %v3750, %v3685
        %3757 = vrot.lane.b32.xlu0 %v3751, 19
        %v3758 = vpop.permute.xlu0 %3757
        %3759 = vrot.lane.b32.xlu0 %v3752, 19
        %v3760 = vpop.permute.xlu0 %3759
        %3761 = vrot.lane.b32.xlu0 %v3753, 19
        %v3762 = vpop.permute.xlu0 %3761
        %vm3763 = vcmask 154624
        %v3764 = vsel %vm3763, %v3758, %v3760
        %v3765 = vsel %vm3763, %v3760, %v3762
        %vm3769 = vcmask 1047704
        %3770 = vst.msk [vmem:[#allocation3] sm:$0xff] %vm3769, %v3758
        %3771 = vst [vmem:[#allocation3 + $0x8] sm:$0xff] %v3764
        %vm3772 = vcmask 416768
        %3773 = vst.msk [vmem:[#allocation3 + $0x10] sm:$0xff] %vm3772, %v3765
        %v3774 = vld [vmem:[%s17 + $0x8] sm:$0xff]
        %v3775 = vld [vmem:[%s15] sm:$0xff]
        %v3776 = vld [vmem:[#allocation3] sm:$0xff]
        %v3777 = vld [vmem:[#allocation3 + $0x8] sm:$0xff]
        %v3778 = vld [vmem:[#allocation3 + $0x10] sm:$0xff]
        %s3779 = scalar_lea.vmem %s15, 8
        %v3780 = vld [vmem:[%s3779] sm:$0xff]
        %3784 = vrot.lane.b32.xlu0 %v3776, 127
        %v3785 = vpop.permute.xlu0 %3784
        %3786 = vrot.lane.b32.xlu0 %v3777, 127
        %v3787 = vpop.permute.xlu0 %3786
        %3788 = vrot.lane.b32.xlu0 %v3778, 127
        %v3789 = vpop.permute.xlu0 %3788
        %v3790 = vsel %vm2901, %v3785, %v3787
        %v3791 = vsel %vm2901, %v3787, %v3789
        %vm3795 = vcmask 64512
        %v3797 = vsel %vm3795, %v3780, 0
        %3799 = vmatpush.msra.mxu0 0.0
        %3800 = vmatpush.msra.mxu0 0.0
        %3801 = vmatpush.msra.mxu0 0.0
        %3802 = vmatpush.msra.mxu0 0.0
        %3803 = vmatpush.msra.mxu0 0.0
        %3804 = vmatpush.msra.mxu0 0.0
        %3805 = vmatpush.msra.mxu0 0.0
        %3806 = vmatpush.msra.mxu0 0.0
        %3807 = vmatpush.msra.mxu0 0.0
        %3808 = vmatpush.msra.mxu0 0.0
        %3809 = vmatpush.msra.mxu0 0.0
        %3810 = vmatpush.msra.mxu0 0.0
        %3811 = vmatpush.msra.mxu0 0.0
        %3812 = vmatpush.msra.mxu0 0.0
        %3813 = vmatpush.msra.mxu0 0.0
        %3814 = vmatpush.msra.mxu0 %v3790
        %3815 = vmatmul.f32.gmra.mxu0 %v3797
        %v3816 = vpop.f32.mrf.mxu0
        %v3817 = vadd.f32 0.0, %v3816
        %3818 = vdwg.mxu0
        %3819 = vmatpush.msra.mxu0 0.0
        %3820 = vmatpush.msra.mxu0 0.0
        %3821 = vmatpush.msra.mxu0 0.0
        %3822 = vmatpush.msra.mxu0 0.0
        %3823 = vmatpush.msra.mxu0 0.0
        %3824 = vmatpush.msra.mxu0 0.0
        %3825 = vmatpush.msra.mxu0 0.0
        %3826 = vmatpush.msra.mxu0 0.0
        %3827 = vmatpush.msra.mxu0 0.0
        %3828 = vmatpush.msra.mxu0 0.0
        %3829 = vmatpush.msra.mxu0 0.0
        %3830 = vmatpush.msra.mxu0 0.0
        %3831 = vmatpush.msra.mxu0 0.0
        %3832 = vmatpush.msra.mxu0 0.0
        %3833 = vmatpush.msra.mxu0 0.0
        %3834 = vmatpush.msra.mxu0 %v3791
        %3835 = vmatmul.f32.gmra.mxu0 %v3797
        %v3836 = vpop.f32.mrf.mxu0
        %v3837 = vadd.f32 0.0, %v3836
        %3838 = vdwg.mxu0
        %3839 = vmatpush.msra.mxu0 0.0
        %3840 = vmatpush.msra.mxu0 0.0
        %3841 = vmatpush.msra.mxu0 0.0
        %3842 = vmatpush.msra.mxu0 0.0
        %3843 = vmatpush.msra.mxu0 0.0
        %3844 = vmatpush.msra.mxu0 0.0
        %3845 = vmatpush.msra.mxu0 0.0
        %3846 = vmatpush.msra.mxu0 0.0
        %3847 = vmatpush.msra.mxu0 0.0
        %3848 = vmatpush.msra.mxu0 0.0
        %3849 = vmatpush.msra.mxu0 0.0
        %3850 = vmatpush.msra.mxu0 0.0
        %3851 = vmatpush.msra.mxu0 0.0
        %3852 = vmatpush.msra.mxu0 0.0
        %3853 = vmatpush.msra.mxu0 0.0
        %3854 = vmatpush.msra.mxu0 %v3789
        %3855 = vmatmul.f32.gmra.mxu0 %v3797
        %v3856 = vpop.f32.mrf.mxu0
        %v3857 = vadd.f32 0.0, %v3856
        %3858 = vdwg.mxu0
        %v3860 = vsel %vm3795, %v3775, 0
        %3862 = vmatpush.msra.mxu0 0.0
        %3863 = vmatpush.msra.mxu0 0.0
        %3864 = vmatpush.msra.mxu0 0.0
        %3865 = vmatpush.msra.mxu0 0.0
        %3866 = vmatpush.msra.mxu0 0.0
        %3867 = vmatpush.msra.mxu0 0.0
        %3868 = vmatpush.msra.mxu0 0.0
        %3869 = vmatpush.msra.mxu0 0.0
        %3870 = vmatpush.msra.mxu0 0.0
        %3871 = vmatpush.msra.mxu0 0.0
        %3872 = vmatpush.msra.mxu0 0.0
        %3873 = vmatpush.msra.mxu0 0.0
        %3874 = vmatpush.msra.mxu0 0.0
        %3875 = vmatpush.msra.mxu0 0.0
        %3876 = vmatpush.msra.mxu0 0.0
        %3877 = vmatpush.msra.mxu0 %v3776
        %3878 = vmatmul.f32.gmra.mxu0 %v3860
        %v3879 = vpop.f32.mrf.mxu0
        %v3880 = vadd.f32 %v3817, %v3879
        %3881 = vdwg.mxu0
        %3882 = vmatpush.msra.mxu0 0.0
        %3883 = vmatpush.msra.mxu0 0.0
        %3884 = vmatpush.msra.mxu0 0.0
        %3885 = vmatpush.msra.mxu0 0.0
        %3886 = vmatpush.msra.mxu0 0.0
        %3887 = vmatpush.msra.mxu0 0.0
        %3888 = vmatpush.msra.mxu0 0.0
        %3889 = vmatpush.msra.mxu0 0.0
        %3890 = vmatpush.msra.mxu0 0.0
        %3891 = vmatpush.msra.mxu0 0.0
        %3892 = vmatpush.msra.mxu0 0.0
        %3893 = vmatpush.msra.mxu0 0.0
        %3894 = vmatpush.msra.mxu0 0.0
        %3895 = vmatpush.msra.mxu0 0.0
        %3896 = vmatpush.msra.mxu0 0.0
        %3897 = vmatpush.msra.mxu0 %v3777
        %3898 = vmatmul.f32.gmra.mxu0 %v3860
        %v3899 = vpop.f32.mrf.mxu0
        %v3900 = vadd.f32 %v3837, %v3899
        %3901 = vdwg.mxu0
        %3902 = vmatpush.msra.mxu0 0.0
        %3903 = vmatpush.msra.mxu0 0.0
        %3904 = vmatpush.msra.mxu0 0.0
        %3905 = vmatpush.msra.mxu0 0.0
        %3906 = vmatpush.msra.mxu0 0.0
        %3907 = vmatpush.msra.mxu0 0.0
        %3908 = vmatpush.msra.mxu0 0.0
        %3909 = vmatpush.msra.mxu0 0.0
        %3910 = vmatpush.msra.mxu0 0.0
        %3911 = vmatpush.msra.mxu0 0.0
        %3912 = vmatpush.msra.mxu0 0.0
        %3913 = vmatpush.msra.mxu0 0.0
        %3914 = vmatpush.msra.mxu0 0.0
        %3915 = vmatpush.msra.mxu0 0.0
        %3916 = vmatpush.msra.mxu0 0.0
        %3917 = vmatpush.msra.mxu0 %v3778
        %3918 = vmatmul.f32.gmra.mxu0 %v3860
        %v3919 = vpop.f32.mrf.mxu0
        %v3920 = vadd.f32 %v3857, %v3919
        %3921 = vdwg.mxu0
        %s3922 = scalar_lea.vmem %s15, 16
        %v3923 = vld [vmem:[%s3922] sm:$0xff]
        %3924 = vrot.lane.b32.xlu0 %v3776, 126
        %v3925 = vpop.permute.xlu0 %3924
        %3926 = vrot.lane.b32.xlu0 %v3777, 126
        %v3927 = vpop.permute.xlu0 %3926
        %3928 = vrot.lane.b32.xlu0 %v3778, 126
        %v3929 = vpop.permute.xlu0 %3928
        %v3930 = vsel %vm3052, %v3925, %v3927
        %v3931 = vsel %vm3052, %v3927, %v3929
        %v3936 = vsel %vm3795, %v3923, 0
        %3938 = vmatpush.msra.mxu0 0.0
        %3939 = vmatpush.msra.mxu0 0.0
        %3940 = vmatpush.msra.mxu0 0.0
        %3941 = vmatpush.msra.mxu0 0.0
        %3942 = vmatpush.msra.mxu0 0.0
        %3943 = vmatpush.msra.mxu0 0.0
        %3944 = vmatpush.msra.mxu0 0.0
        %3945 = vmatpush.msra.mxu0 0.0
        %3946 = vmatpush.msra.mxu0 0.0
        %3947 = vmatpush.msra.mxu0 0.0
        %3948 = vmatpush.msra.mxu0 0.0
        %3949 = vmatpush.msra.mxu0 0.0
        %3950 = vmatpush.msra.mxu0 0.0
        %3951 = vmatpush.msra.mxu0 0.0
        %3952 = vmatpush.msra.mxu0 0.0
        %3953 = vmatpush.msra.mxu0 %v3930
        %3954 = vmatmul.f32.gmra.mxu0 %v3936
        %v3955 = vpop.f32.mrf.mxu0
        %v3956 = vadd.f32 0.0, %v3955
        %3957 = vdwg.mxu0
        %3958 = vmatpush.msra.mxu0 0.0
        %3959 = vmatpush.msra.mxu0 0.0
        %3960 = vmatpush.msra.mxu0 0.0
        %3961 = vmatpush.msra.mxu0 0.0
        %3962 = vmatpush.msra.mxu0 0.0
        %3963 = vmatpush.msra.mxu0 0.0
        %3964 = vmatpush.msra.mxu0 0.0
        %3965 = vmatpush.msra.mxu0 0.0
        %3966 = vmatpush.msra.mxu0 0.0
        %3967 = vmatpush.msra.mxu0 0.0
        %3968 = vmatpush.msra.mxu0 0.0
        %3969 = vmatpush.msra.mxu0 0.0
        %3970 = vmatpush.msra.mxu0 0.0
        %3971 = vmatpush.msra.mxu0 0.0
        %3972 = vmatpush.msra.mxu0 0.0
        %3973 = vmatpush.msra.mxu0 %v3931
        %3974 = vmatmul.f32.gmra.mxu0 %v3936
        %v3975 = vpop.f32.mrf.mxu0
        %v3976 = vadd.f32 0.0, %v3975
        %3977 = vdwg.mxu0
        %3978 = vmatpush.msra.mxu0 0.0
        %3979 = vmatpush.msra.mxu0 0.0
        %3980 = vmatpush.msra.mxu0 0.0
        %3981 = vmatpush.msra.mxu0 0.0
        %3982 = vmatpush.msra.mxu0 0.0
        %3983 = vmatpush.msra.mxu0 0.0
        %3984 = vmatpush.msra.mxu0 0.0
        %3985 = vmatpush.msra.mxu0 0.0
        %3986 = vmatpush.msra.mxu0 0.0
        %3987 = vmatpush.msra.mxu0 0.0
        %3988 = vmatpush.msra.mxu0 0.0
        %3989 = vmatpush.msra.mxu0 0.0
        %3990 = vmatpush.msra.mxu0 0.0
        %3991 = vmatpush.msra.mxu0 0.0
        %3992 = vmatpush.msra.mxu0 0.0
        %3993 = vmatpush.msra.mxu0 %v3929
        %3994 = vmatmul.f32.gmra.mxu0 %v3936
        %v3995 = vpop.f32.mrf.mxu0
        %v3996 = vadd.f32 0.0, %v3995
        %3997 = vdwg.mxu0
        %v3998 = vadd.f32 %v3880, %v3956
        %v3999 = vadd.f32 %v3900, %v3976
        %v4000 = vadd.f32 %v3920, %v3996
        %s4001 = scalar_lea.vmem %s15, 24
        %v4002 = vld [vmem:[%s4001] sm:$0xff]
        %4003 = vrot.lane.b32.xlu0 %v3776, 110
        %v4004 = vpop.permute.xlu0 %4003
        %4005 = vrot.lane.b32.xlu0 %v3777, 110
        %v4006 = vpop.permute.xlu0 %4005
        %4007 = vrot.lane.b32.xlu0 %v3778, 110
        %v4008 = vpop.permute.xlu0 %4007
        %v4009 = vsel %vm1015, %v4004, %v4006
        %v4010 = vsel %vm1015, %v4006, %v4008
        %v4015 = vsel %vm3795, %v4002, 0
        %4017 = vmatpush.msra.mxu0 0.0
        %4018 = vmatpush.msra.mxu0 0.0
        %4019 = vmatpush.msra.mxu0 0.0
        %4020 = vmatpush.msra.mxu0 0.0
        %4021 = vmatpush.msra.mxu0 0.0
        %4022 = vmatpush.msra.mxu0 0.0
        %4023 = vmatpush.msra.mxu0 0.0
        %4024 = vmatpush.msra.mxu0 0.0
        %4025 = vmatpush.msra.mxu0 0.0
        %4026 = vmatpush.msra.mxu0 0.0
        %4027 = vmatpush.msra.mxu0 0.0
        %4028 = vmatpush.msra.mxu0 0.0
        %4029 = vmatpush.msra.mxu0 0.0
        %4030 = vmatpush.msra.mxu0 0.0
        %4031 = vmatpush.msra.mxu0 0.0
        %4032 = vmatpush.msra.mxu0 %v4009
        %4033 = vmatmul.f32.gmra.mxu0 %v4015
        %v4034 = vpop.f32.mrf.mxu0
        %v4035 = vadd.f32 0.0, %v4034
        %4036 = vdwg.mxu0
        %4037 = vmatpush.msra.mxu0 0.0
        %4038 = vmatpush.msra.mxu0 0.0
        %4039 = vmatpush.msra.mxu0 0.0
        %4040 = vmatpush.msra.mxu0 0.0
        %4041 = vmatpush.msra.mxu0 0.0
        %4042 = vmatpush.msra.mxu0 0.0
        %4043 = vmatpush.msra.mxu0 0.0
        %4044 = vmatpush.msra.mxu0 0.0
        %4045 = vmatpush.msra.mxu0 0.0
        %4046 = vmatpush.msra.mxu0 0.0
        %4047 = vmatpush.msra.mxu0 0.0
        %4048 = vmatpush.msra.mxu0 0.0
        %4049 = vmatpush.msra.mxu0 0.0
        %4050 = vmatpush.msra.mxu0 0.0
        %4051 = vmatpush.msra.mxu0 0.0
        %4052 = vmatpush.msra.mxu0 %v4010
        %4053 = vmatmul.f32.gmra.mxu0 %v4015
        %v4054 = vpop.f32.mrf.mxu0
        %v4055 = vadd.f32 0.0, %v4054
        %4056 = vdwg.mxu0
        %4057 = vmatpush.msra.mxu0 0.0
        %4058 = vmatpush.msra.mxu0 0.0
        %4059 = vmatpush.msra.mxu0 0.0
        %4060 = vmatpush.msra.mxu0 0.0
        %4061 = vmatpush.msra.mxu0 0.0
        %4062 = vmatpush.msra.mxu0 0.0
        %4063 = vmatpush.msra.mxu0 0.0
        %4064 = vmatpush.msra.mxu0 0.0
        %4065 = vmatpush.msra.mxu0 0.0
        %4066 = vmatpush.msra.mxu0 0.0
        %4067 = vmatpush.msra.mxu0 0.0
        %4068 = vmatpush.msra.mxu0 0.0
        %4069 = vmatpush.msra.mxu0 0.0
        %4070 = vmatpush.msra.mxu0 0.0
        %4071 = vmatpush.msra.mxu0 0.0
        %4072 = vmatpush.msra.mxu0 %v4008
        %4073 = vmatmul.f32.gmra.mxu0 %v4015
        %v4074 = vpop.f32.mrf.mxu0
        %v4075 = vadd.f32 0.0, %v4074
        %4076 = vdwg.mxu0
        %v4077 = vadd.f32 %v3998, %v4035
        %v4078 = vadd.f32 %v3999, %v4055
        %v4079 = vadd.f32 %v4000, %v4075
        %s4080 = scalar_lea.vmem %s15, 32
        %v4081 = vld [vmem:[%s4080] sm:$0xff]
        %4082 = vrot.lane.b32.xlu0 %v3776, 109
        %v4083 = vpop.permute.xlu0 %4082
        %4084 = vrot.lane.b32.xlu0 %v3777, 109
        %v4085 = vpop.permute.xlu0 %4084
        %4086 = vrot.lane.b32.xlu0 %v3778, 109
        %v4087 = vpop.permute.xlu0 %4086
        %v4088 = vsel %vm3233, %v4083, %v4085
        %v4089 = vsel %vm3233, %v4085, %v4087
        %v4094 = vsel %vm3795, %v4081, 0
        %4096 = vmatpush.msra.mxu0 0.0
        %4097 = vmatpush.msra.mxu0 0.0
        %4098 = vmatpush.msra.mxu0 0.0
        %4099 = vmatpush.msra.mxu0 0.0
        %4100 = vmatpush.msra.mxu0 0.0
        %4101 = vmatpush.msra.mxu0 0.0
        %4102 = vmatpush.msra.mxu0 0.0
        %4103 = vmatpush.msra.mxu0 0.0
        %4104 = vmatpush.msra.mxu0 0.0
        %4105 = vmatpush.msra.mxu0 0.0
        %4106 = vmatpush.msra.mxu0 0.0
        %4107 = vmatpush.msra.mxu0 0.0
        %4108 = vmatpush.msra.mxu0 0.0
        %4109 = vmatpush.msra.mxu0 0.0
        %4110 = vmatpush.msra.mxu0 0.0
        %4111 = vmatpush.msra.mxu0 %v4088
        %4112 = vmatmul.f32.gmra.mxu0 %v4094
        %v4113 = vpop.f32.mrf.mxu0
        %v4114 = vadd.f32 0.0, %v4113
        %4115 = vdwg.mxu0
        %4116 = vmatpush.msra.mxu0 0.0
        %4117 = vmatpush.msra.mxu0 0.0
        %4118 = vmatpush.msra.mxu0 0.0
        %4119 = vmatpush.msra.mxu0 0.0
        %4120 = vmatpush.msra.mxu0 0.0
        %4121 = vmatpush.msra.mxu0 0.0
        %4122 = vmatpush.msra.mxu0 0.0
        %4123 = vmatpush.msra.mxu0 0.0
        %4124 = vmatpush.msra.mxu0 0.0
        %4125 = vmatpush.msra.mxu0 0.0
        %4126 = vmatpush.msra.mxu0 0.0
        %4127 = vmatpush.msra.mxu0 0.0
        %4128 = vmatpush.msra.mxu0 0.0
        %4129 = vmatpush.msra.mxu0 0.0
        %4130 = vmatpush.msra.mxu0 0.0
        %4131 = vmatpush.msra.mxu0 %v4089
        %4132 = vmatmul.f32.gmra.mxu0 %v4094
        %v4133 = vpop.f32.mrf.mxu0
        %v4134 = vadd.f32 0.0, %v4133
        %4135 = vdwg.mxu0
        %4136 = vmatpush.msra.mxu0 0.0
        %4137 = vmatpush.msra.mxu0 0.0
        %4138 = vmatpush.msra.mxu0 0.0
        %4139 = vmatpush.msra.mxu0 0.0
        %4140 = vmatpush.msra.mxu0 0.0
        %4141 = vmatpush.msra.mxu0 0.0
        %4142 = vmatpush.msra.mxu0 0.0
        %4143 = vmatpush.msra.mxu0 0.0
        %4144 = vmatpush.msra.mxu0 0.0
        %4145 = vmatpush.msra.mxu0 0.0
        %4146 = vmatpush.msra.mxu0 0.0
        %4147 = vmatpush.msra.mxu0 0.0
        %4148 = vmatpush.msra.mxu0 0.0
        %4149 = vmatpush.msra.mxu0 0.0
        %4150 = vmatpush.msra.mxu0 0.0
        %4151 = vmatpush.msra.mxu0 %v4087
        %4152 = vmatmul.f32.gmra.mxu0 %v4094
        %v4153 = vpop.f32.mrf.mxu0
        %v4154 = vadd.f32 0.0, %v4153
        %4155 = vdwg.mxu0
        %v4156 = vadd.f32 %v4077, %v4114
        %v4157 = vadd.f32 %v4078, %v4134
        %v4158 = vadd.f32 %v4079, %v4154
        %s4159 = scalar_lea.vmem %s15, 40
        %v4160 = vld [vmem:[%s4159] sm:$0xff]
        %4161 = vrot.lane.b32.xlu0 %v3776, 108
        %v4162 = vpop.permute.xlu0 %4161
        %4163 = vrot.lane.b32.xlu0 %v3777, 108
        %v4164 = vpop.permute.xlu0 %4163
        %4165 = vrot.lane.b32.xlu0 %v3778, 108
        %v4166 = vpop.permute.xlu0 %4165
        %v4167 = vsel %vm3324, %v4162, %v4164
        %v4168 = vsel %vm3324, %v4164, %v4166
        %v4173 = vsel %vm3795, %v4160, 0
        %4175 = vmatpush.msra.mxu0 0.0
        %4176 = vmatpush.msra.mxu0 0.0
        %4177 = vmatpush.msra.mxu0 0.0
        %4178 = vmatpush.msra.mxu0 0.0
        %4179 = vmatpush.msra.mxu0 0.0
        %4180 = vmatpush.msra.mxu0 0.0
        %4181 = vmatpush.msra.mxu0 0.0
        %4182 = vmatpush.msra.mxu0 0.0
        %4183 = vmatpush.msra.mxu0 0.0
        %4184 = vmatpush.msra.mxu0 0.0
        %4185 = vmatpush.msra.mxu0 0.0
        %4186 = vmatpush.msra.mxu0 0.0
        %4187 = vmatpush.msra.mxu0 0.0
        %4188 = vmatpush.msra.mxu0 0.0
        %4189 = vmatpush.msra.mxu0 0.0
        %4190 = vmatpush.msra.mxu0 %v4167
        %4191 = vmatmul.f32.gmra.mxu0 %v4173
        %v4192 = vpop.f32.mrf.mxu0
        %v4193 = vadd.f32 0.0, %v4192
        %4194 = vdwg.mxu0
        %4195 = vmatpush.msra.mxu0 0.0
        %4196 = vmatpush.msra.mxu0 0.0
        %4197 = vmatpush.msra.mxu0 0.0
        %4198 = vmatpush.msra.mxu0 0.0
        %4199 = vmatpush.msra.mxu0 0.0
        %4200 = vmatpush.msra.mxu0 0.0
        %4201 = vmatpush.msra.mxu0 0.0
        %4202 = vmatpush.msra.mxu0 0.0
        %4203 = vmatpush.msra.mxu0 0.0
        %4204 = vmatpush.msra.mxu0 0.0
        %4205 = vmatpush.msra.mxu0 0.0
        %4206 = vmatpush.msra.mxu0 0.0
        %4207 = vmatpush.msra.mxu0 0.0
        %4208 = vmatpush.msra.mxu0 0.0
        %4209 = vmatpush.msra.mxu0 0.0
        %4210 = vmatpush.msra.mxu0 %v4168
        %4211 = vmatmul.f32.gmra.mxu0 %v4173
        %v4212 = vpop.f32.mrf.mxu0
        %v4213 = vadd.f32 0.0, %v4212
        %4214 = vdwg.mxu0
        %4215 = vmatpush.msra.mxu0 0.0
        %4216 = vmatpush.msra.mxu0 0.0
        %4217 = vmatpush.msra.mxu0 0.0
        %4218 = vmatpush.msra.mxu0 0.0
        %4219 = vmatpush.msra.mxu0 0.0
        %4220 = vmatpush.msra.mxu0 0.0
        %4221 = vmatpush.msra.mxu0 0.0
        %4222 = vmatpush.msra.mxu0 0.0
        %4223 = vmatpush.msra.mxu0 0.0
        %4224 = vmatpush.msra.mxu0 0.0
        %4225 = vmatpush.msra.mxu0 0.0
        %4226 = vmatpush.msra.mxu0 0.0
        %4227 = vmatpush.msra.mxu0 0.0
        %4228 = vmatpush.msra.mxu0 0.0
        %4229 = vmatpush.msra.mxu0 0.0
        %4230 = vmatpush.msra.mxu0 %v4166
        %4231 = vmatmul.f32.gmra.mxu0 %v4173
        %v4232 = vpop.f32.mrf.mxu0
        %v4233 = vadd.f32 0.0, %v4232
        %4234 = vdwg.mxu0
        %v4235 = vadd.f32 %v4156, %v4193
        %v4236 = vadd.f32 %v4157, %v4213
        %v4237 = vadd.f32 %v4158, %v4233
        %s4238 = scalar_lea.vmem %s15, 48
        %v4239 = vld [vmem:[%s4238] sm:$0xff]
        %4240 = vrot.lane.b32.xlu0 %v3776, 92
        %v4241 = vpop.permute.xlu0 %4240
        %4242 = vrot.lane.b32.xlu0 %v3777, 92
        %v4243 = vpop.permute.xlu0 %4242
        %4244 = vrot.lane.b32.xlu0 %v3778, 92
        %v4245 = vpop.permute.xlu0 %4244
        %v4246 = vsel %vm3415, %v4241, %v4243
        %v4247 = vsel %vm3415, %v4243, %v4245
        %v4252 = vsel %vm3795, %v4239, 0
        %4254 = vmatpush.msra.mxu0 0.0
        %4255 = vmatpush.msra.mxu0 0.0
        %4256 = vmatpush.msra.mxu0 0.0
        %4257 = vmatpush.msra.mxu0 0.0
        %4258 = vmatpush.msra.mxu0 0.0
        %4259 = vmatpush.msra.mxu0 0.0
        %4260 = vmatpush.msra.mxu0 0.0
        %4261 = vmatpush.msra.mxu0 0.0
        %4262 = vmatpush.msra.mxu0 0.0
        %4263 = vmatpush.msra.mxu0 0.0
        %4264 = vmatpush.msra.mxu0 0.0
        %4265 = vmatpush.msra.mxu0 0.0
        %4266 = vmatpush.msra.mxu0 0.0
        %4267 = vmatpush.msra.mxu0 0.0
        %4268 = vmatpush.msra.mxu0 0.0
        %4269 = vmatpush.msra.mxu0 %v4246
        %4270 = vmatmul.f32.gmra.mxu0 %v4252
        %v4271 = vpop.f32.mrf.mxu0
        %v4272 = vadd.f32 0.0, %v4271
        %4273 = vdwg.mxu0
        %4274 = vmatpush.msra.mxu0 0.0
        %4275 = vmatpush.msra.mxu0 0.0
        %4276 = vmatpush.msra.mxu0 0.0
        %4277 = vmatpush.msra.mxu0 0.0
        %4278 = vmatpush.msra.mxu0 0.0
        %4279 = vmatpush.msra.mxu0 0.0
        %4280 = vmatpush.msra.mxu0 0.0
        %4281 = vmatpush.msra.mxu0 0.0
        %4282 = vmatpush.msra.mxu0 0.0
        %4283 = vmatpush.msra.mxu0 0.0
        %4284 = vmatpush.msra.mxu0 0.0
        %4285 = vmatpush.msra.mxu0 0.0
        %4286 = vmatpush.msra.mxu0 0.0
        %4287 = vmatpush.msra.mxu0 0.0
        %4288 = vmatpush.msra.mxu0 0.0
        %4289 = vmatpush.msra.mxu0 %v4247
        %4290 = vmatmul.f32.gmra.mxu0 %v4252
        %v4291 = vpop.f32.mrf.mxu0
        %v4292 = vadd.f32 0.0, %v4291
        %4293 = vdwg.mxu0
        %4294 = vmatpush.msra.mxu0 0.0
        %4295 = vmatpush.msra.mxu0 0.0
        %4296 = vmatpush.msra.mxu0 0.0
        %4297 = vmatpush.msra.mxu0 0.0
        %4298 = vmatpush.msra.mxu0 0.0
        %4299 = vmatpush.msra.mxu0 0.0
        %4300 = vmatpush.msra.mxu0 0.0
        %4301 = vmatpush.msra.mxu0 0.0
        %4302 = vmatpush.msra.mxu0 0.0
        %4303 = vmatpush.msra.mxu0 0.0
        %4304 = vmatpush.msra.mxu0 0.0
        %4305 = vmatpush.msra.mxu0 0.0
        %4306 = vmatpush.msra.mxu0 0.0
        %4307 = vmatpush.msra.mxu0 0.0
        %4308 = vmatpush.msra.mxu0 0.0
        %4309 = vmatpush.msra.mxu0 %v4245
        %4310 = vmatmul.f32.gmra.mxu0 %v4252
        %v4311 = vpop.f32.mrf.mxu0
        %v4312 = vadd.f32 0.0, %v4311
        %4313 = vdwg.mxu0
        %v4314 = vadd.f32 %v4235, %v4272
        %v4315 = vadd.f32 %v4236, %v4292
        %v4316 = vadd.f32 %v4237, %v4312
        %s4317 = scalar_lea.vmem %s15, 56
        %v4318 = vld [vmem:[%s4317] sm:$0xff]
        %4319 = vrot.lane.b32.xlu0 %v3776, 91
        %v4320 = vpop.permute.xlu0 %4319
        %4321 = vrot.lane.b32.xlu0 %v3777, 91
        %v4322 = vpop.permute.xlu0 %4321
        %4323 = vrot.lane.b32.xlu0 %v3778, 91
        %v4324 = vpop.permute.xlu0 %4323
        %v4325 = vsel %vm3506, %v4320, %v4322
        %v4326 = vsel %vm3506, %v4322, %v4324
        %v4331 = vsel %vm3795, %v4318, 0
        %4333 = vmatpush.msra.mxu0 0.0
        %4334 = vmatpush.msra.mxu0 0.0
        %4335 = vmatpush.msra.mxu0 0.0
        %4336 = vmatpush.msra.mxu0 0.0
        %4337 = vmatpush.msra.mxu0 0.0
        %4338 = vmatpush.msra.mxu0 0.0
        %4339 = vmatpush.msra.mxu0 0.0
        %4340 = vmatpush.msra.mxu0 0.0
        %4341 = vmatpush.msra.mxu0 0.0
        %4342 = vmatpush.msra.mxu0 0.0
        %4343 = vmatpush.msra.mxu0 0.0
        %4344 = vmatpush.msra.mxu0 0.0
        %4345 = vmatpush.msra.mxu0 0.0
        %4346 = vmatpush.msra.mxu0 0.0
        %4347 = vmatpush.msra.mxu0 0.0
        %4348 = vmatpush.msra.mxu0 %v4325
        %4349 = vmatmul.f32.gmra.mxu0 %v4331
        %v4350 = vpop.f32.mrf.mxu0
        %v4351 = vadd.f32 0.0, %v4350
        %4352 = vdwg.mxu0
        %4353 = vmatpush.msra.mxu0 0.0
        %4354 = vmatpush.msra.mxu0 0.0
        %4355 = vmatpush.msra.mxu0 0.0
        %4356 = vmatpush.msra.mxu0 0.0
        %4357 = vmatpush.msra.mxu0 0.0
        %4358 = vmatpush.msra.mxu0 0.0
        %4359 = vmatpush.msra.mxu0 0.0
        %4360 = vmatpush.msra.mxu0 0.0
        %4361 = vmatpush.msra.mxu0 0.0
        %4362 = vmatpush.msra.mxu0 0.0
        %4363 = vmatpush.msra.mxu0 0.0
        %4364 = vmatpush.msra.mxu0 0.0
        %4365 = vmatpush.msra.mxu0 0.0
        %4366 = vmatpush.msra.mxu0 0.0
        %4367 = vmatpush.msra.mxu0 0.0
        %4368 = vmatpush.msra.mxu0 %v4326
        %4369 = vmatmul.f32.gmra.mxu0 %v4331
        %v4370 = vpop.f32.mrf.mxu0
        %v4371 = vadd.f32 0.0, %v4370
        %4372 = vdwg.mxu0
        %4373 = vmatpush.msra.mxu0 0.0
        %4374 = vmatpush.msra.mxu0 0.0
        %4375 = vmatpush.msra.mxu0 0.0
        %4376 = vmatpush.msra.mxu0 0.0
        %4377 = vmatpush.msra.mxu0 0.0
        %4378 = vmatpush.msra.mxu0 0.0
        %4379 = vmatpush.msra.mxu0 0.0
        %4380 = vmatpush.msra.mxu0 0.0
        %4381 = vmatpush.msra.mxu0 0.0
        %4382 = vmatpush.msra.mxu0 0.0
        %4383 = vmatpush.msra.mxu0 0.0
        %4384 = vmatpush.msra.mxu0 0.0
        %4385 = vmatpush.msra.mxu0 0.0
        %4386 = vmatpush.msra.mxu0 0.0
        %4387 = vmatpush.msra.mxu0 0.0
        %4388 = vmatpush.msra.mxu0 %v4324
        %4389 = vmatmul.f32.gmra.mxu0 %v4331
        %v4390 = vpop.f32.mrf.mxu0
        %v4391 = vadd.f32 0.0, %v4390
        %4392 = vdwg.mxu0
        %v4393 = vadd.f32 %v4314, %v4351
        %v4394 = vadd.f32 %v4315, %v4371
        %v4395 = vadd.f32 %v4316, %v4391
        %s4396 = scalar_lea.vmem %s15, 64
        %v4397 = vld [vmem:[%s4396] sm:$0xff]
        %4398 = vrot.lane.b32.xlu0 %v3776, 90
        %v4399 = vpop.permute.xlu0 %4398
        %4400 = vrot.lane.b32.xlu0 %v3777, 90
        %v4401 = vpop.permute.xlu0 %4400
        %4402 = vrot.lane.b32.xlu0 %v3778, 90
        %v4403 = vpop.permute.xlu0 %4402
        %v4404 = vsel %vm3597, %v4399, %v4401
        %v4405 = vsel %vm3597, %v4401, %v4403
        %v4410 = vsel %vm3795, %v4397, 0
        %4412 = vmatpush.msra.mxu0 0.0
        %4413 = vmatpush.msra.mxu0 0.0
        %4414 = vmatpush.msra.mxu0 0.0
        %4415 = vmatpush.msra.mxu0 0.0
        %4416 = vmatpush.msra.mxu0 0.0
        %4417 = vmatpush.msra.mxu0 0.0
        %4418 = vmatpush.msra.mxu0 0.0
        %4419 = vmatpush.msra.mxu0 0.0
        %4420 = vmatpush.msra.mxu0 0.0
        %4421 = vmatpush.msra.mxu0 0.0
        %4422 = vmatpush.msra.mxu0 0.0
        %4423 = vmatpush.msra.mxu0 0.0
        %4424 = vmatpush.msra.mxu0 0.0
        %4425 = vmatpush.msra.mxu0 0.0
        %4426 = vmatpush.msra.mxu0 0.0
        %4427 = vmatpush.msra.mxu0 %v4404
        %4428 = vmatmul.f32.gmra.mxu0 %v4410
        %v4429 = vpop.f32.mrf.mxu0
        %v4430 = vadd.f32 0.0, %v4429
        %4431 = vdwg.mxu0
        %4432 = vmatpush.msra.mxu0 0.0
        %4433 = vmatpush.msra.mxu0 0.0
        %4434 = vmatpush.msra.mxu0 0.0
        %4435 = vmatpush.msra.mxu0 0.0
        %4436 = vmatpush.msra.mxu0 0.0
        %4437 = vmatpush.msra.mxu0 0.0
        %4438 = vmatpush.msra.mxu0 0.0
        %4439 = vmatpush.msra.mxu0 0.0
        %4440 = vmatpush.msra.mxu0 0.0
        %4441 = vmatpush.msra.mxu0 0.0
        %4442 = vmatpush.msra.mxu0 0.0
        %4443 = vmatpush.msra.mxu0 0.0
        %4444 = vmatpush.msra.mxu0 0.0
        %4445 = vmatpush.msra.mxu0 0.0
        %4446 = vmatpush.msra.mxu0 0.0
        %4447 = vmatpush.msra.mxu0 %v4405
        %4448 = vmatmul.f32.gmra.mxu0 %v4410
        %v4449 = vpop.f32.mrf.mxu0
        %v4450 = vadd.f32 0.0, %v4449
        %4451 = vdwg.mxu0
        %4452 = vmatpush.msra.mxu0 0.0
        %4453 = vmatpush.msra.mxu0 0.0
        %4454 = vmatpush.msra.mxu0 0.0
        %4455 = vmatpush.msra.mxu0 0.0
        %4456 = vmatpush.msra.mxu0 0.0
        %4457 = vmatpush.msra.mxu0 0.0
        %4458 = vmatpush.msra.mxu0 0.0
        %4459 = vmatpush.msra.mxu0 0.0
        %4460 = vmatpush.msra.mxu0 0.0
        %4461 = vmatpush.msra.mxu0 0.0
        %4462 = vmatpush.msra.mxu0 0.0
        %4463 = vmatpush.msra.mxu0 0.0
        %4464 = vmatpush.msra.mxu0 0.0
        %4465 = vmatpush.msra.mxu0 0.0
        %4466 = vmatpush.msra.mxu0 0.0
        %4467 = vmatpush.msra.mxu0 %v4403
        %4468 = vmatmul.f32.gmra.mxu0 %v4410
        %v4469 = vpop.f32.mrf.mxu0
        %v4470 = vadd.f32 0.0, %v4469
        %4471 = vdwg.mxu0
        %v4472 = vadd.f32 %v4393, %v4430
        %v4473 = vadd.f32 %v4394, %v4450
        %v4474 = vadd.f32 %v4395, %v4470
        %4476 = vset.pattern.permute.xlu0 0
        %4477 = vperm.xlu0 %4476, %v2870
        %v4478 = vpop.permute.xlu0 %4477
        %v4480 = vadd.f32 %v4472, %v4478
        %v4481 = vadd.f32 %v4473, %v4478
        %v4482 = vadd.f32 %v4474, %v4478
        %v4483 = vmul.f32 %v4480, %v3683
        %v4484 = vmul.f32 %v4481, %v3684
        %v4485 = vmul.f32 %v4482, %v3685
        %v4486 = vadd.f32 %v4483, %v4484
        %v4487 = vsel %vm809, %v4485, 0.0
        %v4488 = vadd.f32 %v4486, %v4487
        %4489 = vadd.xlane.f32.xlu0 %v4488
        %v4490 = vpop.xlane.xlu0 %4489
        %v4491 = vmul.f32 %v4490, 0.00390625
        %v4492 = vsub.f32 %v4480, %v4491
        %v4493 = vsub.f32 %v4481, %v4491
        %v4494 = vsub.f32 %v4482, %v4491
        %v4495 = vmul.f32 %v4492, %v3683
        %v4496 = vmul.f32 %v4493, %v3684
        %v4497 = vmul.f32 %v4494, %v3685
        %v4498 = vmul.f32 %v4495, %v4495
        %v4499 = vmul.f32 %v4496, %v4496
        %v4500 = vmul.f32 %v4497, %v4497
        %v4501 = vadd.f32 %v4498, %v4499
        %v4502 = vsel %vm809, %v4500, 0.0
        %v4503 = vadd.f32 %v4501, %v4502
        %4504 = vadd.xlane.f32.xlu0 %v4503
        %v4505 = vpop.xlane.xlu0 %4504
        %v4506 = vmul.f32 %v4505, 0.00390625
        %v4507 = vadd.f32 %v4506, 1e-05
        %v4508 = vrsqrt.pop %v4507
        %v4509 = vmul.f32 %v4508, %v4507
        %v4510 = vmul.f32 %v4509, %v4508
        %v4511 = vmul.f32 0.5, %v4510
        %v4512 = vsub.f32 1.5, %v4511
        %v4513 = vmul.f32 %v4508, %v4512
        %vm4514 = vweird.f32 %v4507
        %vm4515 = vweird.f32 %v4508
        %vm4516 = vmor %vm4514, %vm4515
        %v4517 = vsel %vm4516, %v4508, %v4513
        %v4518 = vmul.f32 %v4492, %v4517
        %v4519 = vmul.f32 %v4493, %v4517
        %v4520 = vmul.f32 %v4494, %v4517
        %4522 = vset.pattern.permute.xlu0 2
        %4523 = vperm.xlu0 %4522, %v3774
        %v4524 = vpop.permute.xlu0 %4523
        %v4526 = vmul.f32 %v4518, %v4524
        %v4527 = vmul.f32 %v4519, %v4524
        %v4528 = vmul.f32 %v4520, %v4524
        %4529 = vset.pattern.permute.xlu0 3
        %4530 = vperm.xlu0 %4529, %v3774
        %v4531 = vpop.permute.xlu0 %4530
        %v4533 = vadd.f32 %v4526, %v4531
        %v4534 = vadd.f32 %v4527, %v4531
        %v4535 = vadd.f32 %v4528, %v4531
        %vm4536 = vcmp.ge.f32.partialorder %v4533, 0.0
        %vm4537 = vcmp.ge.f32.partialorder %v4534, 0.0
        %vm4538 = vcmp.ge.f32.partialorder %v4535, 0.0
        %v4539 = vmul.f32 %v4533, 0.01
        %v4540 = vmul.f32 %v4534, 0.01
        %v4541 = vmul.f32 %v4535, 0.01
        %v4542 = vsel %vm4536, %v4533, %v4539
        %v4543 = vsel %vm4537, %v4534, %v4540
        %v4544 = vsel %vm4538, %v4535, %v4541
        %v4545 = vmul.f32 %v4542, %v3683
        %v4546 = vmul.f32 %v4543, %v3684
        %v4547 = vmul.f32 %v4544, %v3685
        %v4548 = vld [vmem:[%s18] sm:$0xff]
        %v4549 = vld [vmem:[%s17] sm:$0xff]
        %4551 = vset.pattern.permute.xlu0 4
        %4552 = vperm.xlu0 %4551, %v4549
        %v4553 = vpop.permute.xlu0 %4552
        %v4556 = vsel %vm3795, %v4548, 0
        %4558 = vmatpush.msra.mxu0 0.0
        %4559 = vmatpush.msra.mxu0 0.0
        %4560 = vmatpush.msra.mxu0 0.0
        %4561 = vmatpush.msra.mxu0 0.0
        %4562 = vmatpush.msra.mxu0 0.0
        %4563 = vmatpush.msra.mxu0 0.0
        %4564 = vmatpush.msra.mxu0 0.0
        %4565 = vmatpush.msra.mxu0 0.0
        %4566 = vmatpush.msra.mxu0 0.0
        %4567 = vmatpush.msra.mxu0 0.0
        %4568 = vmatpush.msra.mxu0 0.0
        %4569 = vmatpush.msra.mxu0 0.0
        %4570 = vmatpush.msra.mxu0 0.0
        %4571 = vmatpush.msra.mxu0 0.0
        %4572 = vmatpush.msra.mxu0 0.0
        %4573 = vmatpush.msra.mxu0 %v4545
        %4574 = vmatmul.f32.gmra.mxu0 %v4556
        %v4575 = vpop.f32.mrf.mxu0
        %v4576 = vadd.f32 %v4553, %v4575
        %4577 = vdwg.mxu0
        %4578 = vmatpush.msra.mxu0 0.0
        %4579 = vmatpush.msra.mxu0 0.0
        %4580 = vmatpush.msra.mxu0 0.0
        %4581 = vmatpush.msra.mxu0 0.0
        %4582 = vmatpush.msra.mxu0 0.0
        %4583 = vmatpush.msra.mxu0 0.0
        %4584 = vmatpush.msra.mxu0 0.0
        %4585 = vmatpush.msra.mxu0 0.0
        %4586 = vmatpush.msra.mxu0 0.0
        %4587 = vmatpush.msra.mxu0 0.0
        %4588 = vmatpush.msra.mxu0 0.0
        %4589 = vmatpush.msra.mxu0 0.0
        %4590 = vmatpush.msra.mxu0 0.0
        %4591 = vmatpush.msra.mxu0 0.0
        %4592 = vmatpush.msra.mxu0 0.0
        %4593 = vmatpush.msra.mxu0 %v4546
        %4594 = vmatmul.f32.gmra.mxu0 %v4556
        %v4595 = vpop.f32.mrf.mxu0
        %v4596 = vadd.f32 %v4553, %v4595
        %4597 = vdwg.mxu0
        %4598 = vmatpush.msra.mxu0 0.0
        %4599 = vmatpush.msra.mxu0 0.0
        %4600 = vmatpush.msra.mxu0 0.0
        %4601 = vmatpush.msra.mxu0 0.0
        %4602 = vmatpush.msra.mxu0 0.0
        %4603 = vmatpush.msra.mxu0 0.0
        %4604 = vmatpush.msra.mxu0 0.0
        %4605 = vmatpush.msra.mxu0 0.0
        %4606 = vmatpush.msra.mxu0 0.0
        %4607 = vmatpush.msra.mxu0 0.0
        %4608 = vmatpush.msra.mxu0 0.0
        %4609 = vmatpush.msra.mxu0 0.0
        %4610 = vmatpush.msra.mxu0 0.0
        %4611 = vmatpush.msra.mxu0 0.0
        %4612 = vmatpush.msra.mxu0 0.0
        %4613 = vmatpush.msra.mxu0 %v4547
        %4614 = vmatmul.f32.gmra.mxu0 %v4556
        %v4615 = vpop.f32.mrf.mxu0
        %v4616 = vadd.f32 %v4553, %v4615
        %4617 = vdwg.mxu0
        %4618 = vst [vmem:[%s744] sm:$0xff] %v4576
        %4619 = vst [vmem:[%s744 + $0x8] sm:$0xff] %v4596
        %4620 = vst.msk [vmem:[%s744 + $0x10] sm:$0xff] %vm809, %v4616
        %p4621 = scmp.lt.s32.totalorder %s34, 1
        %s4622 = scalar_select %p4621, %s34, 1
        %s4623 = smul.addr %s4622, 8
        %s4624 = scalar_lea.vmem %s20, %s4623
        %p4625 = scmp.lt.s32.totalorder %s34, 1
        %s4626 = scalar_select %p4625, %s34, 1
        %s4627 = smul.addr %s4626, 3
        %s4628 = smul.addr %s4627, 8
        %s4629 = scalar_lea.vmem %s21, %s4628
        // Predicated region
        $region105: #{unet_decoder_forward.1} parent=99 // pred_check
          %p4630 = pneg %p492
        $region106: #{unet_decoder_forward.1} parent=99 // pred_check_branch
          %4632 = sbr.rel (%p4630) target = $region108
        $region107: #{unet_decoder_forward.1} parent=99 // pred_region
          _
        $region108: #{unet_decoder_forward.1} parent=99 // pred_fallthru
          _
        // Predicated region
        $region109: #{unet_decoder_forward.1} parent=99 // pred_check
          %p4633 = pneg %p518
        $region110: #{unet_decoder_forward.1} parent=99 // pred_check_branch
          %4635 = sbr.rel (%p4633) target = $region112
        $region111: #{unet_decoder_forward.1} parent=99 // pred_region
          _
        $region112: #{unet_decoder_forward.1} parent=99 // pred_fallthru
          _
      $region100: #{unet_decoder_forward.1} parent=5 // pred_fallthru
        _
      %p4636 = scmp.le.s32.totalorder 2, %s29
      // Predicated region
      $region113: #{unet_decoder_forward.1} parent=5 // pred_check
        %p4637 = pneg %p4636
      $region114: #{unet_decoder_forward.1} parent=5 // pred_check_branch
        %4639 = sbr.rel (%p4637) target = $region116
      $region115: #{unet_decoder_forward.1} parent=5 // pred_region
        %s4640 = ssub.s32 %s29, 2
        // Predicated region
        $region117: #{unet_decoder_forward.1} parent=115 // pred_check
          %p4641 = pneg %p498
        $region118: #{unet_decoder_forward.1} parent=115 // pred_check_branch
          %4643 = sbr.rel (%p4641) target = $region120
        $region119: #{unet_decoder_forward.1} parent=115 // pred_region
          %p4644 = scmp.lt.s32.totalorder %s35, 1
          %s4645 = scalar_select %p4644, %s35, 1
          %s4646 = smul.addr %s4645, 8
          %s4647 = scalar_lea.vmem %s20, %s4646
        $region120: #{unet_decoder_forward.1} parent=115 // pred_fallthru
          _
        // Predicated region
        $region121: #{unet_decoder_forward.1} parent=115 // pred_check
          %p4648 = pneg %p524
        $region122: #{unet_decoder_forward.1} parent=115 // pred_check_branch
          %4650 = sbr.rel (%p4648) target = $region124
        $region123: #{unet_decoder_forward.1} parent=115 // pred_region
          %p4651 = scmp.lt.s32.totalorder %s35, 1
          %s4652 = scalar_select %p4651, %s35, 1
          %s4653 = smul.addr %s4652, 3
          %s4654 = smul.addr %s4653, 8
          %s4655 = scalar_lea.vmem %s21, %s4654
        $region124: #{unet_decoder_forward.1} parent=115 // pred_fallthru
          _
      $region116: #{unet_decoder_forward.1} parent=5 // pred_fallthru
        _
    $region6: #{unet_decoder_forward.1} parent=1 // loop_footer
      %s33 = sadd.s32 1, %s29
    $region7: #{unet_decoder_forward.1} parent=1 // loop_footer_branch
      %28 = sbr.rel target = $region3
    $region8: #{unet_decoder_forward.1} parent=1 // loop_exit
      _
    %4656 = vsyncpa [#allocation5], 1
    %s4657 = scalar_lea.sflag [#allocation5], 1
    %4658 = vsyncpa %s4657, 1

</llo_original>
